<compile_context>
chip_gen: v6e
topology: v6e:2x2x1
jax: 0.10.0
libtpu: 0.0.40
codegen_flags: <defaults>
</compile_context>

<pallas_src>
import functools

import jax
import jax.numpy as jnp
from jax.experimental import pallas as pl
from jax.experimental.pallas import tpu as pltpu


def _hgres_kernel(*refs, H, W, has_skip):
    if has_skip:
        (x_ref, ml_ref, mr_ref, w1_ref, b1_ref, w2_ref, b2_ref,
         w3_ref, bo_ref, ws_ref, out_ref, pad_ref) = refs
    else:
        (x_ref, ml_ref, mr_ref, w1_ref, b1_ref, w2_ref, b2_ref,
         w3_ref, bo_ref, out_ref, pad_ref) = refs
        ws_ref = None

    HW = H * W
    Cm = w1_ref.shape[1]
    # Halo size (>= W+1), rounded up to a sublane multiple so the big interior
    # store and the center tap read are 8-aligned.
    PAD = ((W + 1 + 7) // 8) * 8

    x = x_ref[0]                                                  # (HW, Cin)

    # ---- Stage 1: bottleneck 1x1 conv (+folded BN) + ReLU — one whole-image matmul.
    o1 = jnp.dot(x, w1_ref[...], preferred_element_type=jnp.float32) + b1_ref[...]
    o1 = jnp.maximum(o1, 0.0)

    # ---- Zero only the halo of the flat padded scratch; the interior is fully
    #      overwritten every grid step.
    zhalo = jnp.zeros((PAD, Cm), jnp.float32)
    pad_ref[0:PAD, :] = zhalo
    pad_ref[PAD + HW:PAD + HW + PAD, :] = zhalo
    pad_ref[PAD:PAD + HW, :] = o1

    # Column-validity masks (precomputed in the wrapper, hoisted out of the tap loop).
    mask_l = ml_ref[...]                                          # 0 where w == 0
    mask_r = mr_ref[...]                                          # 0 where w == W-1

    # ---- Stage 2: 3x3 conv (+folded BN) + ReLU as 9 whole-image matmuls.
    #      Tap (ky, kx) is a contiguous (HW, Cm) slice of the flat padded buffer at
    #      offset (ky-1)*W + (kx-1); vertical out-of-range reads hit the zero halo,
    #      horizontal wrap-around is killed by the column masks.
    acc = jnp.zeros((HW, Cm), jnp.float32)
    for ky in range(3):
        for kx in range(3):
            start = PAD + (ky - 1) * W + (kx - 1)
            win = pad_ref[start:start + HW, :]                    # (HW, Cm)
            if kx == 0:
                win = win * mask_l
            elif kx == 2:
                win = win * mask_r
            acc = acc + jnp.dot(win, w2_ref[ky, kx],
                                preferred_element_type=jnp.float32)
    o2 = jnp.maximum(acc + b2_ref[...], 0.0)                      # bias added once

    # ---- Stage 3: "out" 1x1 conv (+BN) + skip, whole-image. Biases pre-folded (b3+bs).
    y = jnp.dot(o2, w3_ref[...], preferred_element_type=jnp.float32) + bo_ref[...]
    if has_skip:
        y = y + jnp.dot(x, ws_ref[...], preferred_element_type=jnp.float32)
    else:
        y = y + x                                                 # identity skip: no matmul

    out_ref[0] = y.astype(out_ref.dtype)                          # single full-block store


def hg_residual_pallas(x_nchw, params):
    (w1, b1, w2, b2, w3, b3, ws, bs) = params
    N, Cin, H, W = x_nchw.shape
    Cm = w1.shape[1]
    Cout = w3.shape[1]
    HW = H * W
    PAD = ((W + 1 + 7) // 8) * 8
    # Module semantics: skip is a 1x1 conv iff n_inp != n_out, otherwise identity.
    has_skip = (Cin != Cout)

    # NCHW -> NHWC -> (N, H*W, C): the flattening itself is free (row-major reshape).
    x = jnp.transpose(x_nchw, (0, 2, 3, 1)).reshape(N, HW, Cin)

    # Column masks for the horizontal taps of the 3x3 conv (built once, outside the kernel
    # to avoid in-kernel integer div/mod).
    w_idx = jnp.arange(HW, dtype=jnp.int32) % W
    mask_l = (w_idx > 0).astype(jnp.float32).reshape(HW, 1)
    mask_r = (w_idx < W - 1).astype(jnp.float32).reshape(HW, 1)

    if has_skip:
        b_out = b3 + bs                     # fold both output-path biases into one add
        args = (x, mask_l, mask_r, w1, b1, w2, b2, w3, b_out, ws)
    else:
        args = (x, mask_l, mask_r, w1, b1, w2, b2, w3, b3)

    def full_spec(a):
        nd = a.ndim
        return pl.BlockSpec(a.shape, lambda n, _nd=nd: (0,) * _nd)

    in_specs = [pl.BlockSpec((1, HW, Cin), lambda n: (n, 0, 0))] + \
               [full_spec(a) for a in args[1:]]

    kernel = functools.partial(_hgres_kernel, H=H, W=W, has_skip=has_skip)

    out = pl.pallas_call(
        kernel,
        out_shape=jax.ShapeDtypeStruct((N, HW, Cout), jnp.float32),
        grid_spec=pltpu.PrefetchScalarGridSpec(
            num_scalar_prefetch=0,
            grid=(N,),
            in_specs=in_specs,
            out_specs=pl.BlockSpec((1, HW, Cout), lambda n: (n, 0, 0)),
            scratch_shapes=[pltpu.VMEM((HW + 2 * PAD, Cm), jnp.float32)],
        ),
        compiler_params=pltpu.CompilerParams(
            dimension_semantics=("parallel",)),   # megacore: one batch element per TC
    )(*args)

    # (N, H*W, Cout) has the same HBM layout as NHWC; reshape is free, then back to NCHW.
    return jnp.transpose(out.reshape(N, H, W, Cout), (0, 3, 1, 2))


def _fold_bn(w, b, gamma, beta, mean, var, eps=1e-5):
    # eval-mode BatchNorm folded into the preceding conv (per output channel, last axis).
    s = gamma / jnp.sqrt(var + eps)
    return w * s, (b - mean) * s + beta


def init_hg_residual_params(key, n_inp, n_out):
    cm = n_out // 2
    ks = jax.random.split(key, 12)

    def conv_w(k, shape):
        fan_in = 1
        for d in shape[:-1]:
            fan_in *= d
        return jax.random.normal(k, shape, jnp.float32) / jnp.sqrt(float(fan_in))

    def bn(k, c):
        k1, k2, k3, k4 = jax.random.split(k, 4)
        gamma = 0.5 + jax.random.uniform(k1, (c,), jnp.float32)
        beta = 0.1 * jax.random.normal(k2, (c,), jnp.float32)
        mean = 0.1 * jax.random.normal(k3, (c,), jnp.float32)
        var = 0.5 + jax.random.uniform(k4, (c,), jnp.float32)
        return gamma, beta, mean, var

    # bottleneck: 1x1 conv (n_inp -> cm) + BN + ReLU
    w1 = conv_w(ks[0], (n_inp, cm))
    b1 = 0.05 * jax.random.normal(ks[1], (cm,), jnp.float32)
    w1, b1 = _fold_bn(w1, b1, *bn(ks[2], cm))

    # conv: 3x3 conv (cm -> cm, pad=1) + BN + ReLU  (weights in HWIO layout)
    w2 = conv_w(ks[3], (3, 3, cm, cm))
    b2 = 0.05 * jax.random.normal(ks[4], (cm,), jnp.float32)
    w2, b2 = _fold_bn(w2, b2, *bn(ks[5], cm))

    # out: 1x1 conv (cm -> n_out) + BN (no activation)
    w3 = conv_w(ks[6], (cm, n_out))
    b3 = 0.05 * jax.random.normal(ks[7], (n_out,), jnp.float32)
    w3, b3 = _fold_bn(w3, b3, *bn(ks[8], n_out))

    # skip: 1x1 conv + BN if n_inp != n_out, else identity (eye/0 kept only for the
    # pure-JAX reference; the Pallas wrapper skips the matmul entirely in that case).
    if n_inp != n_out:
        ws = conv_w(ks[9], (n_inp, n_out))
        bs = 0.05 * jax.random.normal(ks[10], (n_out,), jnp.float32)
        ws, bs = _fold_bn(ws, bs, *bn(ks[11], n_out))
    else:
        ws = jnp.eye(n_inp, dtype=jnp.float32)
        bs = jnp.zeros((n_out,), jnp.float32)

    # TODO(synk): SEBlock (se=True path) not implemented; HGResidual default is se=False.
    return (w1, b1.reshape(1, cm), w2, b2.reshape(1, cm),
            w3, b3.reshape(1, n_out), ws, bs.reshape(1, n_out))


def hg_residual_reference(x_nchw, params):
    # Pure-JAX reference for correctness checking.
    (w1, b1, w2, b2, w3, b3, ws, bs) = params
    x = jnp.transpose(x_nchw, (0, 2, 3, 1))
    o1 = jax.nn.relu(jnp.einsum('nhwc,cd->nhwd', x, w1) + b1)
    o2 = jax.lax.conv_general_dilated(
        o1, w2, window_strides=(1, 1), padding='SAME',
        dimension_numbers=('NHWC', 'HWIO', 'NHWC'))
    o2 = jax.nn.relu(o2 + b2)
    o3 = jnp.einsum('nhwc,cd->nhwd', o2, w3) + b3
    sk = jnp.einsum('nhwc,cd->nhwd', x, ws) + bs
    return jnp.transpose(o3 + sk, (0, 3, 1, 2))


if __name__ == "__main__":
    k_x, k_p, k_x2, k_p2 = jax.random.split(jax.random.PRNGKey(0), 4)

    # Case 1: n_inp != n_out -> skip path is a 1x1 conv (second matmul in stage 3).
    N, Cin, Cout, H, W = 2, 4, 8, 16, 16
    x = jax.random.normal(k_x, (N, Cin, H, W), jnp.float32)       # NCHW, like PyTorch
    params = init_hg_residual_params(k_p, Cin, Cout)
    y = jax.block_until_ready(hg_residual_pallas(x, params))
    y_ref = hg_residual_reference(x, params)
    assert y.shape == (N, Cout, H, W), y.shape
    assert jnp.allclose(y, y_ref, rtol=1e-4, atol=1e-4), float(jnp.max(jnp.abs(y - y_ref)))

    # Case 2: n_inp == n_out -> identity skip (no skip matmul inside the kernel).
    N2, C2, H2, W2 = 2, 8, 8, 8
    x2 = jax.random.normal(k_x2, (N2, C2, H2, W2), jnp.float32)
    params2 = init_hg_residual_params(k_p2, C2, C2)
    y2 = jax.block_until_ready(hg_residual_pallas(x2, params2))
    y2_ref = hg_residual_reference(x2, params2)
    assert y2.shape == (N2, C2, H2, W2), y2.shape
    assert jnp.allclose(y2, y2_ref, rtol=1e-4, atol=1e-4), float(jnp.max(jnp.abs(y2 - y2_ref)))

    print("KERNEL_OK")
</pallas_src>

<mosaic_0001>
module attributes {stable_mosaic.version = 11 : i64} {
  func.func @_hgres_kernel(%arg0: i32, %arg1: memref<1x256x4xf32, #tpu.memory_space<vmem>>, %arg2: memref<256x1xf32, #tpu.memory_space<vmem>>, %arg3: memref<256x1xf32, #tpu.memory_space<vmem>>, %arg4: memref<4x4xf32, #tpu.memory_space<vmem>>, %arg5: memref<1x4xf32, #tpu.memory_space<vmem>>, %arg6: memref<3x3x4x4xf32, #tpu.memory_space<vmem>>, %arg7: memref<1x4xf32, #tpu.memory_space<vmem>>, %arg8: memref<4x8xf32, #tpu.memory_space<vmem>>, %arg9: memref<1x8xf32, #tpu.memory_space<vmem>>, %arg10: memref<4x8xf32, #tpu.memory_space<vmem>>, %arg11: memref<1x256x8xf32, #tpu.memory_space<vmem>>, %arg12: memref<304x4xf32, #tpu.memory_space<vmem>>) attributes {dimension_semantics = [#tpu.dimension_semantics<parallel>], iteration_bounds = array<i64: 2>, scalar_prefetch = 0 : i64, scratch_operands = 1 : i64, tpu.core_type = #tpu.core_type<tc>, window_params = [{transform_indices = @transform_0, window_bounds = array<i64: 1, 256, 4>}, {pipeline_mode = #tpu.pipeline_mode<synchronous>, transform_indices = @transform_1, window_bounds = array<i64: 256, 1>}, {pipeline_mode = #tpu.pipeline_mode<synchronous>, transform_indices = @transform_2, window_bounds = array<i64: 256, 1>}, {pipeline_mode = #tpu.pipeline_mode<synchronous>, transform_indices = @transform_3, window_bounds = array<i64: 4, 4>}, {pipeline_mode = #tpu.pipeline_mode<synchronous>, transform_indices = @transform_4, window_bounds = array<i64: 1, 4>}, {pipeline_mode = #tpu.pipeline_mode<synchronous>, transform_indices = @transform_5, window_bounds = array<i64: 3, 3, 4, 4>}, {pipeline_mode = #tpu.pipeline_mode<synchronous>, transform_indices = @transform_6, window_bounds = array<i64: 1, 4>}, {pipeline_mode = #tpu.pipeline_mode<synchronous>, transform_indices = @transform_7, window_bounds = array<i64: 4, 8>}, {pipeline_mode = #tpu.pipeline_mode<synchronous>, transform_indices = @transform_8, window_bounds = array<i64: 1, 8>}, {pipeline_mode = #tpu.pipeline_mode<synchronous>, transform_indices = @transform_9, window_bounds = array<i64: 4, 8>}, {transform_indices = @transform_10, window_bounds = array<i64: 1, 256, 8>}]} {
    %c0 = arith.constant 0 : index
    %c0_0 = arith.constant 0 : index
    %c0_1 = arith.constant 0 : index
    %0 = vector.load %arg1[%c0, %c0_0, %c0_1] : memref<1x256x4xf32, #tpu.memory_space<vmem>>, vector<1x256x4xf32>
    %1 = vector.shape_cast %0 : vector<1x256x4xf32> to vector<256x4xf32>
    %c0_2 = arith.constant 0 : index
    %c0_3 = arith.constant 0 : index
    %2 = vector.load %arg4[%c0_2, %c0_3] : memref<4x4xf32, #tpu.memory_space<vmem>>, vector<4x4xf32>
    %cst = arith.constant dense<0.000000e+00> : vector<256x4xf32>
    %3 = tpu.matmul %1, %2, %cst {dimension_numbers = #tpu.dot_dimension_numbers<[1], [0], [0], [1], [0, 0, 1, 1], [], []>} : vector<256x4xf32>, vector<4x4xf32>, vector<256x4xf32> -> vector<256x4xf32>
    %c0_4 = arith.constant 0 : index
    %c0_5 = arith.constant 0 : index
    %4 = vector.load %arg5[%c0_4, %c0_5] : memref<1x4xf32, #tpu.memory_space<vmem>>, vector<1x4xf32>
    %5 = vector.broadcast %4 : vector<1x4xf32> to vector<256x4xf32>
    %6 = arith.addf %3, %5 : vector<256x4xf32>
    %cst_6 = arith.constant 0.000000e+00 : f32
    %7 = vector.broadcast %cst_6 : f32 to vector<256x4xf32>
    %8 = arith.maximumf %6, %7 : vector<256x4xf32>
    %cst_7 = arith.constant 0.000000e+00 : f32
    %9 = vector.broadcast %cst_7 : f32 to vector<24x4xf32>
    %c0_8 = arith.constant 0 : index
    %c0_9 = arith.constant 0 : index
    %10 = vector.load %arg12[%c0_8, %c0_9] : memref<304x4xf32, #tpu.memory_space<vmem>>, vector<24x4xf32>
    tpu.vector_store %arg12[%c0_8, %c0_9], %9 {strides = array<i32>} : memref<304x4xf32, #tpu.memory_space<vmem>>, vector<24x4xf32>,
    %c280 = arith.constant 280 : index
    %c0_10 = arith.constant 0 : index
    %11 = vector.load %arg12[%c280, %c0_10] : memref<304x4xf32, #tpu.memory_space<vmem>>, vector<24x4xf32>
    tpu.vector_store %arg12[%c280, %c0_10], %9 {strides = array<i32>} : memref<304x4xf32, #tpu.memory_space<vmem>>, vector<24x4xf32>,
    %c24 = arith.constant 24 : index
    %c0_11 = arith.constant 0 : index
    %12 = vector.load %arg12[%c24, %c0_11] : memref<304x4xf32, #tpu.memory_space<vmem>>, vector<256x4xf32>
    tpu.vector_store %arg12[%c24, %c0_11], %8 {strides = array<i32>} : memref<304x4xf32, #tpu.memory_space<vmem>>, vector<256x4xf32>,
    %c0_12 = arith.constant 0 : index
    %c0_13 = arith.constant 0 : index
    %13 = vector.load %arg2[%c0_12, %c0_13] : memref<256x1xf32, #tpu.memory_space<vmem>>, vector<256x1xf32>
    %c0_14 = arith.constant 0 : index
    %c0_15 = arith.constant 0 : index
    %14 = vector.load %arg3[%c0_14, %c0_15] : memref<256x1xf32, #tpu.memory_space<vmem>>, vector<256x1xf32>
    %cst_16 = arith.constant 0.000000e+00 : f32
    %15 = vector.broadcast %cst_16 : f32 to vector<256x4xf32>
    %c7 = arith.constant 7 : index
    %c0_17 = arith.constant 0 : index
    %16 = vector.load %arg12[%c7, %c0_17] : memref<304x4xf32, #tpu.memory_space<vmem>>, vector<256x4xf32>
    %17 = vector.broadcast %13 : vector<256x1xf32> to vector<256x4xf32>
    %18 = arith.mulf %16, %17 : vector<256x4xf32>
    %c0_18 = arith.constant 0 : index
    %c0_19 = arith.constant 0 : index
    %c0_20 = arith.constant 0 : index
    %c0_21 = arith.constant 0 : index
    %19 = vector.load %arg6[%c0_18, %c0_19, %c0_20, %c0_21] : memref<3x3x4x4xf32, #tpu.memory_space<vmem>>, vector<1x1x4x4xf32>
    %20 = vector.shape_cast %19 : vector<1x1x4x4xf32> to vector<4x4xf32>
    %cst_22 = arith.constant dense<0.000000e+00> : vector<256x4xf32>
    %21 = tpu.matmul %18, %20, %cst_22 {dimension_numbers = #tpu.dot_dimension_numbers<[1], [0], [0], [1], [0, 0, 1, 1], [], []>} : vector<256x4xf32>, vector<4x4xf32>, vector<256x4xf32> -> vector<256x4xf32>
    %22 = arith.addf %15, %21 : vector<256x4xf32>
    %c8 = arith.constant 8 : index
    %c0_23 = arith.constant 0 : index
    %23 = vector.load %arg12[%c8, %c0_23] : memref<304x4xf32, #tpu.memory_space<vmem>>, vector<256x4xf32>
    %c0_24 = arith.constant 0 : index
    %c1 = arith.constant 1 : index
    %c0_25 = arith.constant 0 : index
    %c0_26 = arith.constant 0 : index
    %24 = vector.load %arg6[%c0_24, %c1, %c0_25, %c0_26] : memref<3x3x4x4xf32, #tpu.memory_space<vmem>>, vector<1x1x4x4xf32>
    %25 = vector.shape_cast %24 : vector<1x1x4x4xf32> to vector<4x4xf32>
    %cst_27 = arith.constant dense<0.000000e+00> : vector<256x4xf32>
    %26 = tpu.matmul %23, %25, %cst_27 {dimension_numbers = #tpu.dot_dimension_numbers<[1], [0], [0], [1], [0, 0, 1, 1], [], []>} : vector<256x4xf32>, vector<4x4xf32>, vector<256x4xf32> -> vector<256x4xf32>
    %27 = arith.addf %22, %26 : vector<256x4xf32>
    %c9 = arith.constant 9 : index
    %c0_28 = arith.constant 0 : index
    %28 = vector.load %arg12[%c9, %c0_28] : memref<304x4xf32, #tpu.memory_space<vmem>>, vector<256x4xf32>
    %29 = vector.broadcast %14 : vector<256x1xf32> to vector<256x4xf32>
    %30 = arith.mulf %28, %29 : vector<256x4xf32>
    %c0_29 = arith.constant 0 : index
    %c2 = arith.constant 2 : index
    %c0_30 = arith.constant 0 : index
    %c0_31 = arith.constant 0 : index
    %31 = vector.load %arg6[%c0_29, %c2, %c0_30, %c0_31] : memref<3x3x4x4xf32, #tpu.memory_space<vmem>>, vector<1x1x4x4xf32>
    %32 = vector.shape_cast %31 : vector<1x1x4x4xf32> to vector<4x4xf32>
    %cst_32 = arith.constant dense<0.000000e+00> : vector<256x4xf32>
    %33 = tpu.matmul %30, %32, %cst_32 {dimension_numbers = #tpu.dot_dimension_numbers<[1], [0], [0], [1], [0, 0, 1, 1], [], []>} : vector<256x4xf32>, vector<4x4xf32>, vector<256x4xf32> -> vector<256x4xf32>
    %34 = arith.addf %27, %33 : vector<256x4xf32>
    %c23 = arith.constant 23 : index
    %c0_33 = arith.constant 0 : index
    %35 = vector.load %arg12[%c23, %c0_33] : memref<304x4xf32, #tpu.memory_space<vmem>>, vector<256x4xf32>
    %36 = vector.broadcast %13 : vector<256x1xf32> to vector<256x4xf32>
    %37 = arith.mulf %35, %36 : vector<256x4xf32>
    %c1_34 = arith.constant 1 : index
    %c0_35 = arith.constant 0 : index
    %c0_36 = arith.constant 0 : index
    %c0_37 = arith.constant 0 : index
    %38 = vector.load %arg6[%c1_34, %c0_35, %c0_36, %c0_37] : memref<3x3x4x4xf32, #tpu.memory_space<vmem>>, vector<1x1x4x4xf32>
    %39 = vector.shape_cast %38 : vector<1x1x4x4xf32> to vector<4x4xf32>
    %cst_38 = arith.constant dense<0.000000e+00> : vector<256x4xf32>
    %40 = tpu.matmul %37, %39, %cst_38 {dimension_numbers = #tpu.dot_dimension_numbers<[1], [0], [0], [1], [0, 0, 1, 1], [], []>} : vector<256x4xf32>, vector<4x4xf32>, vector<256x4xf32> -> vector<256x4xf32>
    %41 = arith.addf %34, %40 : vector<256x4xf32>
    %c24_39 = arith.constant 24 : index
    %c0_40 = arith.constant 0 : index
    %42 = vector.load %arg12[%c24_39, %c0_40] : memref<304x4xf32, #tpu.memory_space<vmem>>, vector<256x4xf32>
    %c1_41 = arith.constant 1 : index
    %c1_42 = arith.constant 1 : index
    %c0_43 = arith.constant 0 : index
    %c0_44 = arith.constant 0 : index
    %43 = vector.load %arg6[%c1_41, %c1_42, %c0_43, %c0_44] : memref<3x3x4x4xf32, #tpu.memory_space<vmem>>, vector<1x1x4x4xf32>
    %44 = vector.shape_cast %43 : vector<1x1x4x4xf32> to vector<4x4xf32>
    %cst_45 = arith.constant dense<0.000000e+00> : vector<256x4xf32>
    %45 = tpu.matmul %42, %44, %cst_45 {dimension_numbers = #tpu.dot_dimension_numbers<[1], [0], [0], [1], [0, 0, 1, 1], [], []>} : vector<256x4xf32>, vector<4x4xf32>, vector<256x4xf32> -> vector<256x4xf32>
    %46 = arith.addf %41, %45 : vector<256x4xf32>
    %c25 = arith.constant 25 : index
    %c0_46 = arith.constant 0 : index
    %47 = vector.load %arg12[%c25, %c0_46] : memref<304x4xf32, #tpu.memory_space<vmem>>, vector<256x4xf32>
    %48 = vector.broadcast %14 : vector<256x1xf32> to vector<256x4xf32>
    %49 = arith.mulf %47, %48 : vector<256x4xf32>
    %c1_47 = arith.constant 1 : index
    %c2_48 = arith.constant 2 : index
    %c0_49 = arith.constant 0 : index
    %c0_50 = arith.constant 0 : index
    %50 = vector.load %arg6[%c1_47, %c2_48, %c0_49, %c0_50] : memref<3x3x4x4xf32, #tpu.memory_space<vmem>>, vector<1x1x4x4xf32>
    %51 = vector.shape_cast %50 : vector<1x1x4x4xf32> to vector<4x4xf32>
    %cst_51 = arith.constant dense<0.000000e+00> : vector<256x4xf32>
    %52 = tpu.matmul %49, %51, %cst_51 {dimension_numbers = #tpu.dot_dimension_numbers<[1], [0], [0], [1], [0, 0, 1, 1], [], []>} : vector<256x4xf32>, vector<4x4xf32>, vector<256x4xf32> -> vector<256x4xf32>
    %53 = arith.addf %46, %52 : vector<256x4xf32>
    %c39 = arith.constant 39 : index
    %c0_52 = arith.constant 0 : index
    %54 = vector.load %arg12[%c39, %c0_52] : memref<304x4xf32, #tpu.memory_space<vmem>>, vector<256x4xf32>
    %55 = vector.broadcast %13 : vector<256x1xf32> to vector<256x4xf32>
    %56 = arith.mulf %54, %55 : vector<256x4xf32>
    %c2_53 = arith.constant 2 : index
    %c0_54 = arith.constant 0 : index
    %c0_55 = arith.constant 0 : index
    %c0_56 = arith.constant 0 : index
    %57 = vector.load %arg6[%c2_53, %c0_54, %c0_55, %c0_56] : memref<3x3x4x4xf32, #tpu.memory_space<vmem>>, vector<1x1x4x4xf32>
    %58 = vector.shape_cast %57 : vector<1x1x4x4xf32> to vector<4x4xf32>
    %cst_57 = arith.constant dense<0.000000e+00> : vector<256x4xf32>
    %59 = tpu.matmul %56, %58, %cst_57 {dimension_numbers = #tpu.dot_dimension_numbers<[1], [0], [0], [1], [0, 0, 1, 1], [], []>} : vector<256x4xf32>, vector<4x4xf32>, vector<256x4xf32> -> vector<256x4xf32>
    %60 = arith.addf %53, %59 : vector<256x4xf32>
    %c40 = arith.constant 40 : index
    %c0_58 = arith.constant 0 : index
    %61 = vector.load %arg12[%c40, %c0_58] : memref<304x4xf32, #tpu.memory_space<vmem>>, vector<256x4xf32>
    %c2_59 = arith.constant 2 : index
    %c1_60 = arith.constant 1 : index
    %c0_61 = arith.constant 0 : index
    %c0_62 = arith.constant 0 : index
    %62 = vector.load %arg6[%c2_59, %c1_60, %c0_61, %c0_62] : memref<3x3x4x4xf32, #tpu.memory_space<vmem>>, vector<1x1x4x4xf32>
    %63 = vector.shape_cast %62 : vector<1x1x4x4xf32> to vector<4x4xf32>
    %cst_63 = arith.constant dense<0.000000e+00> : vector<256x4xf32>
    %64 = tpu.matmul %61, %63, %cst_63 {dimension_numbers = #tpu.dot_dimension_numbers<[1], [0], [0], [1], [0, 0, 1, 1], [], []>} : vector<256x4xf32>, vector<4x4xf32>, vector<256x4xf32> -> vector<256x4xf32>
    %65 = arith.addf %60, %64 : vector<256x4xf32>
    %c41 = arith.constant 41 : index
    %c0_64 = arith.constant 0 : index
    %66 = vector.load %arg12[%c41, %c0_64] : memref<304x4xf32, #tpu.memory_space<vmem>>, vector<256x4xf32>
    %67 = vector.broadcast %14 : vector<256x1xf32> to vector<256x4xf32>
    %68 = arith.mulf %66, %67 : vector<256x4xf32>
    %c2_65 = arith.constant 2 : index
    %c2_66 = arith.constant 2 : index
    %c0_67 = arith.constant 0 : index
    %c0_68 = arith.constant 0 : index
    %69 = vector.load %arg6[%c2_65, %c2_66, %c0_67, %c0_68] : memref<3x3x4x4xf32, #tpu.memory_space<vmem>>, vector<1x1x4x4xf32>
    %70 = vector.shape_cast %69 : vector<1x1x4x4xf32> to vector<4x4xf32>
    %cst_69 = arith.constant dense<0.000000e+00> : vector<256x4xf32>
    %71 = tpu.matmul %68, %70, %cst_69 {dimension_numbers = #tpu.dot_dimension_numbers<[1], [0], [0], [1], [0, 0, 1, 1], [], []>} : vector<256x4xf32>, vector<4x4xf32>, vector<256x4xf32> -> vector<256x4xf32>
    %72 = arith.addf %65, %71 : vector<256x4xf32>
    %c0_70 = arith.constant 0 : index
    %c0_71 = arith.constant 0 : index
    %73 = vector.load %arg7[%c0_70, %c0_71] : memref<1x4xf32, #tpu.memory_space<vmem>>, vector<1x4xf32>
    %74 = vector.broadcast %73 : vector<1x4xf32> to vector<256x4xf32>
    %75 = arith.addf %72, %74 : vector<256x4xf32>
    %cst_72 = arith.constant 0.000000e+00 : f32
    %76 = vector.broadcast %cst_72 : f32 to vector<256x4xf32>
    %77 = arith.maximumf %75, %76 : vector<256x4xf32>
    %c0_73 = arith.constant 0 : index
    %c0_74 = arith.constant 0 : index
    %78 = vector.load %arg8[%c0_73, %c0_74] : memref<4x8xf32, #tpu.memory_space<vmem>>, vector<4x8xf32>
    %cst_75 = arith.constant dense<0.000000e+00> : vector<256x8xf32>
    %79 = tpu.matmul %77, %78, %cst_75 {dimension_numbers = #tpu.dot_dimension_numbers<[1], [0], [0], [1], [0, 0, 1, 1], [], []>} : vector<256x4xf32>, vector<4x8xf32>, vector<256x8xf32> -> vector<256x8xf32>
    %c0_76 = arith.constant 0 : index
    %c0_77 = arith.constant 0 : index
    %80 = vector.load %arg9[%c0_76, %c0_77] : memref<1x8xf32, #tpu.memory_space<vmem>>, vector<1x8xf32>
    %81 = vector.broadcast %80 : vector<1x8xf32> to vector<256x8xf32>
    %82 = arith.addf %79, %81 : vector<256x8xf32>
    %c0_78 = arith.constant 0 : index
    %c0_79 = arith.constant 0 : index
    %83 = vector.load %arg10[%c0_78, %c0_79] : memref<4x8xf32, #tpu.memory_space<vmem>>, vector<4x8xf32>
    %cst_80 = arith.constant dense<0.000000e+00> : vector<256x8xf32>
    %84 = tpu.matmul %1, %83, %cst_80 {dimension_numbers = #tpu.dot_dimension_numbers<[1], [0], [0], [1], [0, 0, 1, 1], [], []>} : vector<256x4xf32>, vector<4x8xf32>, vector<256x8xf32> -> vector<256x8xf32>
    %85 = arith.addf %82, %84 : vector<256x8xf32>
    %c0_81 = arith.constant 0 : index
    %c0_82 = arith.constant 0 : index
    %c0_83 = arith.constant 0 : index
    %86 = vector.load %arg11[%c0_81, %c0_82, %c0_83] : memref<1x256x8xf32, #tpu.memory_space<vmem>>, vector<1x256x8xf32>
    %87 = vector.shape_cast %86 : vector<1x256x8xf32> to vector<256x8xf32>
    %88 = vector.shape_cast %85 : vector<256x8xf32> to vector<1x256x8xf32>
    tpu.vector_store %arg11[%c0_81, %c0_82, %c0_83], %88 {strides = array<i32>} : memref<1x256x8xf32, #tpu.memory_space<vmem>>, vector<1x256x8xf32>,
    return
  }
  func.func @transform_0(%arg0: i32) -> (i32, i32, i32) {
    %c0_i32 = arith.constant 0 : i32
    %c0_i32_0 = arith.constant 0 : i32
    %c0_i32_1 = arith.constant 0 : i32
    return %arg0, %c0_i32, %c0_i32_0 : i32, i32, i32
  }
  func.func @transform_1(%arg0: i32) -> (i32, i32) {
    %c0_i32 = arith.constant 0 : i32
    %c0_i32_0 = arith.constant 0 : i32
    %c0_i32_1 = arith.constant 0 : i32
    return %c0_i32, %c0_i32_0 : i32, i32
  }
  func.func @transform_2(%arg0: i32) -> (i32, i32) {
    %c0_i32 = arith.constant 0 : i32
    %c0_i32_0 = arith.constant 0 : i32
    %c0_i32_1 = arith.constant 0 : i32
    return %c0_i32, %c0_i32_0 : i32, i32
  }
  func.func @transform_3(%arg0: i32) -> (i32, i32) {
    %c0_i32 = arith.constant 0 : i32
    %c0_i32_0 = arith.constant 0 : i32
    %c0_i32_1 = arith.constant 0 : i32
    return %c0_i32, %c0_i32_0 : i32, i32
  }
  func.func @transform_4(%arg0: i32) -> (i32, i32) {
    %c0_i32 = arith.constant 0 : i32
    %c0_i32_0 = arith.constant 0 : i32
    %c0_i32_1 = arith.constant 0 : i32
    return %c0_i32, %c0_i32_0 : i32, i32
  }
  func.func @transform_5(%arg0: i32) -> (i32, i32, i32, i32) {
    %c0_i32 = arith.constant 0 : i32
    %c0_i32_0 = arith.constant 0 : i32
    %c0_i32_1 = arith.constant 0 : i32
    %c0_i32_2 = arith.constant 0 : i32
    %c0_i32_3 = arith.constant 0 : i32
    return %c0_i32, %c0_i32_0, %c0_i32_1, %c0_i32_2 : i32, i32, i32, i32
  }
  func.func @transform_6(%arg0: i32) -> (i32, i32) {
    %c0_i32 = arith.constant 0 : i32
    %c0_i32_0 = arith.constant 0 : i32
    %c0_i32_1 = arith.constant 0 : i32
    return %c0_i32, %c0_i32_0 : i32, i32
  }
  func.func @transform_7(%arg0: i32) -> (i32, i32) {
    %c0_i32 = arith.constant 0 : i32
    %c0_i32_0 = arith.constant 0 : i32
    %c0_i32_1 = arith.constant 0 : i32
    return %c0_i32, %c0_i32_0 : i32, i32
  }
  func.func @transform_8(%arg0: i32) -> (i32, i32) {
    %c0_i32 = arith.constant 0 : i32
    %c0_i32_0 = arith.constant 0 : i32
    %c0_i32_1 = arith.constant 0 : i32
    return %c0_i32, %c0_i32_0 : i32, i32
  }
  func.func @transform_9(%arg0: i32) -> (i32, i32) {
    %c0_i32 = arith.constant 0 : i32
    %c0_i32_0 = arith.constant 0 : i32
    %c0_i32_1 = arith.constant 0 : i32
    return %c0_i32, %c0_i32_0 : i32, i32
  }
  func.func @transform_10(%arg0: i32) -> (i32, i32, i32) {
    %c0_i32 = arith.constant 0 : i32
    %c0_i32_0 = arith.constant 0 : i32
    %c0_i32_1 = arith.constant 0 : i32
    return %arg0, %c0_i32, %c0_i32_0 : i32, i32, i32
  }
}

</mosaic_0001>

<llo_original>
// kernel: tpu_custom_call.1
$region0: #{tpu_custom_call.1}
  #allocation0 [shape = 'u32[]', space=smem, size = 0x4, offset = 0x4, fixed_abs, tag = 'smem constant byte address 0x4 - core index']
  #allocation1 [shape = 'u32[144,128]{1,0:T(1,128)}', space=vmem, size = 0x12000, scoped, tag = 'internal scratch']
  #allocation2 [shape = 'f32[304,4]{1,0:T(8,128)}', space=vmem, size = 0x26000, scoped, tag = 'scratch operand']
  %s0 = inlined_call_operand.vmem [shape: f32[2,256,4], index: 0, kind: input, shape index: {}]
  %s1 = inlined_call_operand.vmem [shape: f32[256,1], index: 1, kind: input, shape index: {}]
  %s2 = inlined_call_operand.vmem [shape: f32[256,1], index: 2, kind: input, shape index: {}]
  %s3 = inlined_call_operand.vmem [shape: f32[4,4], index: 3, kind: input, shape index: {}]
  %s4 = inlined_call_operand.vmem [shape: f32[1,4], index: 4, kind: input, shape index: {}]
  %s5 = inlined_call_operand.vmem [shape: f32[3,3,4,4], index: 5, kind: input, shape index: {}]
  %s6 = inlined_call_operand.vmem [shape: f32[1,4], index: 6, kind: input, shape index: {}]
  %s7 = inlined_call_operand.vmem [shape: f32[4,8], index: 7, kind: input, shape index: {}]
  %s8 = inlined_call_operand.vmem [shape: f32[1,8], index: 8, kind: input, shape index: {}]
  %s9 = inlined_call_operand.vmem [shape: f32[4,8], index: 9, kind: input, shape index: {}]
  %s10 = inlined_call_operand.vmem [shape: f32[2,256,8], index: 10, kind: output, shape index: {}]
  %s11 = sld [smem:[#allocation0]]
  $region73: #{tpu_custom_call.1} parent=0
    _
  %s13 = ssub.s32 1, %s11
  %s14 = scalar_select 0, %s13, %s11
  loop: start=0, step=1, limit=4
  $region2: #{tpu_custom_call.1} parent=0 // loop_pre_header
    _
  $region3: #{tpu_custom_call.1} parent=0 // loop_header
    %s16 = sphi 0, %s20
    %p17 = scmp.ge.s32.totalorder %s16, 4
    %s26 = sphi 0, %s28
    %s29 = sphi 0, %s26
    %s30 = sphi 0, %s29
    %s46 = sphi 0, %s30
    %s50 = sphi 0, %s50
    %s52 = sphi 0, %s50
    %s53 = sphi 0, %s52
    %s67 = sphi 0, %s53
    %s71 = sphi 0, %s71
    %s73 = sphi 0, %s71
    %s74 = sphi 0, %s73
    %s88 = sphi 0, %s74
    %s92 = sphi 0, %s92
    %s94 = sphi 0, %s92
    %s95 = sphi 0, %s94
    %s109 = sphi 0, %s95
    %s113 = sphi 0, %s113
    %s115 = sphi 0, %s113
    %s116 = sphi 0, %s115
    %s130 = sphi 0, %s116
    %s134 = sphi 0, %s134
    %s136 = sphi 0, %s134
    %s137 = sphi 0, %s136
    %s151 = sphi 0, %s137
    %s155 = sphi 0, %s155
    %s157 = sphi 0, %s155
    %s158 = sphi 0, %s157
    %s172 = sphi 0, %s158
    %s176 = sphi 0, %s176
    %s178 = sphi 0, %s176
    %s179 = sphi 0, %s178
    %s193 = sphi 0, %s179
    %s197 = sphi 0, %s197
    %s199 = sphi 0, %s197
    %s200 = sphi 0, %s199
    %s214 = sphi 0, %s200
    %s218 = sphi 0, %s218
    %s220 = sphi 0, %s218
    %s221 = sphi 0, %s220
    %s235 = sphi 0, %s221
    %s241 = sphi 0, %s243
    %s244 = sphi 0, %s241
    %s245 = sphi 0, %s244
    %s261 = sphi 0, %s245
  $region4: #{tpu_custom_call.1} parent=0 // loop_header_branch
    %19 = sbr.rel (%p17) target = $region8
  $region5: #{tpu_custom_call.1} parent=0 // loop_body
    %s21 = ssub.s32 %s16, 1
    %s22 = ssub.s32 %s16, 2
    %s23 = sadd.s32 %s16, 1
    %s24 = ssub.s32 %s16, %s23
    %p25 = scmp.eq.s32.totalorder %s24, 0
    %s27 = sadd.s32 %s26, 1
    %s28 = scalar_select %p25, %s26, %s27
    %p31 = pneg %p25
    %p32 = scmp.eq.s32.totalorder %s16, 1
    %p33 = por %p31, %p32
    %p34 = scmp.ne.s32.totalorder %s26, %s29
    %p35 = scmp.eq.s32.totalorder %s16, 0
    %p36 = por %p34, %p35
    %p37 = scmp.ne.s32.totalorder %s26, %s29
    %p38 = scmp.eq.s32.totalorder %s21, 1
    %p39 = por %p37, %p38
    %p40 = scmp.ne.s32.totalorder %s29, %s30
    %p41 = scmp.eq.s32.totalorder %s21, 0
    %p42 = por %p40, %p41
    %p43 = scmp.ne.s32.totalorder %s29, %s30
    %p44 = scmp.eq.s32.totalorder %s22, 1
    %p45 = por %p43, %p44
    %p47 = scmp.ne.s32.totalorder %s30, %s46
    %p48 = scmp.eq.s32.totalorder %s22, 0
    %p49 = por %p47, %p48
    %s51 = sadd.s32 %s50, 1
    %p54 = scmp.eq.s32.totalorder %s16, 1
    %p55 = scmp.ne.s32.totalorder %s50, %s52
    %p56 = scmp.eq.s32.totalorder %s16, 0
    %p57 = por %p55, %p56
    %p58 = scmp.ne.s32.totalorder %s50, %s52
    %p59 = scmp.eq.s32.totalorder %s21, 1
    %p60 = por %p58, %p59
    %p61 = scmp.ne.s32.totalorder %s52, %s53
    %p62 = scmp.eq.s32.totalorder %s21, 0
    %p63 = por %p61, %p62
    %p64 = scmp.ne.s32.totalorder %s52, %s53
    %p65 = scmp.eq.s32.totalorder %s22, 1
    %p66 = por %p64, %p65
    %p68 = scmp.ne.s32.totalorder %s53, %s67
    %p69 = scmp.eq.s32.totalorder %s22, 0
    %p70 = por %p68, %p69
    %s72 = sadd.s32 %s71, 1
    %p75 = scmp.eq.s32.totalorder %s16, 1
    %p76 = scmp.ne.s32.totalorder %s71, %s73
    %p77 = scmp.eq.s32.totalorder %s16, 0
    %p78 = por %p76, %p77
    %p79 = scmp.ne.s32.totalorder %s71, %s73
    %p80 = scmp.eq.s32.totalorder %s21, 1
    %p81 = por %p79, %p80
    %p82 = scmp.ne.s32.totalorder %s73, %s74
    %p83 = scmp.eq.s32.totalorder %s21, 0
    %p84 = por %p82, %p83
    %p85 = scmp.ne.s32.totalorder %s73, %s74
    %p86 = scmp.eq.s32.totalorder %s22, 1
    %p87 = por %p85, %p86
    %p89 = scmp.ne.s32.totalorder %s74, %s88
    %p90 = scmp.eq.s32.totalorder %s22, 0
    %p91 = por %p89, %p90
    %s93 = sadd.s32 %s92, 1
    %p96 = scmp.eq.s32.totalorder %s16, 1
    %p97 = scmp.ne.s32.totalorder %s92, %s94
    %p98 = scmp.eq.s32.totalorder %s16, 0
    %p99 = por %p97, %p98
    %p100 = scmp.ne.s32.totalorder %s92, %s94
    %p101 = scmp.eq.s32.totalorder %s21, 1
    %p102 = por %p100, %p101
    %p103 = scmp.ne.s32.totalorder %s94, %s95
    %p104 = scmp.eq.s32.totalorder %s21, 0
    %p105 = por %p103, %p104
    %p106 = scmp.ne.s32.totalorder %s94, %s95
    %p107 = scmp.eq.s32.totalorder %s22, 1
    %p108 = por %p106, %p107
    %p110 = scmp.ne.s32.totalorder %s95, %s109
    %p111 = scmp.eq.s32.totalorder %s22, 0
    %p112 = por %p110, %p111
    %s114 = sadd.s32 %s113, 1
    %p117 = scmp.eq.s32.totalorder %s16, 1
    %p118 = scmp.ne.s32.totalorder %s113, %s115
    %p119 = scmp.eq.s32.totalorder %s16, 0
    %p120 = por %p118, %p119
    %p121 = scmp.ne.s32.totalorder %s113, %s115
    %p122 = scmp.eq.s32.totalorder %s21, 1
    %p123 = por %p121, %p122
    %p124 = scmp.ne.s32.totalorder %s115, %s116
    %p125 = scmp.eq.s32.totalorder %s21, 0
    %p126 = por %p124, %p125
    %p127 = scmp.ne.s32.totalorder %s115, %s116
    %p128 = scmp.eq.s32.totalorder %s22, 1
    %p129 = por %p127, %p128
    %p131 = scmp.ne.s32.totalorder %s116, %s130
    %p132 = scmp.eq.s32.totalorder %s22, 0
    %p133 = por %p131, %p132
    %s135 = sadd.s32 %s134, 1
    %p138 = scmp.eq.s32.totalorder %s16, 1
    %p139 = scmp.ne.s32.totalorder %s134, %s136
    %p140 = scmp.eq.s32.totalorder %s16, 0
    %p141 = por %p139, %p140
    %p142 = scmp.ne.s32.totalorder %s134, %s136
    %p143 = scmp.eq.s32.totalorder %s21, 1
    %p144 = por %p142, %p143
    %p145 = scmp.ne.s32.totalorder %s136, %s137
    %p146 = scmp.eq.s32.totalorder %s21, 0
    %p147 = por %p145, %p146
    %p148 = scmp.ne.s32.totalorder %s136, %s137
    %p149 = scmp.eq.s32.totalorder %s22, 1
    %p150 = por %p148, %p149
    %p152 = scmp.ne.s32.totalorder %s137, %s151
    %p153 = scmp.eq.s32.totalorder %s22, 0
    %p154 = por %p152, %p153
    %s156 = sadd.s32 %s155, 1
    %p159 = scmp.eq.s32.totalorder %s16, 1
    %p160 = scmp.ne.s32.totalorder %s155, %s157
    %p161 = scmp.eq.s32.totalorder %s16, 0
    %p162 = por %p160, %p161
    %p163 = scmp.ne.s32.totalorder %s155, %s157
    %p164 = scmp.eq.s32.totalorder %s21, 1
    %p165 = por %p163, %p164
    %p166 = scmp.ne.s32.totalorder %s157, %s158
    %p167 = scmp.eq.s32.totalorder %s21, 0
    %p168 = por %p166, %p167
    %p169 = scmp.ne.s32.totalorder %s157, %s158
    %p170 = scmp.eq.s32.totalorder %s22, 1
    %p171 = por %p169, %p170
    %p173 = scmp.ne.s32.totalorder %s158, %s172
    %p174 = scmp.eq.s32.totalorder %s22, 0
    %p175 = por %p173, %p174
    %s177 = sadd.s32 %s176, 1
    %p180 = scmp.eq.s32.totalorder %s16, 1
    %p181 = scmp.ne.s32.totalorder %s176, %s178
    %p182 = scmp.eq.s32.totalorder %s16, 0
    %p183 = por %p181, %p182
    %p184 = scmp.ne.s32.totalorder %s176, %s178
    %p185 = scmp.eq.s32.totalorder %s21, 1
    %p186 = por %p184, %p185
    %p187 = scmp.ne.s32.totalorder %s178, %s179
    %p188 = scmp.eq.s32.totalorder %s21, 0
    %p189 = por %p187, %p188
    %p190 = scmp.ne.s32.totalorder %s178, %s179
    %p191 = scmp.eq.s32.totalorder %s22, 1
    %p192 = por %p190, %p191
    %p194 = scmp.ne.s32.totalorder %s179, %s193
    %p195 = scmp.eq.s32.totalorder %s22, 0
    %p196 = por %p194, %p195
    %s198 = sadd.s32 %s197, 1
    %p201 = scmp.eq.s32.totalorder %s16, 1
    %p202 = scmp.ne.s32.totalorder %s197, %s199
    %p203 = scmp.eq.s32.totalorder %s16, 0
    %p204 = por %p202, %p203
    %p205 = scmp.ne.s32.totalorder %s197, %s199
    %p206 = scmp.eq.s32.totalorder %s21, 1
    %p207 = por %p205, %p206
    %p208 = scmp.ne.s32.totalorder %s199, %s200
    %p209 = scmp.eq.s32.totalorder %s21, 0
    %p210 = por %p208, %p209
    %p211 = scmp.ne.s32.totalorder %s199, %s200
    %p212 = scmp.eq.s32.totalorder %s22, 1
    %p213 = por %p211, %p212
    %p215 = scmp.ne.s32.totalorder %s200, %s214
    %p216 = scmp.eq.s32.totalorder %s22, 0
    %p217 = por %p215, %p216
    %s219 = sadd.s32 %s218, 1
    %p222 = scmp.eq.s32.totalorder %s16, 1
    %p223 = scmp.ne.s32.totalorder %s218, %s220
    %p224 = scmp.eq.s32.totalorder %s16, 0
    %p225 = por %p223, %p224
    %p226 = scmp.ne.s32.totalorder %s218, %s220
    %p227 = scmp.eq.s32.totalorder %s21, 1
    %p228 = por %p226, %p227
    %p229 = scmp.ne.s32.totalorder %s220, %s221
    %p230 = scmp.eq.s32.totalorder %s21, 0
    %p231 = por %p229, %p230
    %p232 = scmp.ne.s32.totalorder %s220, %s221
    %p233 = scmp.eq.s32.totalorder %s22, 1
    %p234 = por %p232, %p233
    %p236 = scmp.ne.s32.totalorder %s221, %s235
    %p237 = scmp.eq.s32.totalorder %s22, 0
    %p238 = por %p236, %p237
    %s239 = ssub.s32 %s16, %s23
    %p240 = scmp.eq.s32.totalorder %s239, 0
    %s242 = sadd.s32 %s241, 1
    %s243 = scalar_select %p240, %s241, %s242
    %p246 = pneg %p240
    %p247 = scmp.eq.s32.totalorder %s16, 1
    %p248 = por %p246, %p247
    %p249 = scmp.ne.s32.totalorder %s241, %s244
    %p250 = scmp.eq.s32.totalorder %s16, 0
    %p251 = por %p249, %p250
    %p252 = scmp.ne.s32.totalorder %s241, %s244
    %p253 = scmp.eq.s32.totalorder %s21, 1
    %p254 = por %p252, %p253
    %p255 = scmp.ne.s32.totalorder %s244, %s245
    %p256 = scmp.eq.s32.totalorder %s21, 0
    %p257 = por %p255, %p256
    %p258 = scmp.ne.s32.totalorder %s244, %s245
    %p259 = scmp.eq.s32.totalorder %s22, 1
    %p260 = por %p258, %p259
    %p262 = scmp.ne.s32.totalorder %s245, %s261
    %p263 = scmp.eq.s32.totalorder %s22, 0
    %p264 = por %p262, %p263
    %p265 = scmp.le.s32.totalorder 1, %s16
    %p266 = scmp.lt.s32.totalorder %s16, 3
    %p267 = pnand %p265, %p266
    %p268 = pneg %p267
    // Predicated region
    $region9: #{tpu_custom_call.1} parent=5 // pred_check
      _
    $region10: #{tpu_custom_call.1} parent=5 // pred_check_branch
      %270 = sbr.rel (%p267) target = $region12
    $region11: #{tpu_custom_call.1} parent=5 // pred_region
      %s271 = ssub.s32 %s16, 1
      // Predicated region
      $region13: #{tpu_custom_call.1} parent=11 // pred_check
        %p272 = pneg %p63
      $region14: #{tpu_custom_call.1} parent=11 // pred_check_branch
        %274 = sbr.rel (%p272) target = $region16
      $region15: #{tpu_custom_call.1} parent=11 // pred_region
        _
      $region16: #{tpu_custom_call.1} parent=11 // pred_fallthru
        _
      // Predicated region
      $region17: #{tpu_custom_call.1} parent=11 // pred_check
        %p275 = pneg %p84
      $region18: #{tpu_custom_call.1} parent=11 // pred_check_branch
        %277 = sbr.rel (%p275) target = $region20
      $region19: #{tpu_custom_call.1} parent=11 // pred_region
        _
      $region20: #{tpu_custom_call.1} parent=11 // pred_fallthru
        _
      // Predicated region
      $region21: #{tpu_custom_call.1} parent=11 // pred_check
        %p278 = pneg %p105
      $region22: #{tpu_custom_call.1} parent=11 // pred_check_branch
        %280 = sbr.rel (%p278) target = $region24
      $region23: #{tpu_custom_call.1} parent=11 // pred_region
        _
      $region24: #{tpu_custom_call.1} parent=11 // pred_fallthru
        _
      // Predicated region
      $region25: #{tpu_custom_call.1} parent=11 // pred_check
        %p281 = pneg %p126
      $region26: #{tpu_custom_call.1} parent=11 // pred_check_branch
        %283 = sbr.rel (%p281) target = $region28
      $region27: #{tpu_custom_call.1} parent=11 // pred_region
        _
      $region28: #{tpu_custom_call.1} parent=11 // pred_fallthru
        _
      // Predicated region
      $region29: #{tpu_custom_call.1} parent=11 // pred_check
        %p284 = pneg %p147
      $region30: #{tpu_custom_call.1} parent=11 // pred_check_branch
        %286 = sbr.rel (%p284) target = $region32
      $region31: #{tpu_custom_call.1} parent=11 // pred_region
        _
      $region32: #{tpu_custom_call.1} parent=11 // pred_fallthru
        _
      // Predicated region
      $region33: #{tpu_custom_call.1} parent=11 // pred_check
        %p287 = pneg %p168
      $region34: #{tpu_custom_call.1} parent=11 // pred_check_branch
        %289 = sbr.rel (%p287) target = $region36
      $region35: #{tpu_custom_call.1} parent=11 // pred_region
        _
      $region36: #{tpu_custom_call.1} parent=11 // pred_fallthru
        _
      // Predicated region
      $region37: #{tpu_custom_call.1} parent=11 // pred_check
        %p290 = pneg %p189
      $region38: #{tpu_custom_call.1} parent=11 // pred_check_branch
        %292 = sbr.rel (%p290) target = $region40
      $region39: #{tpu_custom_call.1} parent=11 // pred_region
        _
      $region40: #{tpu_custom_call.1} parent=11 // pred_fallthru
        _
      // Predicated region
      $region41: #{tpu_custom_call.1} parent=11 // pred_check
        %p293 = pneg %p210
      $region42: #{tpu_custom_call.1} parent=11 // pred_check_branch
        %295 = sbr.rel (%p293) target = $region44
      $region43: #{tpu_custom_call.1} parent=11 // pred_region
        _
      $region44: #{tpu_custom_call.1} parent=11 // pred_fallthru
        _
      // Predicated region
      $region45: #{tpu_custom_call.1} parent=11 // pred_check
        %p296 = pneg %p231
      $region46: #{tpu_custom_call.1} parent=11 // pred_check_branch
        %298 = sbr.rel (%p296) target = $region48
      $region47: #{tpu_custom_call.1} parent=11 // pred_region
        _
      $region48: #{tpu_custom_call.1} parent=11 // pred_fallthru
        _
    $region12: #{tpu_custom_call.1} parent=5 // pred_fallthru
      _
    %p299 = scmp.lt.s32.totalorder %s16, 2
    // Predicated region
    $region49: #{tpu_custom_call.1} parent=5 // pred_check
      %p300 = pneg %p299
    $region50: #{tpu_custom_call.1} parent=5 // pred_check_branch
      %302 = sbr.rel (%p300) target = $region52
    $region51: #{tpu_custom_call.1} parent=5 // pred_region
      // Predicated region
      $region53: #{tpu_custom_call.1} parent=51 // pred_check
        %p303 = pneg %p36
      $region54: #{tpu_custom_call.1} parent=51 // pred_check_branch
        %305 = sbr.rel (%p303) target = $region56
      $region55: #{tpu_custom_call.1} parent=51 // pred_region
        %p306 = scmp.lt.s32.totalorder %s16, 1
        %s307 = scalar_select %p306, %s16, 1
        %s308 = smul.addr %s307, 32
        %s309 = smul.addr %s308, 8
        %s310 = scalar_lea.vmem %s0, %s309
      $region56: #{tpu_custom_call.1} parent=51 // pred_fallthru
        _
    $region52: #{tpu_custom_call.1} parent=5 // pred_fallthru
      _
    %p311 = scmp.le.s32.totalorder 1, %s16
    %p312 = scmp.lt.s32.totalorder %s16, 3
    %p313 = pnand %p311, %p312
    %p314 = pneg %p313
    // Predicated region
    $region57: #{tpu_custom_call.1} parent=5 // pred_check
      _
    $region58: #{tpu_custom_call.1} parent=5 // pred_check_branch
      %316 = sbr.rel (%p313) target = $region60
    $region59: #{tpu_custom_call.1} parent=5 // pred_region
      %s317 = ssub.s32 %s16, 1
      %p318 = scmp.lt.s32.totalorder %s21, 1
      %s319 = scalar_select %p318, %s21, 1
      %s320 = smul.addr %s319, 32
      %s321 = smul.addr %s320, 8
      %s322 = scalar_lea.vmem %s0, %s321
      %p323 = pneg %p42
      %p324 = pneg %p39
      %p325 = pneg %p63
      %p326 = pneg %p60
      %p327 = pneg %p84
      %p328 = pneg %p81
      %p329 = pneg %p105
      %p330 = pneg %p102
      %p331 = pneg %p126
      %p332 = pneg %p123
      %p333 = pneg %p147
      %p334 = pneg %p144
      %p335 = pneg %p168
      %p336 = pneg %p165
      %p337 = pneg %p189
      %p338 = pneg %p186
      %p339 = pneg %p210
      %p340 = pneg %p207
      %p341 = pneg %p231
      %p342 = pneg %p228
      %p343 = pneg %p257
      %p344 = pneg %p254
      %p345 = scmp.lt.s32.totalorder %s21, 1
      %s346 = scalar_select %p345, %s21, 1
      %s347 = smul.addr %s346, 32
      %s348 = smul.addr %s347, 8
      %s349 = scalar_lea.vmem %s10, %s348
      %p350 = scmp.lt.s32.totalorder %s21, 1
      %s351 = scalar_select %p350, %s21, 1
      %s352 = smul.addr %s351, 32
      %s353 = smul.addr %s352, 8
      %s354 = scalar_lea.vmem %s0, %s353
      %p355 = scmp.lt.s32.totalorder %s21, 1
      %s356 = scalar_select %p355, %s21, 1
      %s357 = smul.addr %s356, 32
      %s358 = smul.addr %s357, 8
      %s359 = scalar_lea.vmem %s10, %s358
      %v360 = vld [vmem:[%s354] sm:$0xff]
      %v361 = vld [vmem:[%s354 + $0x8] sm:$0xff]
      %v362 = vld [vmem:[%s354 + $0x10] sm:$0xff]
      %v363 = vld [vmem:[%s354 + $0x18] sm:$0xff]
      %v364 = vld [vmem:[%s354 + $0x20] sm:$0xff]
      %v365 = vld [vmem:[%s354 + $0x28] sm:$0xff]
      %v366 = vld [vmem:[%s354 + $0x30] sm:$0xff]
      %v367 = vld [vmem:[%s354 + $0x38] sm:$0xff]
      %v368 = vld [vmem:[%s354 + $0x40] sm:$0xff]
      %v369 = vld [vmem:[%s354 + $0x48] sm:$0xff]
      %v370 = vld [vmem:[%s354 + $0x50] sm:$0xff]
      %v371 = vld [vmem:[%s354 + $0x58] sm:$0xff]
      %v372 = vld [vmem:[%s354 + $0x60] sm:$0xff]
      %v373 = vld [vmem:[%s354 + $0x68] sm:$0xff]
      %v374 = vld [vmem:[%s354 + $0x70] sm:$0xff]
      %v375 = vld [vmem:[%s354 + $0x78] sm:$0xff]
      %v376 = vld [vmem:[%s354 + $0x80] sm:$0xff]
      %v377 = vld [vmem:[%s354 + $0x88] sm:$0xff]
      %v378 = vld [vmem:[%s354 + $0x90] sm:$0xff]
      %v379 = vld [vmem:[%s354 + $0x98] sm:$0xff]
      %v380 = vld [vmem:[%s354 + $0xa0] sm:$0xff]
      %v381 = vld [vmem:[%s354 + $0xa8] sm:$0xff]
      %v382 = vld [vmem:[%s354 + $0xb0] sm:$0xff]
      %v383 = vld [vmem:[%s354 + $0xb8] sm:$0xff]
      %v384 = vld [vmem:[%s354 + $0xc0] sm:$0xff]
      %v385 = vld [vmem:[%s354 + $0xc8] sm:$0xff]
      %v386 = vld [vmem:[%s354 + $0xd0] sm:$0xff]
      %v387 = vld [vmem:[%s354 + $0xd8] sm:$0xff]
      %v388 = vld [vmem:[%s354 + $0xe0] sm:$0xff]
      %v389 = vld [vmem:[%s354 + $0xe8] sm:$0xff]
      %v390 = vld [vmem:[%s354 + $0xf0] sm:$0xff]
      %v391 = vld [vmem:[%s354 + $0xf8] sm:$0xff]
      %v392 = vld [vmem:[%s3] sm:$0xf]
      %v393 = vld [vmem:[%s4] sm:$0x1]
      %v395 = vlaneseq
      %v396 = vshrl.u32 %v395, 7
      %v397 = vsub.s32 0, %v396
      %v398 = vrot.slane %v393, %v397
      %vm400 = vcmask 31744
      %v402 = vsel %vm400, %v360, 0
      %v405 = vsel %vm400, %v361, 0
      %v408 = vsel %vm400, %v362, 0
      %v411 = vsel %vm400, %v363, 0
      %v414 = vsel %vm400, %v364, 0
      %v417 = vsel %vm400, %v365, 0
      %v420 = vsel %vm400, %v366, 0
      %v423 = vsel %vm400, %v367, 0
      %v426 = vsel %vm400, %v368, 0
      %v429 = vsel %vm400, %v369, 0
      %v432 = vsel %vm400, %v370, 0
      %v435 = vsel %vm400, %v371, 0
      %v438 = vsel %vm400, %v372, 0
      %v441 = vsel %vm400, %v373, 0
      %v444 = vsel %vm400, %v374, 0
      %v447 = vsel %vm400, %v375, 0
      %v450 = vsel %vm400, %v376, 0
      %v453 = vsel %vm400, %v377, 0
      %v456 = vsel %vm400, %v378, 0
      %v459 = vsel %vm400, %v379, 0
      %v462 = vsel %vm400, %v380, 0
      %v465 = vsel %vm400, %v381, 0
      %v468 = vsel %vm400, %v382, 0
      %v471 = vsel %vm400, %v383, 0
      %v474 = vsel %vm400, %v384, 0
      %v477 = vsel %vm400, %v385, 0
      %v480 = vsel %vm400, %v386, 0
      %v483 = vsel %vm400, %v387, 0
      %v486 = vsel %vm400, %v388, 0
      %v489 = vsel %vm400, %v389, 0
      %v492 = vsel %vm400, %v390, 0
      %v495 = vsel %vm400, %v391, 0
      %vm497 = vcmask 1043456
      %v499 = vsel %vm497, %v392, 0
      %501 = vmatprep.subr.mxu0 0.0
      %502 = vmatpush1.msra.mxu0 0.0
      %503 = vmatprep.subr.mxu0 0.0
      %504 = vmatpush1.msra.mxu0 0.0
      %505 = vmatprep.subr.mxu0 0.0
      %506 = vmatpush1.msra.mxu0 0.0
      %507 = vmatprep.subr.mxu0 0.0
      %508 = vmatpush1.msra.mxu0 0.0
      %509 = vmatprep.subr.mxu0 0.0
      %510 = vmatpush1.msra.mxu0 0.0
      %511 = vmatprep.subr.mxu0 0.0
      %512 = vmatpush1.msra.mxu0 0.0
      %513 = vmatprep.subr.mxu0 0.0
      %514 = vmatpush1.msra.mxu0 0.0
      %515 = vmatprep.subr.mxu0 0.0
      %516 = vmatpush1.msra.mxu0 0.0
      %517 = vmatprep.subr.mxu0 0.0
      %518 = vmatpush1.msra.mxu0 0.0
      %519 = vmatprep.subr.mxu0 0.0
      %520 = vmatpush1.msra.mxu0 0.0
      %521 = vmatprep.subr.mxu0 0.0
      %522 = vmatpush1.msra.mxu0 0.0
      %523 = vmatprep.subr.mxu0 0.0
      %524 = vmatpush1.msra.mxu0 0.0
      %525 = vmatprep.subr.mxu0 0.0
      %526 = vmatpush1.msra.mxu0 0.0
      %527 = vmatprep.subr.mxu0 0.0
      %528 = vmatpush1.msra.mxu0 0.0
      %529 = vmatprep.subr.mxu0 0.0
      %530 = vmatpush1.msra.mxu0 0.0
      %531 = vmatprep.subr.mxu0 0.0
      %532 = vmatpush1.msra.mxu0 %v499
      %533 = vmatprep.subr.mxu0 0.0
      %534 = vmatpush2.msra.mxu0 0.0
      %535 = vmatprep.subr.mxu0 0.0
      %536 = vmatpush2.msra.mxu0 0.0
      %537 = vmatprep.subr.mxu0 0.0
      %538 = vmatpush2.msra.mxu0 0.0
      %539 = vmatprep.subr.mxu0 0.0
      %540 = vmatpush2.msra.mxu0 0.0
      %541 = vmatprep.subr.mxu0 0.0
      %542 = vmatpush2.msra.mxu0 0.0
      %543 = vmatprep.subr.mxu0 0.0
      %544 = vmatpush2.msra.mxu0 0.0
      %545 = vmatprep.subr.mxu0 0.0
      %546 = vmatpush2.msra.mxu0 0.0
      %547 = vmatprep.subr.mxu0 0.0
      %548 = vmatpush2.msra.mxu0 0.0
      %549 = vmatprep.subr.mxu0 0.0
      %550 = vmatpush2.msra.mxu0 0.0
      %551 = vmatprep.subr.mxu0 0.0
      %552 = vmatpush2.msra.mxu0 0.0
      %553 = vmatprep.subr.mxu0 0.0
      %554 = vmatpush2.msra.mxu0 0.0
      %555 = vmatprep.subr.mxu0 0.0
      %556 = vmatpush2.msra.mxu0 0.0
      %557 = vmatprep.subr.mxu0 0.0
      %558 = vmatpush2.msra.mxu0 0.0
      %559 = vmatprep.subr.mxu0 0.0
      %560 = vmatpush2.msra.mxu0 0.0
      %561 = vmatprep.subr.mxu0 0.0
      %562 = vmatpush2.msra.mxu0 0.0
      %563 = vmatprep.subr.mxu0 0.0
      %564 = vmatpush2.msra.mxu0 0.0
      %565 = vmatprep.mubr.f32.mxu0 0.0
      %566 = vmatmul.mubr.f32.gmra.mxu0 %v402
      %v567 = vpop.f32.mrf.mxu0
      %v568 = vadd.f32 %v398, %v567
      %v569 = vpop.f32.mrf.mxu0
      %570 = vmatprep.mubr.f32.mxu0 0.0
      %571 = vmatmul.mubr.f32.gmra.mxu0 %v405
      %v572 = vpop.f32.mrf.mxu0
      %v573 = vadd.f32 %v398, %v572
      %v574 = vpop.f32.mrf.mxu0
      %575 = vmatprep.mubr.f32.mxu0 0.0
      %576 = vmatmul.mubr.f32.gmra.mxu0 %v408
      %v577 = vpop.f32.mrf.mxu0
      %v578 = vadd.f32 %v398, %v577
      %v579 = vpop.f32.mrf.mxu0
      %580 = vmatprep.mubr.f32.mxu0 0.0
      %581 = vmatmul.mubr.f32.gmra.mxu0 %v411
      %v582 = vpop.f32.mrf.mxu0
      %v583 = vadd.f32 %v398, %v582
      %v584 = vpop.f32.mrf.mxu0
      %585 = vmatprep.mubr.f32.mxu0 0.0
      %586 = vmatmul.mubr.f32.gmra.mxu0 %v414
      %v587 = vpop.f32.mrf.mxu0
      %v588 = vadd.f32 %v398, %v587
      %v589 = vpop.f32.mrf.mxu0
      %590 = vmatprep.mubr.f32.mxu0 0.0
      %591 = vmatmul.mubr.f32.gmra.mxu0 %v417
      %v592 = vpop.f32.mrf.mxu0
      %v593 = vadd.f32 %v398, %v592
      %v594 = vpop.f32.mrf.mxu0
      %595 = vmatprep.mubr.f32.mxu0 0.0
      %596 = vmatmul.mubr.f32.gmra.mxu0 %v420
      %v597 = vpop.f32.mrf.mxu0
      %v598 = vadd.f32 %v398, %v597
      %v599 = vpop.f32.mrf.mxu0
      %600 = vmatprep.mubr.f32.mxu0 0.0
      %601 = vmatmul.mubr.f32.gmra.mxu0 %v423
      %v602 = vpop.f32.mrf.mxu0
      %v603 = vadd.f32 %v398, %v602
      %v604 = vpop.f32.mrf.mxu0
      %605 = vmatprep.mubr.f32.mxu0 0.0
      %606 = vmatmul.mubr.f32.gmra.mxu0 %v426
      %v607 = vpop.f32.mrf.mxu0
      %v608 = vadd.f32 %v398, %v607
      %v609 = vpop.f32.mrf.mxu0
      %610 = vmatprep.mubr.f32.mxu0 0.0
      %611 = vmatmul.mubr.f32.gmra.mxu0 %v429
      %v612 = vpop.f32.mrf.mxu0
      %v613 = vadd.f32 %v398, %v612
      %v614 = vpop.f32.mrf.mxu0
      %615 = vmatprep.mubr.f32.mxu0 0.0
      %616 = vmatmul.mubr.f32.gmra.mxu0 %v432
      %v617 = vpop.f32.mrf.mxu0
      %v618 = vadd.f32 %v398, %v617
      %v619 = vpop.f32.mrf.mxu0
      %620 = vmatprep.mubr.f32.mxu0 0.0
      %621 = vmatmul.mubr.f32.gmra.mxu0 %v435
      %v622 = vpop.f32.mrf.mxu0
      %v623 = vadd.f32 %v398, %v622
      %v624 = vpop.f32.mrf.mxu0
      %625 = vmatprep.mubr.f32.mxu0 0.0
      %626 = vmatmul.mubr.f32.gmra.mxu0 %v438
      %v627 = vpop.f32.mrf.mxu0
      %v628 = vadd.f32 %v398, %v627
      %v629 = vpop.f32.mrf.mxu0
      %630 = vmatprep.mubr.f32.mxu0 0.0
      %631 = vmatmul.mubr.f32.gmra.mxu0 %v441
      %v632 = vpop.f32.mrf.mxu0
      %v633 = vadd.f32 %v398, %v632
      %v634 = vpop.f32.mrf.mxu0
      %635 = vmatprep.mubr.f32.mxu0 0.0
      %636 = vmatmul.mubr.f32.gmra.mxu0 %v444
      %v637 = vpop.f32.mrf.mxu0
      %v638 = vadd.f32 %v398, %v637
      %v639 = vpop.f32.mrf.mxu0
      %640 = vmatprep.mubr.f32.mxu0 0.0
      %641 = vmatmul.mubr.f32.gmra.mxu0 %v447
      %v642 = vpop.f32.mrf.mxu0
      %v643 = vadd.f32 %v398, %v642
      %v644 = vpop.f32.mrf.mxu0
      %645 = vmatprep.mubr.f32.mxu0 0.0
      %646 = vmatmul.mubr.f32.gmra.mxu0 %v450
      %v647 = vpop.f32.mrf.mxu0
      %v648 = vadd.f32 %v398, %v647
      %v649 = vpop.f32.mrf.mxu0
      %650 = vmatprep.mubr.f32.mxu0 0.0
      %651 = vmatmul.mubr.f32.gmra.mxu0 %v453
      %v652 = vpop.f32.mrf.mxu0
      %v653 = vadd.f32 %v398, %v652
      %v654 = vpop.f32.mrf.mxu0
      %655 = vmatprep.mubr.f32.mxu0 0.0
      %656 = vmatmul.mubr.f32.gmra.mxu0 %v456
      %v657 = vpop.f32.mrf.mxu0
      %v658 = vadd.f32 %v398, %v657
      %v659 = vpop.f32.mrf.mxu0
      %660 = vmatprep.mubr.f32.mxu0 0.0
      %661 = vmatmul.mubr.f32.gmra.mxu0 %v459
      %v662 = vpop.f32.mrf.mxu0
      %v663 = vadd.f32 %v398, %v662
      %v664 = vpop.f32.mrf.mxu0
      %665 = vmatprep.mubr.f32.mxu0 0.0
      %666 = vmatmul.mubr.f32.gmra.mxu0 %v462
      %v667 = vpop.f32.mrf.mxu0
      %v668 = vadd.f32 %v398, %v667
      %v669 = vpop.f32.mrf.mxu0
      %670 = vmatprep.mubr.f32.mxu0 0.0
      %671 = vmatmul.mubr.f32.gmra.mxu0 %v465
      %v672 = vpop.f32.mrf.mxu0
      %v673 = vadd.f32 %v398, %v672
      %v674 = vpop.f32.mrf.mxu0
      %675 = vmatprep.mubr.f32.mxu0 0.0
      %676 = vmatmul.mubr.f32.gmra.mxu0 %v468
      %v677 = vpop.f32.mrf.mxu0
      %v678 = vadd.f32 %v398, %v677
      %v679 = vpop.f32.mrf.mxu0
      %680 = vmatprep.mubr.f32.mxu0 0.0
      %681 = vmatmul.mubr.f32.gmra.mxu0 %v471
      %v682 = vpop.f32.mrf.mxu0
      %v683 = vadd.f32 %v398, %v682
      %v684 = vpop.f32.mrf.mxu0
      %685 = vmatprep.mubr.f32.mxu0 0.0
      %686 = vmatmul.mubr.f32.gmra.mxu0 %v474
      %v687 = vpop.f32.mrf.mxu0
      %v688 = vadd.f32 %v398, %v687
      %v689 = vpop.f32.mrf.mxu0
      %690 = vmatprep.mubr.f32.mxu0 0.0
      %691 = vmatmul.mubr.f32.gmra.mxu0 %v477
      %v692 = vpop.f32.mrf.mxu0
      %v693 = vadd.f32 %v398, %v692
      %v694 = vpop.f32.mrf.mxu0
      %695 = vmatprep.mubr.f32.mxu0 0.0
      %696 = vmatmul.mubr.f32.gmra.mxu0 %v480
      %v697 = vpop.f32.mrf.mxu0
      %v698 = vadd.f32 %v398, %v697
      %v699 = vpop.f32.mrf.mxu0
      %700 = vmatprep.mubr.f32.mxu0 0.0
      %701 = vmatmul.mubr.f32.gmra.mxu0 %v483
      %v702 = vpop.f32.mrf.mxu0
      %v703 = vadd.f32 %v398, %v702
      %v704 = vpop.f32.mrf.mxu0
      %705 = vmatprep.mubr.f32.mxu0 0.0
      %706 = vmatmul.mubr.f32.gmra.mxu0 %v486
      %v707 = vpop.f32.mrf.mxu0
      %v708 = vadd.f32 %v398, %v707
      %v709 = vpop.f32.mrf.mxu0
      %710 = vmatprep.mubr.f32.mxu0 0.0
      %711 = vmatmul.mubr.f32.gmra.mxu0 %v489
      %v712 = vpop.f32.mrf.mxu0
      %v713 = vadd.f32 %v398, %v712
      %v714 = vpop.f32.mrf.mxu0
      %715 = vmatprep.mubr.f32.mxu0 0.0
      %716 = vmatmul.mubr.f32.gmra.mxu0 %v492
      %v717 = vpop.f32.mrf.mxu0
      %v718 = vadd.f32 %v398, %v717
      %v719 = vpop.f32.mrf.mxu0
      %720 = vmatprep.mubr.f32.mxu0 0.0
      %721 = vmatmul.mubr.f32.gmra.mxu0 %v495
      %v722 = vpop.f32.mrf.mxu0
      %v723 = vadd.f32 %v398, %v722
      %v724 = vpop.f32.mrf.mxu0
      %725 = vdwg.mxu0
      %v726 = vmax.f32 %v568, 0.0
      %v727 = vmax.f32 %v573, 0.0
      %v728 = vmax.f32 %v578, 0.0
      %v729 = vmax.f32 %v583, 0.0
      %v730 = vmax.f32 %v588, 0.0
      %v731 = vmax.f32 %v593, 0.0
      %v732 = vmax.f32 %v598, 0.0
      %v733 = vmax.f32 %v603, 0.0
      %v734 = vmax.f32 %v608, 0.0
      %v735 = vmax.f32 %v613, 0.0
      %v736 = vmax.f32 %v618, 0.0
      %v737 = vmax.f32 %v623, 0.0
      %v738 = vmax.f32 %v628, 0.0
      %v739 = vmax.f32 %v633, 0.0
      %v740 = vmax.f32 %v638, 0.0
      %v741 = vmax.f32 %v643, 0.0
      %v742 = vmax.f32 %v648, 0.0
      %v743 = vmax.f32 %v653, 0.0
      %v744 = vmax.f32 %v658, 0.0
      %v745 = vmax.f32 %v663, 0.0
      %v746 = vmax.f32 %v668, 0.0
      %v747 = vmax.f32 %v673, 0.0
      %v748 = vmax.f32 %v678, 0.0
      %v749 = vmax.f32 %v683, 0.0
      %v750 = vmax.f32 %v688, 0.0
      %v751 = vmax.f32 %v693, 0.0
      %v752 = vmax.f32 %v698, 0.0
      %v753 = vmax.f32 %v703, 0.0
      %v754 = vmax.f32 %v708, 0.0
      %v755 = vmax.f32 %v713, 0.0
      %v756 = vmax.f32 %v718, 0.0
      %v757 = vmax.f32 %v723, 0.0
      %758 = vst.msk [vmem:[#allocation2] sm:$0xff] %vm400, 0.0
      %759 = vst.msk [vmem:[#allocation2 + $0x8] sm:$0xff] %vm400, 0.0
      %760 = vst.msk [vmem:[#allocation2 + $0x10] sm:$0xff] %vm400, 0.0
      %761 = vst.msk [vmem:[#allocation2 + $0x118] sm:$0xff] %vm400, 0.0
      %762 = vst.msk [vmem:[#allocation2 + $0x120] sm:$0xff] %vm400, 0.0
      %763 = vst.msk [vmem:[#allocation2 + $0x128] sm:$0xff] %vm400, 0.0
      %764 = vst.msk [vmem:[#allocation2 + $0x18] sm:$0xff] %vm400, %v726
      %765 = vst.msk [vmem:[#allocation2 + $0x20] sm:$0xff] %vm400, %v727
      %766 = vst.msk [vmem:[#allocation2 + $0x28] sm:$0xff] %vm400, %v728
      %767 = vst.msk [vmem:[#allocation2 + $0x30] sm:$0xff] %vm400, %v729
      %768 = vst.msk [vmem:[#allocation2 + $0x38] sm:$0xff] %vm400, %v730
      %769 = vst.msk [vmem:[#allocation2 + $0x40] sm:$0xff] %vm400, %v731
      %770 = vst.msk [vmem:[#allocation2 + $0x48] sm:$0xff] %vm400, %v732
      %771 = vst.msk [vmem:[#allocation2 + $0x50] sm:$0xff] %vm400, %v733
      %772 = vst.msk [vmem:[#allocation2 + $0x58] sm:$0xff] %vm400, %v734
      %773 = vst.msk [vmem:[#allocation2 + $0x60] sm:$0xff] %vm400, %v735
      %774 = vst.msk [vmem:[#allocation2 + $0x68] sm:$0xff] %vm400, %v736
      %775 = vst.msk [vmem:[#allocation2 + $0x70] sm:$0xff] %vm400, %v737
      %776 = vst.msk [vmem:[#allocation2 + $0x78] sm:$0xff] %vm400, %v738
      %777 = vst.msk [vmem:[#allocation2 + $0x80] sm:$0xff] %vm400, %v739
      %778 = vst.msk [vmem:[#allocation2 + $0x88] sm:$0xff] %vm400, %v740
      %779 = vst.msk [vmem:[#allocation2 + $0x90] sm:$0xff] %vm400, %v741
      %780 = vst.msk [vmem:[#allocation2 + $0x98] sm:$0xff] %vm400, %v742
      %781 = vst.msk [vmem:[#allocation2 + $0xa0] sm:$0xff] %vm400, %v743
      %782 = vst.msk [vmem:[#allocation2 + $0xa8] sm:$0xff] %vm400, %v744
      %783 = vst.msk [vmem:[#allocation2 + $0xb0] sm:$0xff] %vm400, %v745
      %784 = vst.msk [vmem:[#allocation2 + $0xb8] sm:$0xff] %vm400, %v746
      %785 = vst.msk [vmem:[#allocation2 + $0xc0] sm:$0xff] %vm400, %v747
      %786 = vst.msk [vmem:[#allocation2 + $0xc8] sm:$0xff] %vm400, %v748
      %787 = vst.msk [vmem:[#allocation2 + $0xd0] sm:$0xff] %vm400, %v749
      %788 = vst.msk [vmem:[#allocation2 + $0xd8] sm:$0xff] %vm400, %v750
      %789 = vst.msk [vmem:[#allocation2 + $0xe0] sm:$0xff] %vm400, %v751
      %790 = vst.msk [vmem:[#allocation2 + $0xe8] sm:$0xff] %vm400, %v752
      %791 = vst.msk [vmem:[#allocation2 + $0xf0] sm:$0xff] %vm400, %v753
      %792 = vst.msk [vmem:[#allocation2 + $0xf8] sm:$0xff] %vm400, %v754
      %793 = vst.msk [vmem:[#allocation2 + $0x100] sm:$0xff] %vm400, %v755
      %794 = vst.msk [vmem:[#allocation2 + $0x108] sm:$0xff] %vm400, %v756
      %795 = vst.msk [vmem:[#allocation2 + $0x110] sm:$0xff] %vm400, %v757
      %v796 = vld [vmem:[%s1] sm:$0xff]
      %v797 = vld [vmem:[%s1 + $0x8] sm:$0xff]
      %v798 = vld [vmem:[%s1 + $0x10] sm:$0xff]
      %v799 = vld [vmem:[%s1 + $0x18] sm:$0xff]
      %v800 = vld [vmem:[%s1 + $0x20] sm:$0xff]
      %v801 = vld [vmem:[%s1 + $0x28] sm:$0xff]
      %v802 = vld [vmem:[%s1 + $0x30] sm:$0xff]
      %v803 = vld [vmem:[%s1 + $0x38] sm:$0xff]
      %v804 = vld [vmem:[%s1 + $0x40] sm:$0xff]
      %v805 = vld [vmem:[%s1 + $0x48] sm:$0xff]
      %v806 = vld [vmem:[%s1 + $0x50] sm:$0xff]
      %v807 = vld [vmem:[%s1 + $0x58] sm:$0xff]
      %v808 = vld [vmem:[%s1 + $0x60] sm:$0xff]
      %v809 = vld [vmem:[%s1 + $0x68] sm:$0xff]
      %v810 = vld [vmem:[%s1 + $0x70] sm:$0xff]
      %v811 = vld [vmem:[%s1 + $0x78] sm:$0xff]
      %v812 = vld [vmem:[%s1 + $0x80] sm:$0xff]
      %v813 = vld [vmem:[%s1 + $0x88] sm:$0xff]
      %v814 = vld [vmem:[%s1 + $0x90] sm:$0xff]
      %v815 = vld [vmem:[%s1 + $0x98] sm:$0xff]
      %v816 = vld [vmem:[%s1 + $0xa0] sm:$0xff]
      %v817 = vld [vmem:[%s1 + $0xa8] sm:$0xff]
      %v818 = vld [vmem:[%s1 + $0xb0] sm:$0xff]
      %v819 = vld [vmem:[%s1 + $0xb8] sm:$0xff]
      %v820 = vld [vmem:[%s1 + $0xc0] sm:$0xff]
      %v821 = vld [vmem:[%s1 + $0xc8] sm:$0xff]
      %v822 = vld [vmem:[%s1 + $0xd0] sm:$0xff]
      %v823 = vld [vmem:[%s1 + $0xd8] sm:$0xff]
      %v824 = vld [vmem:[%s1 + $0xe0] sm:$0xff]
      %v825 = vld [vmem:[%s1 + $0xe8] sm:$0xff]
      %v826 = vld [vmem:[%s1 + $0xf0] sm:$0xff]
      %v827 = vld [vmem:[%s1 + $0xf8] sm:$0xff]
      %v828 = vld [vmem:[%s2] sm:$0xff]
      %v829 = vld [vmem:[%s2 + $0x8] sm:$0xff]
      %v830 = vld [vmem:[%s2 + $0x10] sm:$0xff]
      %v831 = vld [vmem:[%s2 + $0x18] sm:$0xff]
      %v832 = vld [vmem:[%s2 + $0x20] sm:$0xff]
      %v833 = vld [vmem:[%s2 + $0x28] sm:$0xff]
      %v834 = vld [vmem:[%s2 + $0x30] sm:$0xff]
      %v835 = vld [vmem:[%s2 + $0x38] sm:$0xff]
      %v836 = vld [vmem:[%s2 + $0x40] sm:$0xff]
      %v837 = vld [vmem:[%s2 + $0x48] sm:$0xff]
      %v838 = vld [vmem:[%s2 + $0x50] sm:$0xff]
      %v839 = vld [vmem:[%s2 + $0x58] sm:$0xff]
      %v840 = vld [vmem:[%s2 + $0x60] sm:$0xff]
      %v841 = vld [vmem:[%s2 + $0x68] sm:$0xff]
      %v842 = vld [vmem:[%s2 + $0x70] sm:$0xff]
      %v843 = vld [vmem:[%s2 + $0x78] sm:$0xff]
      %v844 = vld [vmem:[%s2 + $0x80] sm:$0xff]
      %v845 = vld [vmem:[%s2 + $0x88] sm:$0xff]
      %v846 = vld [vmem:[%s2 + $0x90] sm:$0xff]
      %v847 = vld [vmem:[%s2 + $0x98] sm:$0xff]
      %v848 = vld [vmem:[%s2 + $0xa0] sm:$0xff]
      %v849 = vld [vmem:[%s2 + $0xa8] sm:$0xff]
      %v850 = vld [vmem:[%s2 + $0xb0] sm:$0xff]
      %v851 = vld [vmem:[%s2 + $0xb8] sm:$0xff]
      %v852 = vld [vmem:[%s2 + $0xc0] sm:$0xff]
      %v853 = vld [vmem:[%s2 + $0xc8] sm:$0xff]
      %v854 = vld [vmem:[%s2 + $0xd0] sm:$0xff]
      %v855 = vld [vmem:[%s2 + $0xd8] sm:$0xff]
      %v856 = vld [vmem:[%s2 + $0xe0] sm:$0xff]
      %v857 = vld [vmem:[%s2 + $0xe8] sm:$0xff]
      %v858 = vld [vmem:[%s2 + $0xf0] sm:$0xff]
      %v859 = vld [vmem:[%s2 + $0xf8] sm:$0xff]
      %v860 = vld [vmem:[#allocation2 + $0x7] sm:$0xff]
      %v861 = vld [vmem:[#allocation2 + $0xf] sm:$0xff]
      %v862 = vld [vmem:[#allocation2 + $0x17] sm:$0xff]
      %v863 = vld [vmem:[#allocation2 + $0x1f] sm:$0xff]
      %v864 = vld [vmem:[#allocation2 + $0x27] sm:$0xff]
      %v865 = vld [vmem:[#allocation2 + $0x2f] sm:$0xff]
      %v866 = vld [vmem:[#allocation2 + $0x37] sm:$0xff]
      %v867 = vld [vmem:[#allocation2 + $0x3f] sm:$0xff]
      %v868 = vld [vmem:[#allocation2 + $0x47] sm:$0xff]
      %v869 = vld [vmem:[#allocation2 + $0x4f] sm:$0xff]
      %v870 = vld [vmem:[#allocation2 + $0x57] sm:$0xff]
      %v871 = vld [vmem:[#allocation2 + $0x5f] sm:$0xff]
      %v872 = vld [vmem:[#allocation2 + $0x67] sm:$0xff]
      %v873 = vld [vmem:[#allocation2 + $0x6f] sm:$0xff]
      %v874 = vld [vmem:[#allocation2 + $0x77] sm:$0xff]
      %v875 = vld [vmem:[#allocation2 + $0x7f] sm:$0xff]
      %v876 = vld [vmem:[#allocation2 + $0x87] sm:$0xff]
      %v877 = vld [vmem:[#allocation2 + $0x8f] sm:$0xff]
      %v878 = vld [vmem:[#allocation2 + $0x97] sm:$0xff]
      %v879 = vld [vmem:[#allocation2 + $0x9f] sm:$0xff]
      %v880 = vld [vmem:[#allocation2 + $0xa7] sm:$0xff]
      %v881 = vld [vmem:[#allocation2 + $0xaf] sm:$0xff]
      %v882 = vld [vmem:[#allocation2 + $0xb7] sm:$0xff]
      %v883 = vld [vmem:[#allocation2 + $0xbf] sm:$0xff]
      %v884 = vld [vmem:[#allocation2 + $0xc7] sm:$0xff]
      %v885 = vld [vmem:[#allocation2 + $0xcf] sm:$0xff]
      %v886 = vld [vmem:[#allocation2 + $0xd7] sm:$0xff]
      %v887 = vld [vmem:[#allocation2 + $0xdf] sm:$0xff]
      %v888 = vld [vmem:[#allocation2 + $0xe7] sm:$0xff]
      %v889 = vld [vmem:[#allocation2 + $0xef] sm:$0xff]
      %v890 = vld [vmem:[#allocation2 + $0xf7] sm:$0xff]
      %v891 = vld [vmem:[#allocation2 + $0xff] sm:$0xff]
      %893 = vset.pattern.permute.xlu0 0
      %894 = vperm.xlu0 %893, %v796
      %v895 = vpop.permute.xlu0 %894
      %898 = vset.pattern.permute.xlu0 0
      %899 = vperm.xlu0 %898, %v797
      %v900 = vpop.permute.xlu0 %899
      %903 = vset.pattern.permute.xlu0 0
      %904 = vperm.xlu0 %903, %v798
      %v905 = vpop.permute.xlu0 %904
      %908 = vset.pattern.permute.xlu0 0
      %909 = vperm.xlu0 %908, %v799
      %v910 = vpop.permute.xlu0 %909
      %913 = vset.pattern.permute.xlu0 0
      %914 = vperm.xlu0 %913, %v800
      %v915 = vpop.permute.xlu0 %914
      %918 = vset.pattern.permute.xlu0 0
      %919 = vperm.xlu0 %918, %v801
      %v920 = vpop.permute.xlu0 %919
      %923 = vset.pattern.permute.xlu0 0
      %924 = vperm.xlu0 %923, %v802
      %v925 = vpop.permute.xlu0 %924
      %928 = vset.pattern.permute.xlu0 0
      %929 = vperm.xlu0 %928, %v803
      %v930 = vpop.permute.xlu0 %929
      %933 = vset.pattern.permute.xlu0 0
      %934 = vperm.xlu0 %933, %v804
      %v935 = vpop.permute.xlu0 %934
      %938 = vset.pattern.permute.xlu0 0
      %939 = vperm.xlu0 %938, %v805
      %v940 = vpop.permute.xlu0 %939
      %943 = vset.pattern.permute.xlu0 0
      %944 = vperm.xlu0 %943, %v806
      %v945 = vpop.permute.xlu0 %944
      %948 = vset.pattern.permute.xlu0 0
      %949 = vperm.xlu0 %948, %v807
      %v950 = vpop.permute.xlu0 %949
      %953 = vset.pattern.permute.xlu0 0
      %954 = vperm.xlu0 %953, %v808
      %v955 = vpop.permute.xlu0 %954
      %958 = vset.pattern.permute.xlu0 0
      %959 = vperm.xlu0 %958, %v809
      %v960 = vpop.permute.xlu0 %959
      %963 = vset.pattern.permute.xlu0 0
      %964 = vperm.xlu0 %963, %v810
      %v965 = vpop.permute.xlu0 %964
      %968 = vset.pattern.permute.xlu0 0
      %969 = vperm.xlu0 %968, %v811
      %v970 = vpop.permute.xlu0 %969
      %973 = vset.pattern.permute.xlu0 0
      %974 = vperm.xlu0 %973, %v812
      %v975 = vpop.permute.xlu0 %974
      %978 = vset.pattern.permute.xlu0 0
      %979 = vperm.xlu0 %978, %v813
      %v980 = vpop.permute.xlu0 %979
      %983 = vset.pattern.permute.xlu0 0
      %984 = vperm.xlu0 %983, %v814
      %v985 = vpop.permute.xlu0 %984
      %988 = vset.pattern.permute.xlu0 0
      %989 = vperm.xlu0 %988, %v815
      %v990 = vpop.permute.xlu0 %989
      %993 = vset.pattern.permute.xlu0 0
      %994 = vperm.xlu0 %993, %v816
      %v995 = vpop.permute.xlu0 %994
      %998 = vset.pattern.permute.xlu0 0
      %999 = vperm.xlu0 %998, %v817
      %v1000 = vpop.permute.xlu0 %999
      %1003 = vset.pattern.permute.xlu0 0
      %1004 = vperm.xlu0 %1003, %v818
      %v1005 = vpop.permute.xlu0 %1004
      %1008 = vset.pattern.permute.xlu0 0
      %1009 = vperm.xlu0 %1008, %v819
      %v1010 = vpop.permute.xlu0 %1009
      %1013 = vset.pattern.permute.xlu0 0
      %1014 = vperm.xlu0 %1013, %v820
      %v1015 = vpop.permute.xlu0 %1014
      %1018 = vset.pattern.permute.xlu0 0
      %1019 = vperm.xlu0 %1018, %v821
      %v1020 = vpop.permute.xlu0 %1019
      %1023 = vset.pattern.permute.xlu0 0
      %1024 = vperm.xlu0 %1023, %v822
      %v1025 = vpop.permute.xlu0 %1024
      %1028 = vset.pattern.permute.xlu0 0
      %1029 = vperm.xlu0 %1028, %v823
      %v1030 = vpop.permute.xlu0 %1029
      %1033 = vset.pattern.permute.xlu0 0
      %1034 = vperm.xlu0 %1033, %v824
      %v1035 = vpop.permute.xlu0 %1034
      %1038 = vset.pattern.permute.xlu0 0
      %1039 = vperm.xlu0 %1038, %v825
      %v1040 = vpop.permute.xlu0 %1039
      %1043 = vset.pattern.permute.xlu0 0
      %1044 = vperm.xlu0 %1043, %v826
      %v1045 = vpop.permute.xlu0 %1044
      %1048 = vset.pattern.permute.xlu0 0
      %1049 = vperm.xlu0 %1048, %v827
      %v1050 = vpop.permute.xlu0 %1049
      %v1052 = vmul.f32 %v860, %v895
      %v1053 = vmul.f32 %v861, %v900
      %v1054 = vmul.f32 %v862, %v905
      %v1055 = vmul.f32 %v863, %v910
      %v1056 = vmul.f32 %v864, %v915
      %v1057 = vmul.f32 %v865, %v920
      %v1058 = vmul.f32 %v866, %v925
      %v1059 = vmul.f32 %v867, %v930
      %v1060 = vmul.f32 %v868, %v935
      %v1061 = vmul.f32 %v869, %v940
      %v1062 = vmul.f32 %v870, %v945
      %v1063 = vmul.f32 %v871, %v950
      %v1064 = vmul.f32 %v872, %v955
      %v1065 = vmul.f32 %v873, %v960
      %v1066 = vmul.f32 %v874, %v965
      %v1067 = vmul.f32 %v875, %v970
      %v1068 = vmul.f32 %v876, %v975
      %v1069 = vmul.f32 %v877, %v980
      %v1070 = vmul.f32 %v878, %v985
      %v1071 = vmul.f32 %v879, %v990
      %v1072 = vmul.f32 %v880, %v995
      %v1073 = vmul.f32 %v881, %v1000
      %v1074 = vmul.f32 %v882, %v1005
      %v1075 = vmul.f32 %v883, %v1010
      %v1076 = vmul.f32 %v884, %v1015
      %v1077 = vmul.f32 %v885, %v1020
      %v1078 = vmul.f32 %v886, %v1025
      %v1079 = vmul.f32 %v887, %v1030
      %v1080 = vmul.f32 %v888, %v1035
      %v1081 = vmul.f32 %v889, %v1040
      %v1082 = vmul.f32 %v890, %v1045
      %v1083 = vmul.f32 %v891, %v1050
      %v1084 = vld [vmem:[%s5] sm:$0xf]
      %v1085 = vld [vmem:[#allocation2 + $0x8] sm:$0xff]
      %v1086 = vld [vmem:[#allocation2 + $0x10] sm:$0xff]
      %v1087 = vld [vmem:[#allocation2 + $0x18] sm:$0xff]
      %v1088 = vld [vmem:[#allocation2 + $0x20] sm:$0xff]
      %v1089 = vld [vmem:[#allocation2 + $0x28] sm:$0xff]
      %v1090 = vld [vmem:[#allocation2 + $0x30] sm:$0xff]
      %v1091 = vld [vmem:[#allocation2 + $0x38] sm:$0xff]
      %v1092 = vld [vmem:[#allocation2 + $0x40] sm:$0xff]
      %v1093 = vld [vmem:[#allocation2 + $0x48] sm:$0xff]
      %v1094 = vld [vmem:[#allocation2 + $0x50] sm:$0xff]
      %v1095 = vld [vmem:[#allocation2 + $0x58] sm:$0xff]
      %v1096 = vld [vmem:[#allocation2 + $0x60] sm:$0xff]
      %v1097 = vld [vmem:[#allocation2 + $0x68] sm:$0xff]
      %v1098 = vld [vmem:[#allocation2 + $0x70] sm:$0xff]
      %v1099 = vld [vmem:[#allocation2 + $0x78] sm:$0xff]
      %v1100 = vld [vmem:[#allocation2 + $0x80] sm:$0xff]
      %v1101 = vld [vmem:[#allocation2 + $0x88] sm:$0xff]
      %v1102 = vld [vmem:[#allocation2 + $0x90] sm:$0xff]
      %v1103 = vld [vmem:[#allocation2 + $0x98] sm:$0xff]
      %v1104 = vld [vmem:[#allocation2 + $0xa0] sm:$0xff]
      %v1105 = vld [vmem:[#allocation2 + $0xa8] sm:$0xff]
      %v1106 = vld [vmem:[#allocation2 + $0xb0] sm:$0xff]
      %v1107 = vld [vmem:[#allocation2 + $0xb8] sm:$0xff]
      %v1108 = vld [vmem:[#allocation2 + $0xc0] sm:$0xff]
      %v1109 = vld [vmem:[#allocation2 + $0xc8] sm:$0xff]
      %v1110 = vld [vmem:[#allocation2 + $0xd0] sm:$0xff]
      %v1111 = vld [vmem:[#allocation2 + $0xd8] sm:$0xff]
      %v1112 = vld [vmem:[#allocation2 + $0xe0] sm:$0xff]
      %v1113 = vld [vmem:[#allocation2 + $0xe8] sm:$0xff]
      %v1114 = vld [vmem:[#allocation2 + $0xf0] sm:$0xff]
      %v1115 = vld [vmem:[#allocation2 + $0xf8] sm:$0xff]
      %v1116 = vld [vmem:[#allocation2 + $0x100] sm:$0xff]
      %s1117 = scalar_lea.vmem %s5, 4
      %v1118 = vld [vmem:[%s1117] sm:$0xf]
      %v1120 = vsel %vm400, %v1085, 0
      %v1123 = vsel %vm400, %v1086, 0
      %v1126 = vsel %vm400, %v1087, 0
      %v1129 = vsel %vm400, %v1088, 0
      %v1132 = vsel %vm400, %v1089, 0
      %v1135 = vsel %vm400, %v1090, 0
      %v1138 = vsel %vm400, %v1091, 0
      %v1141 = vsel %vm400, %v1092, 0
      %v1144 = vsel %vm400, %v1093, 0
      %v1147 = vsel %vm400, %v1094, 0
      %v1150 = vsel %vm400, %v1095, 0
      %v1153 = vsel %vm400, %v1096, 0
      %v1156 = vsel %vm400, %v1097, 0
      %v1159 = vsel %vm400, %v1098, 0
      %v1162 = vsel %vm400, %v1099, 0
      %v1165 = vsel %vm400, %v1100, 0
      %v1168 = vsel %vm400, %v1101, 0
      %v1171 = vsel %vm400, %v1102, 0
      %v1174 = vsel %vm400, %v1103, 0
      %v1177 = vsel %vm400, %v1104, 0
      %v1180 = vsel %vm400, %v1105, 0
      %v1183 = vsel %vm400, %v1106, 0
      %v1186 = vsel %vm400, %v1107, 0
      %v1189 = vsel %vm400, %v1108, 0
      %v1192 = vsel %vm400, %v1109, 0
      %v1195 = vsel %vm400, %v1110, 0
      %v1198 = vsel %vm400, %v1111, 0
      %v1201 = vsel %vm400, %v1112, 0
      %v1204 = vsel %vm400, %v1113, 0
      %v1207 = vsel %vm400, %v1114, 0
      %v1210 = vsel %vm400, %v1115, 0
      %v1213 = vsel %vm400, %v1116, 0
      %v1216 = vsel %vm497, %v1118, 0
      %1218 = vmatprep.subr.mxu0 0.0
      %1219 = vmatpush1.msra.mxu0 0.0
      %1220 = vmatprep.subr.mxu0 0.0
      %1221 = vmatpush1.msra.mxu0 0.0
      %1222 = vmatprep.subr.mxu0 0.0
      %1223 = vmatpush1.msra.mxu0 0.0
      %1224 = vmatprep.subr.mxu0 0.0
      %1225 = vmatpush1.msra.mxu0 0.0
      %1226 = vmatprep.subr.mxu0 0.0
      %1227 = vmatpush1.msra.mxu0 0.0
      %1228 = vmatprep.subr.mxu0 0.0
      %1229 = vmatpush1.msra.mxu0 0.0
      %1230 = vmatprep.subr.mxu0 0.0
      %1231 = vmatpush1.msra.mxu0 0.0
      %1232 = vmatprep.subr.mxu0 0.0
      %1233 = vmatpush1.msra.mxu0 0.0
      %1234 = vmatprep.subr.mxu0 0.0
      %1235 = vmatpush1.msra.mxu0 0.0
      %1236 = vmatprep.subr.mxu0 0.0
      %1237 = vmatpush1.msra.mxu0 0.0
      %1238 = vmatprep.subr.mxu0 0.0
      %1239 = vmatpush1.msra.mxu0 0.0
      %1240 = vmatprep.subr.mxu0 0.0
      %1241 = vmatpush1.msra.mxu0 0.0
      %1242 = vmatprep.subr.mxu0 0.0
      %1243 = vmatpush1.msra.mxu0 0.0
      %1244 = vmatprep.subr.mxu0 0.0
      %1245 = vmatpush1.msra.mxu0 0.0
      %1246 = vmatprep.subr.mxu0 0.0
      %1247 = vmatpush1.msra.mxu0 0.0
      %1248 = vmatprep.subr.mxu0 0.0
      %1249 = vmatpush1.msra.mxu0 %v1216
      %1250 = vmatprep.subr.mxu0 0.0
      %1251 = vmatpush2.msra.mxu0 0.0
      %1252 = vmatprep.subr.mxu0 0.0
      %1253 = vmatpush2.msra.mxu0 0.0
      %1254 = vmatprep.subr.mxu0 0.0
      %1255 = vmatpush2.msra.mxu0 0.0
      %1256 = vmatprep.subr.mxu0 0.0
      %1257 = vmatpush2.msra.mxu0 0.0
      %1258 = vmatprep.subr.mxu0 0.0
      %1259 = vmatpush2.msra.mxu0 0.0
      %1260 = vmatprep.subr.mxu0 0.0
      %1261 = vmatpush2.msra.mxu0 0.0
      %1262 = vmatprep.subr.mxu0 0.0
      %1263 = vmatpush2.msra.mxu0 0.0
      %1264 = vmatprep.subr.mxu0 0.0
      %1265 = vmatpush2.msra.mxu0 0.0
      %1266 = vmatprep.subr.mxu0 0.0
      %1267 = vmatpush2.msra.mxu0 0.0
      %1268 = vmatprep.subr.mxu0 0.0
      %1269 = vmatpush2.msra.mxu0 0.0
      %1270 = vmatprep.subr.mxu0 0.0
      %1271 = vmatpush2.msra.mxu0 0.0
      %1272 = vmatprep.subr.mxu0 0.0
      %1273 = vmatpush2.msra.mxu0 0.0
      %1274 = vmatprep.subr.mxu0 0.0
      %1275 = vmatpush2.msra.mxu0 0.0
      %1276 = vmatprep.subr.mxu0 0.0
      %1277 = vmatpush2.msra.mxu0 0.0
      %1278 = vmatprep.subr.mxu0 0.0
      %1279 = vmatpush2.msra.mxu0 0.0
      %1280 = vmatprep.subr.mxu0 0.0
      %1281 = vmatpush2.msra.mxu0 0.0
      %1282 = vmatprep.mubr.f32.mxu0 0.0
      %1283 = vmatmul.mubr.f32.gmra.mxu0 %v1120
      %v1284 = vpop.f32.mrf.mxu0
      %v1285 = vadd.f32 0.0, %v1284
      %v1286 = vpop.f32.mrf.mxu0
      %1287 = vmatprep.mubr.f32.mxu0 0.0
      %1288 = vmatmul.mubr.f32.gmra.mxu0 %v1123
      %v1289 = vpop.f32.mrf.mxu0
      %v1290 = vadd.f32 0.0, %v1289
      %v1291 = vpop.f32.mrf.mxu0
      %1292 = vmatprep.mubr.f32.mxu0 0.0
      %1293 = vmatmul.mubr.f32.gmra.mxu0 %v1126
      %v1294 = vpop.f32.mrf.mxu0
      %v1295 = vadd.f32 0.0, %v1294
      %v1296 = vpop.f32.mrf.mxu0
      %1297 = vmatprep.mubr.f32.mxu0 0.0
      %1298 = vmatmul.mubr.f32.gmra.mxu0 %v1129
      %v1299 = vpop.f32.mrf.mxu0
      %v1300 = vadd.f32 0.0, %v1299
      %v1301 = vpop.f32.mrf.mxu0
      %1302 = vmatprep.mubr.f32.mxu0 0.0
      %1303 = vmatmul.mubr.f32.gmra.mxu0 %v1132
      %v1304 = vpop.f32.mrf.mxu0
      %v1305 = vadd.f32 0.0, %v1304
      %v1306 = vpop.f32.mrf.mxu0
      %1307 = vmatprep.mubr.f32.mxu0 0.0
      %1308 = vmatmul.mubr.f32.gmra.mxu0 %v1135
      %v1309 = vpop.f32.mrf.mxu0
      %v1310 = vadd.f32 0.0, %v1309
      %v1311 = vpop.f32.mrf.mxu0
      %1312 = vmatprep.mubr.f32.mxu0 0.0
      %1313 = vmatmul.mubr.f32.gmra.mxu0 %v1138
      %v1314 = vpop.f32.mrf.mxu0
      %v1315 = vadd.f32 0.0, %v1314
      %v1316 = vpop.f32.mrf.mxu0
      %1317 = vmatprep.mubr.f32.mxu0 0.0
      %1318 = vmatmul.mubr.f32.gmra.mxu0 %v1141
      %v1319 = vpop.f32.mrf.mxu0
      %v1320 = vadd.f32 0.0, %v1319
      %v1321 = vpop.f32.mrf.mxu0
      %1322 = vmatprep.mubr.f32.mxu0 0.0
      %1323 = vmatmul.mubr.f32.gmra.mxu0 %v1144
      %v1324 = vpop.f32.mrf.mxu0
      %v1325 = vadd.f32 0.0, %v1324
      %v1326 = vpop.f32.mrf.mxu0
      %1327 = vmatprep.mubr.f32.mxu0 0.0
      %1328 = vmatmul.mubr.f32.gmra.mxu0 %v1147
      %v1329 = vpop.f32.mrf.mxu0
      %v1330 = vadd.f32 0.0, %v1329
      %v1331 = vpop.f32.mrf.mxu0
      %1332 = vmatprep.mubr.f32.mxu0 0.0
      %1333 = vmatmul.mubr.f32.gmra.mxu0 %v1150
      %v1334 = vpop.f32.mrf.mxu0
      %v1335 = vadd.f32 0.0, %v1334
      %v1336 = vpop.f32.mrf.mxu0
      %1337 = vmatprep.mubr.f32.mxu0 0.0
      %1338 = vmatmul.mubr.f32.gmra.mxu0 %v1153
      %v1339 = vpop.f32.mrf.mxu0
      %v1340 = vadd.f32 0.0, %v1339
      %v1341 = vpop.f32.mrf.mxu0
      %1342 = vmatprep.mubr.f32.mxu0 0.0
      %1343 = vmatmul.mubr.f32.gmra.mxu0 %v1156
      %v1344 = vpop.f32.mrf.mxu0
      %v1345 = vadd.f32 0.0, %v1344
      %v1346 = vpop.f32.mrf.mxu0
      %1347 = vmatprep.mubr.f32.mxu0 0.0
      %1348 = vmatmul.mubr.f32.gmra.mxu0 %v1159
      %v1349 = vpop.f32.mrf.mxu0
      %v1350 = vadd.f32 0.0, %v1349
      %v1351 = vpop.f32.mrf.mxu0
      %1352 = vmatprep.mubr.f32.mxu0 0.0
      %1353 = vmatmul.mubr.f32.gmra.mxu0 %v1162
      %v1354 = vpop.f32.mrf.mxu0
      %v1355 = vadd.f32 0.0, %v1354
      %v1356 = vpop.f32.mrf.mxu0
      %1357 = vmatprep.mubr.f32.mxu0 0.0
      %1358 = vmatmul.mubr.f32.gmra.mxu0 %v1165
      %v1359 = vpop.f32.mrf.mxu0
      %v1360 = vadd.f32 0.0, %v1359
      %v1361 = vpop.f32.mrf.mxu0
      %1362 = vmatprep.mubr.f32.mxu0 0.0
      %1363 = vmatmul.mubr.f32.gmra.mxu0 %v1168
      %v1364 = vpop.f32.mrf.mxu0
      %v1365 = vadd.f32 0.0, %v1364
      %v1366 = vpop.f32.mrf.mxu0
      %1367 = vmatprep.mubr.f32.mxu0 0.0
      %1368 = vmatmul.mubr.f32.gmra.mxu0 %v1171
      %v1369 = vpop.f32.mrf.mxu0
      %v1370 = vadd.f32 0.0, %v1369
      %v1371 = vpop.f32.mrf.mxu0
      %1372 = vmatprep.mubr.f32.mxu0 0.0
      %1373 = vmatmul.mubr.f32.gmra.mxu0 %v1174
      %v1374 = vpop.f32.mrf.mxu0
      %v1375 = vadd.f32 0.0, %v1374
      %v1376 = vpop.f32.mrf.mxu0
      %1377 = vmatprep.mubr.f32.mxu0 0.0
      %1378 = vmatmul.mubr.f32.gmra.mxu0 %v1177
      %v1379 = vpop.f32.mrf.mxu0
      %v1380 = vadd.f32 0.0, %v1379
      %v1381 = vpop.f32.mrf.mxu0
      %1382 = vmatprep.mubr.f32.mxu0 0.0
      %1383 = vmatmul.mubr.f32.gmra.mxu0 %v1180
      %v1384 = vpop.f32.mrf.mxu0
      %v1385 = vadd.f32 0.0, %v1384
      %v1386 = vpop.f32.mrf.mxu0
      %1387 = vmatprep.mubr.f32.mxu0 0.0
      %1388 = vmatmul.mubr.f32.gmra.mxu0 %v1183
      %v1389 = vpop.f32.mrf.mxu0
      %v1390 = vadd.f32 0.0, %v1389
      %v1391 = vpop.f32.mrf.mxu0
      %1392 = vmatprep.mubr.f32.mxu0 0.0
      %1393 = vmatmul.mubr.f32.gmra.mxu0 %v1186
      %v1394 = vpop.f32.mrf.mxu0
      %v1395 = vadd.f32 0.0, %v1394
      %v1396 = vpop.f32.mrf.mxu0
      %1397 = vmatprep.mubr.f32.mxu0 0.0
      %1398 = vmatmul.mubr.f32.gmra.mxu0 %v1189
      %v1399 = vpop.f32.mrf.mxu0
      %v1400 = vadd.f32 0.0, %v1399
      %v1401 = vpop.f32.mrf.mxu0
      %1402 = vmatprep.mubr.f32.mxu0 0.0
      %1403 = vmatmul.mubr.f32.gmra.mxu0 %v1192
      %v1404 = vpop.f32.mrf.mxu0
      %v1405 = vadd.f32 0.0, %v1404
      %v1406 = vpop.f32.mrf.mxu0
      %1407 = vmatprep.mubr.f32.mxu0 0.0
      %1408 = vmatmul.mubr.f32.gmra.mxu0 %v1195
      %v1409 = vpop.f32.mrf.mxu0
      %v1410 = vadd.f32 0.0, %v1409
      %v1411 = vpop.f32.mrf.mxu0
      %1412 = vmatprep.mubr.f32.mxu0 0.0
      %1413 = vmatmul.mubr.f32.gmra.mxu0 %v1198
      %v1414 = vpop.f32.mrf.mxu0
      %v1415 = vadd.f32 0.0, %v1414
      %v1416 = vpop.f32.mrf.mxu0
      %1417 = vmatprep.mubr.f32.mxu0 0.0
      %1418 = vmatmul.mubr.f32.gmra.mxu0 %v1201
      %v1419 = vpop.f32.mrf.mxu0
      %v1420 = vadd.f32 0.0, %v1419
      %v1421 = vpop.f32.mrf.mxu0
      %1422 = vmatprep.mubr.f32.mxu0 0.0
      %1423 = vmatmul.mubr.f32.gmra.mxu0 %v1204
      %v1424 = vpop.f32.mrf.mxu0
      %v1425 = vadd.f32 0.0, %v1424
      %v1426 = vpop.f32.mrf.mxu0
      %1427 = vmatprep.mubr.f32.mxu0 0.0
      %1428 = vmatmul.mubr.f32.gmra.mxu0 %v1207
      %v1429 = vpop.f32.mrf.mxu0
      %v1430 = vadd.f32 0.0, %v1429
      %v1431 = vpop.f32.mrf.mxu0
      %1432 = vmatprep.mubr.f32.mxu0 0.0
      %1433 = vmatmul.mubr.f32.gmra.mxu0 %v1210
      %v1434 = vpop.f32.mrf.mxu0
      %v1435 = vadd.f32 0.0, %v1434
      %v1436 = vpop.f32.mrf.mxu0
      %1437 = vmatprep.mubr.f32.mxu0 0.0
      %1438 = vmatmul.mubr.f32.gmra.mxu0 %v1213
      %v1439 = vpop.f32.mrf.mxu0
      %v1440 = vadd.f32 0.0, %v1439
      %v1441 = vpop.f32.mrf.mxu0
      %1442 = vdwg.mxu0
      %v1444 = vsel %vm400, %v1052, 0
      %v1447 = vsel %vm400, %v1053, 0
      %v1450 = vsel %vm400, %v1054, 0
      %v1453 = vsel %vm400, %v1055, 0
      %v1456 = vsel %vm400, %v1056, 0
      %v1459 = vsel %vm400, %v1057, 0
      %v1462 = vsel %vm400, %v1058, 0
      %v1465 = vsel %vm400, %v1059, 0
      %v1468 = vsel %vm400, %v1060, 0
      %v1471 = vsel %vm400, %v1061, 0
      %v1474 = vsel %vm400, %v1062, 0
      %v1477 = vsel %vm400, %v1063, 0
      %v1480 = vsel %vm400, %v1064, 0
      %v1483 = vsel %vm400, %v1065, 0
      %v1486 = vsel %vm400, %v1066, 0
      %v1489 = vsel %vm400, %v1067, 0
      %v1492 = vsel %vm400, %v1068, 0
      %v1495 = vsel %vm400, %v1069, 0
      %v1498 = vsel %vm400, %v1070, 0
      %v1501 = vsel %vm400, %v1071, 0
      %v1504 = vsel %vm400, %v1072, 0
      %v1507 = vsel %vm400, %v1073, 0
      %v1510 = vsel %vm400, %v1074, 0
      %v1513 = vsel %vm400, %v1075, 0
      %v1516 = vsel %vm400, %v1076, 0
      %v1519 = vsel %vm400, %v1077, 0
      %v1522 = vsel %vm400, %v1078, 0
      %v1525 = vsel %vm400, %v1079, 0
      %v1528 = vsel %vm400, %v1080, 0
      %v1531 = vsel %vm400, %v1081, 0
      %v1534 = vsel %vm400, %v1082, 0
      %v1537 = vsel %vm400, %v1083, 0
      %v1540 = vsel %vm497, %v1084, 0
      %1542 = vmatprep.subr.mxu0 0.0
      %1543 = vmatpush1.msra.mxu0 0.0
      %1544 = vmatprep.subr.mxu0 0.0
      %1545 = vmatpush1.msra.mxu0 0.0
      %1546 = vmatprep.subr.mxu0 0.0
      %1547 = vmatpush1.msra.mxu0 0.0
      %1548 = vmatprep.subr.mxu0 0.0
      %1549 = vmatpush1.msra.mxu0 0.0
      %1550 = vmatprep.subr.mxu0 0.0
      %1551 = vmatpush1.msra.mxu0 0.0
      %1552 = vmatprep.subr.mxu0 0.0
      %1553 = vmatpush1.msra.mxu0 0.0
      %1554 = vmatprep.subr.mxu0 0.0
      %1555 = vmatpush1.msra.mxu0 0.0
      %1556 = vmatprep.subr.mxu0 0.0
      %1557 = vmatpush1.msra.mxu0 0.0
      %1558 = vmatprep.subr.mxu0 0.0
      %1559 = vmatpush1.msra.mxu0 0.0
      %1560 = vmatprep.subr.mxu0 0.0
      %1561 = vmatpush1.msra.mxu0 0.0
      %1562 = vmatprep.subr.mxu0 0.0
      %1563 = vmatpush1.msra.mxu0 0.0
      %1564 = vmatprep.subr.mxu0 0.0
      %1565 = vmatpush1.msra.mxu0 0.0
      %1566 = vmatprep.subr.mxu0 0.0
      %1567 = vmatpush1.msra.mxu0 0.0
      %1568 = vmatprep.subr.mxu0 0.0
      %1569 = vmatpush1.msra.mxu0 0.0
      %1570 = vmatprep.subr.mxu0 0.0
      %1571 = vmatpush1.msra.mxu0 0.0
      %1572 = vmatprep.subr.mxu0 0.0
      %1573 = vmatpush1.msra.mxu0 %v1540
      %1574 = vmatprep.subr.mxu0 0.0
      %1575 = vmatpush2.msra.mxu0 0.0
      %1576 = vmatprep.subr.mxu0 0.0
      %1577 = vmatpush2.msra.mxu0 0.0
      %1578 = vmatprep.subr.mxu0 0.0
      %1579 = vmatpush2.msra.mxu0 0.0
      %1580 = vmatprep.subr.mxu0 0.0
      %1581 = vmatpush2.msra.mxu0 0.0
      %1582 = vmatprep.subr.mxu0 0.0
      %1583 = vmatpush2.msra.mxu0 0.0
      %1584 = vmatprep.subr.mxu0 0.0
      %1585 = vmatpush2.msra.mxu0 0.0
      %1586 = vmatprep.subr.mxu0 0.0
      %1587 = vmatpush2.msra.mxu0 0.0
      %1588 = vmatprep.subr.mxu0 0.0
      %1589 = vmatpush2.msra.mxu0 0.0
      %1590 = vmatprep.subr.mxu0 0.0
      %1591 = vmatpush2.msra.mxu0 0.0
      %1592 = vmatprep.subr.mxu0 0.0
      %1593 = vmatpush2.msra.mxu0 0.0
      %1594 = vmatprep.subr.mxu0 0.0
      %1595 = vmatpush2.msra.mxu0 0.0
      %1596 = vmatprep.subr.mxu0 0.0
      %1597 = vmatpush2.msra.mxu0 0.0
      %1598 = vmatprep.subr.mxu0 0.0
      %1599 = vmatpush2.msra.mxu0 0.0
      %1600 = vmatprep.subr.mxu0 0.0
      %1601 = vmatpush2.msra.mxu0 0.0
      %1602 = vmatprep.subr.mxu0 0.0
      %1603 = vmatpush2.msra.mxu0 0.0
      %1604 = vmatprep.subr.mxu0 0.0
      %1605 = vmatpush2.msra.mxu0 0.0
      %1606 = vmatprep.mubr.f32.mxu0 0.0
      %1607 = vmatmul.mubr.f32.gmra.mxu0 %v1444
      %v1608 = vpop.f32.mrf.mxu0
      %v1609 = vadd.f32 %v1285, %v1608
      %v1610 = vpop.f32.mrf.mxu0
      %1611 = vmatprep.mubr.f32.mxu0 0.0
      %1612 = vmatmul.mubr.f32.gmra.mxu0 %v1447
      %v1613 = vpop.f32.mrf.mxu0
      %v1614 = vadd.f32 %v1290, %v1613
      %v1615 = vpop.f32.mrf.mxu0
      %1616 = vmatprep.mubr.f32.mxu0 0.0
      %1617 = vmatmul.mubr.f32.gmra.mxu0 %v1450
      %v1618 = vpop.f32.mrf.mxu0
      %v1619 = vadd.f32 %v1295, %v1618
      %v1620 = vpop.f32.mrf.mxu0
      %1621 = vmatprep.mubr.f32.mxu0 0.0
      %1622 = vmatmul.mubr.f32.gmra.mxu0 %v1453
      %v1623 = vpop.f32.mrf.mxu0
      %v1624 = vadd.f32 %v1300, %v1623
      %v1625 = vpop.f32.mrf.mxu0
      %1626 = vmatprep.mubr.f32.mxu0 0.0
      %1627 = vmatmul.mubr.f32.gmra.mxu0 %v1456
      %v1628 = vpop.f32.mrf.mxu0
      %v1629 = vadd.f32 %v1305, %v1628
      %v1630 = vpop.f32.mrf.mxu0
      %1631 = vmatprep.mubr.f32.mxu0 0.0
      %1632 = vmatmul.mubr.f32.gmra.mxu0 %v1459
      %v1633 = vpop.f32.mrf.mxu0
      %v1634 = vadd.f32 %v1310, %v1633
      %v1635 = vpop.f32.mrf.mxu0
      %1636 = vmatprep.mubr.f32.mxu0 0.0
      %1637 = vmatmul.mubr.f32.gmra.mxu0 %v1462
      %v1638 = vpop.f32.mrf.mxu0
      %v1639 = vadd.f32 %v1315, %v1638
      %v1640 = vpop.f32.mrf.mxu0
      %1641 = vmatprep.mubr.f32.mxu0 0.0
      %1642 = vmatmul.mubr.f32.gmra.mxu0 %v1465
      %v1643 = vpop.f32.mrf.mxu0
      %v1644 = vadd.f32 %v1320, %v1643
      %v1645 = vpop.f32.mrf.mxu0
      %1646 = vmatprep.mubr.f32.mxu0 0.0
      %1647 = vmatmul.mubr.f32.gmra.mxu0 %v1468
      %v1648 = vpop.f32.mrf.mxu0
      %v1649 = vadd.f32 %v1325, %v1648
      %v1650 = vpop.f32.mrf.mxu0
      %1651 = vmatprep.mubr.f32.mxu0 0.0
      %1652 = vmatmul.mubr.f32.gmra.mxu0 %v1471
      %v1653 = vpop.f32.mrf.mxu0
      %v1654 = vadd.f32 %v1330, %v1653
      %v1655 = vpop.f32.mrf.mxu0
      %1656 = vmatprep.mubr.f32.mxu0 0.0
      %1657 = vmatmul.mubr.f32.gmra.mxu0 %v1474
      %v1658 = vpop.f32.mrf.mxu0
      %v1659 = vadd.f32 %v1335, %v1658
      %v1660 = vpop.f32.mrf.mxu0
      %1661 = vmatprep.mubr.f32.mxu0 0.0
      %1662 = vmatmul.mubr.f32.gmra.mxu0 %v1477
      %v1663 = vpop.f32.mrf.mxu0
      %v1664 = vadd.f32 %v1340, %v1663
      %v1665 = vpop.f32.mrf.mxu0
      %1666 = vmatprep.mubr.f32.mxu0 0.0
      %1667 = vmatmul.mubr.f32.gmra.mxu0 %v1480
      %v1668 = vpop.f32.mrf.mxu0
      %v1669 = vadd.f32 %v1345, %v1668
      %v1670 = vpop.f32.mrf.mxu0
      %1671 = vmatprep.mubr.f32.mxu0 0.0
      %1672 = vmatmul.mubr.f32.gmra.mxu0 %v1483
      %v1673 = vpop.f32.mrf.mxu0
      %v1674 = vadd.f32 %v1350, %v1673
      %v1675 = vpop.f32.mrf.mxu0
      %1676 = vmatprep.mubr.f32.mxu0 0.0
      %1677 = vmatmul.mubr.f32.gmra.mxu0 %v1486
      %v1678 = vpop.f32.mrf.mxu0
      %v1679 = vadd.f32 %v1355, %v1678
      %v1680 = vpop.f32.mrf.mxu0
      %1681 = vmatprep.mubr.f32.mxu0 0.0
      %1682 = vmatmul.mubr.f32.gmra.mxu0 %v1489
      %v1683 = vpop.f32.mrf.mxu0
      %v1684 = vadd.f32 %v1360, %v1683
      %v1685 = vpop.f32.mrf.mxu0
      %1686 = vmatprep.mubr.f32.mxu0 0.0
      %1687 = vmatmul.mubr.f32.gmra.mxu0 %v1492
      %v1688 = vpop.f32.mrf.mxu0
      %v1689 = vadd.f32 %v1365, %v1688
      %v1690 = vpop.f32.mrf.mxu0
      %1691 = vmatprep.mubr.f32.mxu0 0.0
      %1692 = vmatmul.mubr.f32.gmra.mxu0 %v1495
      %v1693 = vpop.f32.mrf.mxu0
      %v1694 = vadd.f32 %v1370, %v1693
      %v1695 = vpop.f32.mrf.mxu0
      %1696 = vmatprep.mubr.f32.mxu0 0.0
      %1697 = vmatmul.mubr.f32.gmra.mxu0 %v1498
      %v1698 = vpop.f32.mrf.mxu0
      %v1699 = vadd.f32 %v1375, %v1698
      %v1700 = vpop.f32.mrf.mxu0
      %1701 = vmatprep.mubr.f32.mxu0 0.0
      %1702 = vmatmul.mubr.f32.gmra.mxu0 %v1501
      %v1703 = vpop.f32.mrf.mxu0
      %v1704 = vadd.f32 %v1380, %v1703
      %v1705 = vpop.f32.mrf.mxu0
      %1706 = vmatprep.mubr.f32.mxu0 0.0
      %1707 = vmatmul.mubr.f32.gmra.mxu0 %v1504
      %v1708 = vpop.f32.mrf.mxu0
      %v1709 = vadd.f32 %v1385, %v1708
      %v1710 = vpop.f32.mrf.mxu0
      %1711 = vmatprep.mubr.f32.mxu0 0.0
      %1712 = vmatmul.mubr.f32.gmra.mxu0 %v1507
      %v1713 = vpop.f32.mrf.mxu0
      %v1714 = vadd.f32 %v1390, %v1713
      %v1715 = vpop.f32.mrf.mxu0
      %1716 = vmatprep.mubr.f32.mxu0 0.0
      %1717 = vmatmul.mubr.f32.gmra.mxu0 %v1510
      %v1718 = vpop.f32.mrf.mxu0
      %v1719 = vadd.f32 %v1395, %v1718
      %v1720 = vpop.f32.mrf.mxu0
      %1721 = vmatprep.mubr.f32.mxu0 0.0
      %1722 = vmatmul.mubr.f32.gmra.mxu0 %v1513
      %v1723 = vpop.f32.mrf.mxu0
      %v1724 = vadd.f32 %v1400, %v1723
      %v1725 = vpop.f32.mrf.mxu0
      %1726 = vmatprep.mubr.f32.mxu0 0.0
      %1727 = vmatmul.mubr.f32.gmra.mxu0 %v1516
      %v1728 = vpop.f32.mrf.mxu0
      %v1729 = vadd.f32 %v1405, %v1728
      %v1730 = vpop.f32.mrf.mxu0
      %1731 = vmatprep.mubr.f32.mxu0 0.0
      %1732 = vmatmul.mubr.f32.gmra.mxu0 %v1519
      %v1733 = vpop.f32.mrf.mxu0
      %v1734 = vadd.f32 %v1410, %v1733
      %v1735 = vpop.f32.mrf.mxu0
      %1736 = vmatprep.mubr.f32.mxu0 0.0
      %1737 = vmatmul.mubr.f32.gmra.mxu0 %v1522
      %v1738 = vpop.f32.mrf.mxu0
      %v1739 = vadd.f32 %v1415, %v1738
      %v1740 = vpop.f32.mrf.mxu0
      %1741 = vmatprep.mubr.f32.mxu0 0.0
      %1742 = vmatmul.mubr.f32.gmra.mxu0 %v1525
      %v1743 = vpop.f32.mrf.mxu0
      %v1744 = vadd.f32 %v1420, %v1743
      %v1745 = vpop.f32.mrf.mxu0
      %1746 = vmatprep.mubr.f32.mxu0 0.0
      %1747 = vmatmul.mubr.f32.gmra.mxu0 %v1528
      %v1748 = vpop.f32.mrf.mxu0
      %v1749 = vadd.f32 %v1425, %v1748
      %v1750 = vpop.f32.mrf.mxu0
      %1751 = vmatprep.mubr.f32.mxu0 0.0
      %1752 = vmatmul.mubr.f32.gmra.mxu0 %v1531
      %v1753 = vpop.f32.mrf.mxu0
      %v1754 = vadd.f32 %v1430, %v1753
      %v1755 = vpop.f32.mrf.mxu0
      %1756 = vmatprep.mubr.f32.mxu0 0.0
      %1757 = vmatmul.mubr.f32.gmra.mxu0 %v1534
      %v1758 = vpop.f32.mrf.mxu0
      %v1759 = vadd.f32 %v1435, %v1758
      %v1760 = vpop.f32.mrf.mxu0
      %1761 = vmatprep.mubr.f32.mxu0 0.0
      %1762 = vmatmul.mubr.f32.gmra.mxu0 %v1537
      %v1763 = vpop.f32.mrf.mxu0
      %v1764 = vadd.f32 %v1440, %v1763
      %v1765 = vpop.f32.mrf.mxu0
      %1766 = vdwg.mxu0
      %v1767 = vld [vmem:[#allocation2 + $0x9] sm:$0xff]
      %v1768 = vld [vmem:[#allocation2 + $0x11] sm:$0xff]
      %v1769 = vld [vmem:[#allocation2 + $0x19] sm:$0xff]
      %v1770 = vld [vmem:[#allocation2 + $0x21] sm:$0xff]
      %v1771 = vld [vmem:[#allocation2 + $0x29] sm:$0xff]
      %v1772 = vld [vmem:[#allocation2 + $0x31] sm:$0xff]
      %v1773 = vld [vmem:[#allocation2 + $0x39] sm:$0xff]
      %v1774 = vld [vmem:[#allocation2 + $0x41] sm:$0xff]
      %v1775 = vld [vmem:[#allocation2 + $0x49] sm:$0xff]
      %v1776 = vld [vmem:[#allocation2 + $0x51] sm:$0xff]
      %v1777 = vld [vmem:[#allocation2 + $0x59] sm:$0xff]
      %v1778 = vld [vmem:[#allocation2 + $0x61] sm:$0xff]
      %v1779 = vld [vmem:[#allocation2 + $0x69] sm:$0xff]
      %v1780 = vld [vmem:[#allocation2 + $0x71] sm:$0xff]
      %v1781 = vld [vmem:[#allocation2 + $0x79] sm:$0xff]
      %v1782 = vld [vmem:[#allocation2 + $0x81] sm:$0xff]
      %v1783 = vld [vmem:[#allocation2 + $0x89] sm:$0xff]
      %v1784 = vld [vmem:[#allocation2 + $0x91] sm:$0xff]
      %v1785 = vld [vmem:[#allocation2 + $0x99] sm:$0xff]
      %v1786 = vld [vmem:[#allocation2 + $0xa1] sm:$0xff]
      %v1787 = vld [vmem:[#allocation2 + $0xa9] sm:$0xff]
      %v1788 = vld [vmem:[#allocation2 + $0xb1] sm:$0xff]
      %v1789 = vld [vmem:[#allocation2 + $0xb9] sm:$0xff]
      %v1790 = vld [vmem:[#allocation2 + $0xc1] sm:$0xff]
      %v1791 = vld [vmem:[#allocation2 + $0xc9] sm:$0xff]
      %v1792 = vld [vmem:[#allocation2 + $0xd1] sm:$0xff]
      %v1793 = vld [vmem:[#allocation2 + $0xd9] sm:$0xff]
      %v1794 = vld [vmem:[#allocation2 + $0xe1] sm:$0xff]
      %v1795 = vld [vmem:[#allocation2 + $0xe9] sm:$0xff]
      %v1796 = vld [vmem:[#allocation2 + $0xf1] sm:$0xff]
      %v1797 = vld [vmem:[#allocation2 + $0xf9] sm:$0xff]
      %v1798 = vld [vmem:[#allocation2 + $0x101] sm:$0xff]
      %1800 = vset.pattern.permute.xlu0 0
      %1801 = vperm.xlu0 %1800, %v828
      %v1802 = vpop.permute.xlu0 %1801
      %1805 = vset.pattern.permute.xlu0 0
      %1806 = vperm.xlu0 %1805, %v829
      %v1807 = vpop.permute.xlu0 %1806
      %1810 = vset.pattern.permute.xlu0 0
      %1811 = vperm.xlu0 %1810, %v830
      %v1812 = vpop.permute.xlu0 %1811
      %1815 = vset.pattern.permute.xlu0 0
      %1816 = vperm.xlu0 %1815, %v831
      %v1817 = vpop.permute.xlu0 %1816
      %1820 = vset.pattern.permute.xlu0 0
      %1821 = vperm.xlu0 %1820, %v832
      %v1822 = vpop.permute.xlu0 %1821
      %1825 = vset.pattern.permute.xlu0 0
      %1826 = vperm.xlu0 %1825, %v833
      %v1827 = vpop.permute.xlu0 %1826
      %1830 = vset.pattern.permute.xlu0 0
      %1831 = vperm.xlu0 %1830, %v834
      %v1832 = vpop.permute.xlu0 %1831
      %1835 = vset.pattern.permute.xlu0 0
      %1836 = vperm.xlu0 %1835, %v835
      %v1837 = vpop.permute.xlu0 %1836
      %1840 = vset.pattern.permute.xlu0 0
      %1841 = vperm.xlu0 %1840, %v836
      %v1842 = vpop.permute.xlu0 %1841
      %1845 = vset.pattern.permute.xlu0 0
      %1846 = vperm.xlu0 %1845, %v837
      %v1847 = vpop.permute.xlu0 %1846
      %1850 = vset.pattern.permute.xlu0 0
      %1851 = vperm.xlu0 %1850, %v838
      %v1852 = vpop.permute.xlu0 %1851
      %1855 = vset.pattern.permute.xlu0 0
      %1856 = vperm.xlu0 %1855, %v839
      %v1857 = vpop.permute.xlu0 %1856
      %1860 = vset.pattern.permute.xlu0 0
      %1861 = vperm.xlu0 %1860, %v840
      %v1862 = vpop.permute.xlu0 %1861
      %1865 = vset.pattern.permute.xlu0 0
      %1866 = vperm.xlu0 %1865, %v841
      %v1867 = vpop.permute.xlu0 %1866
      %1870 = vset.pattern.permute.xlu0 0
      %1871 = vperm.xlu0 %1870, %v842
      %v1872 = vpop.permute.xlu0 %1871
      %1875 = vset.pattern.permute.xlu0 0
      %1876 = vperm.xlu0 %1875, %v843
      %v1877 = vpop.permute.xlu0 %1876
      %1880 = vset.pattern.permute.xlu0 0
      %1881 = vperm.xlu0 %1880, %v844
      %v1882 = vpop.permute.xlu0 %1881
      %1885 = vset.pattern.permute.xlu0 0
      %1886 = vperm.xlu0 %1885, %v845
      %v1887 = vpop.permute.xlu0 %1886
      %1890 = vset.pattern.permute.xlu0 0
      %1891 = vperm.xlu0 %1890, %v846
      %v1892 = vpop.permute.xlu0 %1891
      %1895 = vset.pattern.permute.xlu0 0
      %1896 = vperm.xlu0 %1895, %v847
      %v1897 = vpop.permute.xlu0 %1896
      %1900 = vset.pattern.permute.xlu0 0
      %1901 = vperm.xlu0 %1900, %v848
      %v1902 = vpop.permute.xlu0 %1901
      %1905 = vset.pattern.permute.xlu0 0
      %1906 = vperm.xlu0 %1905, %v849
      %v1907 = vpop.permute.xlu0 %1906
      %1910 = vset.pattern.permute.xlu0 0
      %1911 = vperm.xlu0 %1910, %v850
      %v1912 = vpop.permute.xlu0 %1911
      %1915 = vset.pattern.permute.xlu0 0
      %1916 = vperm.xlu0 %1915, %v851
      %v1917 = vpop.permute.xlu0 %1916
      %1920 = vset.pattern.permute.xlu0 0
      %1921 = vperm.xlu0 %1920, %v852
      %v1922 = vpop.permute.xlu0 %1921
      %1925 = vset.pattern.permute.xlu0 0
      %1926 = vperm.xlu0 %1925, %v853
      %v1927 = vpop.permute.xlu0 %1926
      %1930 = vset.pattern.permute.xlu0 0
      %1931 = vperm.xlu0 %1930, %v854
      %v1932 = vpop.permute.xlu0 %1931
      %1935 = vset.pattern.permute.xlu0 0
      %1936 = vperm.xlu0 %1935, %v855
      %v1937 = vpop.permute.xlu0 %1936
      %1940 = vset.pattern.permute.xlu0 0
      %1941 = vperm.xlu0 %1940, %v856
      %v1942 = vpop.permute.xlu0 %1941
      %1945 = vset.pattern.permute.xlu0 0
      %1946 = vperm.xlu0 %1945, %v857
      %v1947 = vpop.permute.xlu0 %1946
      %1950 = vset.pattern.permute.xlu0 0
      %1951 = vperm.xlu0 %1950, %v858
      %v1952 = vpop.permute.xlu0 %1951
      %1955 = vset.pattern.permute.xlu0 0
      %1956 = vperm.xlu0 %1955, %v859
      %v1957 = vpop.permute.xlu0 %1956
      %v1959 = vmul.f32 %v1767, %v1802
      %v1960 = vmul.f32 %v1768, %v1807
      %v1961 = vmul.f32 %v1769, %v1812
      %v1962 = vmul.f32 %v1770, %v1817
      %v1963 = vmul.f32 %v1771, %v1822
      %v1964 = vmul.f32 %v1772, %v1827
      %v1965 = vmul.f32 %v1773, %v1832
      %v1966 = vmul.f32 %v1774, %v1837
      %v1967 = vmul.f32 %v1775, %v1842
      %v1968 = vmul.f32 %v1776, %v1847
      %v1969 = vmul.f32 %v1777, %v1852
      %v1970 = vmul.f32 %v1778, %v1857
      %v1971 = vmul.f32 %v1779, %v1862
      %v1972 = vmul.f32 %v1780, %v1867
      %v1973 = vmul.f32 %v1781, %v1872
      %v1974 = vmul.f32 %v1782, %v1877
      %v1975 = vmul.f32 %v1783, %v1882
      %v1976 = vmul.f32 %v1784, %v1887
      %v1977 = vmul.f32 %v1785, %v1892
      %v1978 = vmul.f32 %v1786, %v1897
      %v1979 = vmul.f32 %v1787, %v1902
      %v1980 = vmul.f32 %v1788, %v1907
      %v1981 = vmul.f32 %v1789, %v1912
      %v1982 = vmul.f32 %v1790, %v1917
      %v1983 = vmul.f32 %v1791, %v1922
      %v1984 = vmul.f32 %v1792, %v1927
      %v1985 = vmul.f32 %v1793, %v1932
      %v1986 = vmul.f32 %v1794, %v1937
      %v1987 = vmul.f32 %v1795, %v1942
      %v1988 = vmul.f32 %v1796, %v1947
      %v1989 = vmul.f32 %v1797, %v1952
      %v1990 = vmul.f32 %v1798, %v1957
      %s1991 = scalar_lea.vmem %s5, 8
      %v1992 = vld [vmem:[%s1991] sm:$0xf]
      %v1994 = vsel %vm400, %v1959, 0
      %v1997 = vsel %vm400, %v1960, 0
      %v2000 = vsel %vm400, %v1961, 0
      %v2003 = vsel %vm400, %v1962, 0
      %v2006 = vsel %vm400, %v1963, 0
      %v2009 = vsel %vm400, %v1964, 0
      %v2012 = vsel %vm400, %v1965, 0
      %v2015 = vsel %vm400, %v1966, 0
      %v2018 = vsel %vm400, %v1967, 0
      %v2021 = vsel %vm400, %v1968, 0
      %v2024 = vsel %vm400, %v1969, 0
      %v2027 = vsel %vm400, %v1970, 0
      %v2030 = vsel %vm400, %v1971, 0
      %v2033 = vsel %vm400, %v1972, 0
      %v2036 = vsel %vm400, %v1973, 0
      %v2039 = vsel %vm400, %v1974, 0
      %v2042 = vsel %vm400, %v1975, 0
      %v2045 = vsel %vm400, %v1976, 0
      %v2048 = vsel %vm400, %v1977, 0
      %v2051 = vsel %vm400, %v1978, 0
      %v2054 = vsel %vm400, %v1979, 0
      %v2057 = vsel %vm400, %v1980, 0
      %v2060 = vsel %vm400, %v1981, 0
      %v2063 = vsel %vm400, %v1982, 0
      %v2066 = vsel %vm400, %v1983, 0
      %v2069 = vsel %vm400, %v1984, 0
      %v2072 = vsel %vm400, %v1985, 0
      %v2075 = vsel %vm400, %v1986, 0
      %v2078 = vsel %vm400, %v1987, 0
      %v2081 = vsel %vm400, %v1988, 0
      %v2084 = vsel %vm400, %v1989, 0
      %v2087 = vsel %vm400, %v1990, 0
      %v2090 = vsel %vm497, %v1992, 0
      %2092 = vmatprep.subr.mxu0 0.0
      %2093 = vmatpush1.msra.mxu0 0.0
      %2094 = vmatprep.subr.mxu0 0.0
      %2095 = vmatpush1.msra.mxu0 0.0
      %2096 = vmatprep.subr.mxu0 0.0
      %2097 = vmatpush1.msra.mxu0 0.0
      %2098 = vmatprep.subr.mxu0 0.0
      %2099 = vmatpush1.msra.mxu0 0.0
      %2100 = vmatprep.subr.mxu0 0.0
      %2101 = vmatpush1.msra.mxu0 0.0
      %2102 = vmatprep.subr.mxu0 0.0
      %2103 = vmatpush1.msra.mxu0 0.0
      %2104 = vmatprep.subr.mxu0 0.0
      %2105 = vmatpush1.msra.mxu0 0.0
      %2106 = vmatprep.subr.mxu0 0.0
      %2107 = vmatpush1.msra.mxu0 0.0
      %2108 = vmatprep.subr.mxu0 0.0
      %2109 = vmatpush1.msra.mxu0 0.0
      %2110 = vmatprep.subr.mxu0 0.0
      %2111 = vmatpush1.msra.mxu0 0.0
      %2112 = vmatprep.subr.mxu0 0.0
      %2113 = vmatpush1.msra.mxu0 0.0
      %2114 = vmatprep.subr.mxu0 0.0
      %2115 = vmatpush1.msra.mxu0 0.0
      %2116 = vmatprep.subr.mxu0 0.0
      %2117 = vmatpush1.msra.mxu0 0.0
      %2118 = vmatprep.subr.mxu0 0.0
      %2119 = vmatpush1.msra.mxu0 0.0
      %2120 = vmatprep.subr.mxu0 0.0
      %2121 = vmatpush1.msra.mxu0 0.0
      %2122 = vmatprep.subr.mxu0 0.0
      %2123 = vmatpush1.msra.mxu0 %v2090
      %2124 = vmatprep.subr.mxu0 0.0
      %2125 = vmatpush2.msra.mxu0 0.0
      %2126 = vmatprep.subr.mxu0 0.0
      %2127 = vmatpush2.msra.mxu0 0.0
      %2128 = vmatprep.subr.mxu0 0.0
      %2129 = vmatpush2.msra.mxu0 0.0
      %2130 = vmatprep.subr.mxu0 0.0
      %2131 = vmatpush2.msra.mxu0 0.0
      %2132 = vmatprep.subr.mxu0 0.0
      %2133 = vmatpush2.msra.mxu0 0.0
      %2134 = vmatprep.subr.mxu0 0.0
      %2135 = vmatpush2.msra.mxu0 0.0
      %2136 = vmatprep.subr.mxu0 0.0
      %2137 = vmatpush2.msra.mxu0 0.0
      %2138 = vmatprep.subr.mxu0 0.0
      %2139 = vmatpush2.msra.mxu0 0.0
      %2140 = vmatprep.subr.mxu0 0.0
      %2141 = vmatpush2.msra.mxu0 0.0
      %2142 = vmatprep.subr.mxu0 0.0
      %2143 = vmatpush2.msra.mxu0 0.0
      %2144 = vmatprep.subr.mxu0 0.0
      %2145 = vmatpush2.msra.mxu0 0.0
      %2146 = vmatprep.subr.mxu0 0.0
      %2147 = vmatpush2.msra.mxu0 0.0
      %2148 = vmatprep.subr.mxu0 0.0
      %2149 = vmatpush2.msra.mxu0 0.0
      %2150 = vmatprep.subr.mxu0 0.0
      %2151 = vmatpush2.msra.mxu0 0.0
      %2152 = vmatprep.subr.mxu0 0.0
      %2153 = vmatpush2.msra.mxu0 0.0
      %2154 = vmatprep.subr.mxu0 0.0
      %2155 = vmatpush2.msra.mxu0 0.0
      %2156 = vmatprep.mubr.f32.mxu0 0.0
      %2157 = vmatmul.mubr.f32.gmra.mxu0 %v1994
      %v2158 = vpop.f32.mrf.mxu0
      %v2159 = vadd.f32 0.0, %v2158
      %v2160 = vpop.f32.mrf.mxu0
      %2161 = vmatprep.mubr.f32.mxu0 0.0
      %2162 = vmatmul.mubr.f32.gmra.mxu0 %v1997
      %v2163 = vpop.f32.mrf.mxu0
      %v2164 = vadd.f32 0.0, %v2163
      %v2165 = vpop.f32.mrf.mxu0
      %2166 = vmatprep.mubr.f32.mxu0 0.0
      %2167 = vmatmul.mubr.f32.gmra.mxu0 %v2000
      %v2168 = vpop.f32.mrf.mxu0
      %v2169 = vadd.f32 0.0, %v2168
      %v2170 = vpop.f32.mrf.mxu0
      %2171 = vmatprep.mubr.f32.mxu0 0.0
      %2172 = vmatmul.mubr.f32.gmra.mxu0 %v2003
      %v2173 = vpop.f32.mrf.mxu0
      %v2174 = vadd.f32 0.0, %v2173
      %v2175 = vpop.f32.mrf.mxu0
      %2176 = vmatprep.mubr.f32.mxu0 0.0
      %2177 = vmatmul.mubr.f32.gmra.mxu0 %v2006
      %v2178 = vpop.f32.mrf.mxu0
      %v2179 = vadd.f32 0.0, %v2178
      %v2180 = vpop.f32.mrf.mxu0
      %2181 = vmatprep.mubr.f32.mxu0 0.0
      %2182 = vmatmul.mubr.f32.gmra.mxu0 %v2009
      %v2183 = vpop.f32.mrf.mxu0
      %v2184 = vadd.f32 0.0, %v2183
      %v2185 = vpop.f32.mrf.mxu0
      %2186 = vmatprep.mubr.f32.mxu0 0.0
      %2187 = vmatmul.mubr.f32.gmra.mxu0 %v2012
      %v2188 = vpop.f32.mrf.mxu0
      %v2189 = vadd.f32 0.0, %v2188
      %v2190 = vpop.f32.mrf.mxu0
      %2191 = vmatprep.mubr.f32.mxu0 0.0
      %2192 = vmatmul.mubr.f32.gmra.mxu0 %v2015
      %v2193 = vpop.f32.mrf.mxu0
      %v2194 = vadd.f32 0.0, %v2193
      %v2195 = vpop.f32.mrf.mxu0
      %2196 = vmatprep.mubr.f32.mxu0 0.0
      %2197 = vmatmul.mubr.f32.gmra.mxu0 %v2018
      %v2198 = vpop.f32.mrf.mxu0
      %v2199 = vadd.f32 0.0, %v2198
      %v2200 = vpop.f32.mrf.mxu0
      %2201 = vmatprep.mubr.f32.mxu0 0.0
      %2202 = vmatmul.mubr.f32.gmra.mxu0 %v2021
      %v2203 = vpop.f32.mrf.mxu0
      %v2204 = vadd.f32 0.0, %v2203
      %v2205 = vpop.f32.mrf.mxu0
      %2206 = vmatprep.mubr.f32.mxu0 0.0
      %2207 = vmatmul.mubr.f32.gmra.mxu0 %v2024
      %v2208 = vpop.f32.mrf.mxu0
      %v2209 = vadd.f32 0.0, %v2208
      %v2210 = vpop.f32.mrf.mxu0
      %2211 = vmatprep.mubr.f32.mxu0 0.0
      %2212 = vmatmul.mubr.f32.gmra.mxu0 %v2027
      %v2213 = vpop.f32.mrf.mxu0
      %v2214 = vadd.f32 0.0, %v2213
      %v2215 = vpop.f32.mrf.mxu0
      %2216 = vmatprep.mubr.f32.mxu0 0.0
      %2217 = vmatmul.mubr.f32.gmra.mxu0 %v2030
      %v2218 = vpop.f32.mrf.mxu0
      %v2219 = vadd.f32 0.0, %v2218
      %v2220 = vpop.f32.mrf.mxu0
      %2221 = vmatprep.mubr.f32.mxu0 0.0
      %2222 = vmatmul.mubr.f32.gmra.mxu0 %v2033
      %v2223 = vpop.f32.mrf.mxu0
      %v2224 = vadd.f32 0.0, %v2223
      %v2225 = vpop.f32.mrf.mxu0
      %2226 = vmatprep.mubr.f32.mxu0 0.0
      %2227 = vmatmul.mubr.f32.gmra.mxu0 %v2036
      %v2228 = vpop.f32.mrf.mxu0
      %v2229 = vadd.f32 0.0, %v2228
      %v2230 = vpop.f32.mrf.mxu0
      %2231 = vmatprep.mubr.f32.mxu0 0.0
      %2232 = vmatmul.mubr.f32.gmra.mxu0 %v2039
      %v2233 = vpop.f32.mrf.mxu0
      %v2234 = vadd.f32 0.0, %v2233
      %v2235 = vpop.f32.mrf.mxu0
      %2236 = vmatprep.mubr.f32.mxu0 0.0
      %2237 = vmatmul.mubr.f32.gmra.mxu0 %v2042
      %v2238 = vpop.f32.mrf.mxu0
      %v2239 = vadd.f32 0.0, %v2238
      %v2240 = vpop.f32.mrf.mxu0
      %2241 = vmatprep.mubr.f32.mxu0 0.0
      %2242 = vmatmul.mubr.f32.gmra.mxu0 %v2045
      %v2243 = vpop.f32.mrf.mxu0
      %v2244 = vadd.f32 0.0, %v2243
      %v2245 = vpop.f32.mrf.mxu0
      %2246 = vmatprep.mubr.f32.mxu0 0.0
      %2247 = vmatmul.mubr.f32.gmra.mxu0 %v2048
      %v2248 = vpop.f32.mrf.mxu0
      %v2249 = vadd.f32 0.0, %v2248
      %v2250 = vpop.f32.mrf.mxu0
      %2251 = vmatprep.mubr.f32.mxu0 0.0
      %2252 = vmatmul.mubr.f32.gmra.mxu0 %v2051
      %v2253 = vpop.f32.mrf.mxu0
      %v2254 = vadd.f32 0.0, %v2253
      %v2255 = vpop.f32.mrf.mxu0
      %2256 = vmatprep.mubr.f32.mxu0 0.0
      %2257 = vmatmul.mubr.f32.gmra.mxu0 %v2054
      %v2258 = vpop.f32.mrf.mxu0
      %v2259 = vadd.f32 0.0, %v2258
      %v2260 = vpop.f32.mrf.mxu0
      %2261 = vmatprep.mubr.f32.mxu0 0.0
      %2262 = vmatmul.mubr.f32.gmra.mxu0 %v2057
      %v2263 = vpop.f32.mrf.mxu0
      %v2264 = vadd.f32 0.0, %v2263
      %v2265 = vpop.f32.mrf.mxu0
      %2266 = vmatprep.mubr.f32.mxu0 0.0
      %2267 = vmatmul.mubr.f32.gmra.mxu0 %v2060
      %v2268 = vpop.f32.mrf.mxu0
      %v2269 = vadd.f32 0.0, %v2268
      %v2270 = vpop.f32.mrf.mxu0
      %2271 = vmatprep.mubr.f32.mxu0 0.0
      %2272 = vmatmul.mubr.f32.gmra.mxu0 %v2063
      %v2273 = vpop.f32.mrf.mxu0
      %v2274 = vadd.f32 0.0, %v2273
      %v2275 = vpop.f32.mrf.mxu0
      %2276 = vmatprep.mubr.f32.mxu0 0.0
      %2277 = vmatmul.mubr.f32.gmra.mxu0 %v2066
      %v2278 = vpop.f32.mrf.mxu0
      %v2279 = vadd.f32 0.0, %v2278
      %v2280 = vpop.f32.mrf.mxu0
      %2281 = vmatprep.mubr.f32.mxu0 0.0
      %2282 = vmatmul.mubr.f32.gmra.mxu0 %v2069
      %v2283 = vpop.f32.mrf.mxu0
      %v2284 = vadd.f32 0.0, %v2283
      %v2285 = vpop.f32.mrf.mxu0
      %2286 = vmatprep.mubr.f32.mxu0 0.0
      %2287 = vmatmul.mubr.f32.gmra.mxu0 %v2072
      %v2288 = vpop.f32.mrf.mxu0
      %v2289 = vadd.f32 0.0, %v2288
      %v2290 = vpop.f32.mrf.mxu0
      %2291 = vmatprep.mubr.f32.mxu0 0.0
      %2292 = vmatmul.mubr.f32.gmra.mxu0 %v2075
      %v2293 = vpop.f32.mrf.mxu0
      %v2294 = vadd.f32 0.0, %v2293
      %v2295 = vpop.f32.mrf.mxu0
      %2296 = vmatprep.mubr.f32.mxu0 0.0
      %2297 = vmatmul.mubr.f32.gmra.mxu0 %v2078
      %v2298 = vpop.f32.mrf.mxu0
      %v2299 = vadd.f32 0.0, %v2298
      %v2300 = vpop.f32.mrf.mxu0
      %2301 = vmatprep.mubr.f32.mxu0 0.0
      %2302 = vmatmul.mubr.f32.gmra.mxu0 %v2081
      %v2303 = vpop.f32.mrf.mxu0
      %v2304 = vadd.f32 0.0, %v2303
      %v2305 = vpop.f32.mrf.mxu0
      %2306 = vmatprep.mubr.f32.mxu0 0.0
      %2307 = vmatmul.mubr.f32.gmra.mxu0 %v2084
      %v2308 = vpop.f32.mrf.mxu0
      %v2309 = vadd.f32 0.0, %v2308
      %v2310 = vpop.f32.mrf.mxu0
      %2311 = vmatprep.mubr.f32.mxu0 0.0
      %2312 = vmatmul.mubr.f32.gmra.mxu0 %v2087
      %v2313 = vpop.f32.mrf.mxu0
      %v2314 = vadd.f32 0.0, %v2313
      %v2315 = vpop.f32.mrf.mxu0
      %2316 = vdwg.mxu0
      %v2317 = vadd.f32 %v1609, %v2159
      %v2318 = vadd.f32 %v1614, %v2164
      %v2319 = vadd.f32 %v1619, %v2169
      %v2320 = vadd.f32 %v1624, %v2174
      %v2321 = vadd.f32 %v1629, %v2179
      %v2322 = vadd.f32 %v1634, %v2184
      %v2323 = vadd.f32 %v1639, %v2189
      %v2324 = vadd.f32 %v1644, %v2194
      %v2325 = vadd.f32 %v1649, %v2199
      %v2326 = vadd.f32 %v1654, %v2204
      %v2327 = vadd.f32 %v1659, %v2209
      %v2328 = vadd.f32 %v1664, %v2214
      %v2329 = vadd.f32 %v1669, %v2219
      %v2330 = vadd.f32 %v1674, %v2224
      %v2331 = vadd.f32 %v1679, %v2229
      %v2332 = vadd.f32 %v1684, %v2234
      %v2333 = vadd.f32 %v1689, %v2239
      %v2334 = vadd.f32 %v1694, %v2244
      %v2335 = vadd.f32 %v1699, %v2249
      %v2336 = vadd.f32 %v1704, %v2254
      %v2337 = vadd.f32 %v1709, %v2259
      %v2338 = vadd.f32 %v1714, %v2264
      %v2339 = vadd.f32 %v1719, %v2269
      %v2340 = vadd.f32 %v1724, %v2274
      %v2341 = vadd.f32 %v1729, %v2279
      %v2342 = vadd.f32 %v1734, %v2284
      %v2343 = vadd.f32 %v1739, %v2289
      %v2344 = vadd.f32 %v1744, %v2294
      %v2345 = vadd.f32 %v1749, %v2299
      %v2346 = vadd.f32 %v1754, %v2304
      %v2347 = vadd.f32 %v1759, %v2309
      %v2348 = vadd.f32 %v1764, %v2314
      %v2349 = vld [vmem:[#allocation2 + $0x17] sm:$0xff]
      %v2350 = vld [vmem:[#allocation2 + $0x1f] sm:$0xff]
      %v2351 = vld [vmem:[#allocation2 + $0x27] sm:$0xff]
      %v2352 = vld [vmem:[#allocation2 + $0x2f] sm:$0xff]
      %v2353 = vld [vmem:[#allocation2 + $0x37] sm:$0xff]
      %v2354 = vld [vmem:[#allocation2 + $0x3f] sm:$0xff]
      %v2355 = vld [vmem:[#allocation2 + $0x47] sm:$0xff]
      %v2356 = vld [vmem:[#allocation2 + $0x4f] sm:$0xff]
      %v2357 = vld [vmem:[#allocation2 + $0x57] sm:$0xff]
      %v2358 = vld [vmem:[#allocation2 + $0x5f] sm:$0xff]
      %v2359 = vld [vmem:[#allocation2 + $0x67] sm:$0xff]
      %v2360 = vld [vmem:[#allocation2 + $0x6f] sm:$0xff]
      %v2361 = vld [vmem:[#allocation2 + $0x77] sm:$0xff]
      %v2362 = vld [vmem:[#allocation2 + $0x7f] sm:$0xff]
      %v2363 = vld [vmem:[#allocation2 + $0x87] sm:$0xff]
      %v2364 = vld [vmem:[#allocation2 + $0x8f] sm:$0xff]
      %v2365 = vld [vmem:[#allocation2 + $0x97] sm:$0xff]
      %v2366 = vld [vmem:[#allocation2 + $0x9f] sm:$0xff]
      %v2367 = vld [vmem:[#allocation2 + $0xa7] sm:$0xff]
      %v2368 = vld [vmem:[#allocation2 + $0xaf] sm:$0xff]
      %v2369 = vld [vmem:[#allocation2 + $0xb7] sm:$0xff]
      %v2370 = vld [vmem:[#allocation2 + $0xbf] sm:$0xff]
      %v2371 = vld [vmem:[#allocation2 + $0xc7] sm:$0xff]
      %v2372 = vld [vmem:[#allocation2 + $0xcf] sm:$0xff]
      %v2373 = vld [vmem:[#allocation2 + $0xd7] sm:$0xff]
      %v2374 = vld [vmem:[#allocation2 + $0xdf] sm:$0xff]
      %v2375 = vld [vmem:[#allocation2 + $0xe7] sm:$0xff]
      %v2376 = vld [vmem:[#allocation2 + $0xef] sm:$0xff]
      %v2377 = vld [vmem:[#allocation2 + $0xf7] sm:$0xff]
      %v2378 = vld [vmem:[#allocation2 + $0xff] sm:$0xff]
      %v2379 = vld [vmem:[#allocation2 + $0x107] sm:$0xff]
      %v2380 = vld [vmem:[#allocation2 + $0x10f] sm:$0xff]
      %v2381 = vmul.f32 %v2349, %v895
      %v2382 = vmul.f32 %v2350, %v900
      %v2383 = vmul.f32 %v2351, %v905
      %v2384 = vmul.f32 %v2352, %v910
      %v2385 = vmul.f32 %v2353, %v915
      %v2386 = vmul.f32 %v2354, %v920
      %v2387 = vmul.f32 %v2355, %v925
      %v2388 = vmul.f32 %v2356, %v930
      %v2389 = vmul.f32 %v2357, %v935
      %v2390 = vmul.f32 %v2358, %v940
      %v2391 = vmul.f32 %v2359, %v945
      %v2392 = vmul.f32 %v2360, %v950
      %v2393 = vmul.f32 %v2361, %v955
      %v2394 = vmul.f32 %v2362, %v960
      %v2395 = vmul.f32 %v2363, %v965
      %v2396 = vmul.f32 %v2364, %v970
      %v2397 = vmul.f32 %v2365, %v975
      %v2398 = vmul.f32 %v2366, %v980
      %v2399 = vmul.f32 %v2367, %v985
      %v2400 = vmul.f32 %v2368, %v990
      %v2401 = vmul.f32 %v2369, %v995
      %v2402 = vmul.f32 %v2370, %v1000
      %v2403 = vmul.f32 %v2371, %v1005
      %v2404 = vmul.f32 %v2372, %v1010
      %v2405 = vmul.f32 %v2373, %v1015
      %v2406 = vmul.f32 %v2374, %v1020
      %v2407 = vmul.f32 %v2375, %v1025
      %v2408 = vmul.f32 %v2376, %v1030
      %v2409 = vmul.f32 %v2377, %v1035
      %v2410 = vmul.f32 %v2378, %v1040
      %v2411 = vmul.f32 %v2379, %v1045
      %v2412 = vmul.f32 %v2380, %v1050
      %s2413 = scalar_lea.vmem %s5, 12
      %v2414 = vld [vmem:[%s2413] sm:$0xf]
      %v2416 = vsel %vm400, %v2381, 0
      %v2419 = vsel %vm400, %v2382, 0
      %v2422 = vsel %vm400, %v2383, 0
      %v2425 = vsel %vm400, %v2384, 0
      %v2428 = vsel %vm400, %v2385, 0
      %v2431 = vsel %vm400, %v2386, 0
      %v2434 = vsel %vm400, %v2387, 0
      %v2437 = vsel %vm400, %v2388, 0
      %v2440 = vsel %vm400, %v2389, 0
      %v2443 = vsel %vm400, %v2390, 0
      %v2446 = vsel %vm400, %v2391, 0
      %v2449 = vsel %vm400, %v2392, 0
      %v2452 = vsel %vm400, %v2393, 0
      %v2455 = vsel %vm400, %v2394, 0
      %v2458 = vsel %vm400, %v2395, 0
      %v2461 = vsel %vm400, %v2396, 0
      %v2464 = vsel %vm400, %v2397, 0
      %v2467 = vsel %vm400, %v2398, 0
      %v2470 = vsel %vm400, %v2399, 0
      %v2473 = vsel %vm400, %v2400, 0
      %v2476 = vsel %vm400, %v2401, 0
      %v2479 = vsel %vm400, %v2402, 0
      %v2482 = vsel %vm400, %v2403, 0
      %v2485 = vsel %vm400, %v2404, 0
      %v2488 = vsel %vm400, %v2405, 0
      %v2491 = vsel %vm400, %v2406, 0
      %v2494 = vsel %vm400, %v2407, 0
      %v2497 = vsel %vm400, %v2408, 0
      %v2500 = vsel %vm400, %v2409, 0
      %v2503 = vsel %vm400, %v2410, 0
      %v2506 = vsel %vm400, %v2411, 0
      %v2509 = vsel %vm400, %v2412, 0
      %v2512 = vsel %vm497, %v2414, 0
      %2514 = vmatprep.subr.mxu0 0.0
      %2515 = vmatpush1.msra.mxu0 0.0
      %2516 = vmatprep.subr.mxu0 0.0
      %2517 = vmatpush1.msra.mxu0 0.0
      %2518 = vmatprep.subr.mxu0 0.0
      %2519 = vmatpush1.msra.mxu0 0.0
      %2520 = vmatprep.subr.mxu0 0.0
      %2521 = vmatpush1.msra.mxu0 0.0
      %2522 = vmatprep.subr.mxu0 0.0
      %2523 = vmatpush1.msra.mxu0 0.0
      %2524 = vmatprep.subr.mxu0 0.0
      %2525 = vmatpush1.msra.mxu0 0.0
      %2526 = vmatprep.subr.mxu0 0.0
      %2527 = vmatpush1.msra.mxu0 0.0
      %2528 = vmatprep.subr.mxu0 0.0
      %2529 = vmatpush1.msra.mxu0 0.0
      %2530 = vmatprep.subr.mxu0 0.0
      %2531 = vmatpush1.msra.mxu0 0.0
      %2532 = vmatprep.subr.mxu0 0.0
      %2533 = vmatpush1.msra.mxu0 0.0
      %2534 = vmatprep.subr.mxu0 0.0
      %2535 = vmatpush1.msra.mxu0 0.0
      %2536 = vmatprep.subr.mxu0 0.0
      %2537 = vmatpush1.msra.mxu0 0.0
      %2538 = vmatprep.subr.mxu0 0.0
      %2539 = vmatpush1.msra.mxu0 0.0
      %2540 = vmatprep.subr.mxu0 0.0
      %2541 = vmatpush1.msra.mxu0 0.0
      %2542 = vmatprep.subr.mxu0 0.0
      %2543 = vmatpush1.msra.mxu0 0.0
      %2544 = vmatprep.subr.mxu0 0.0
      %2545 = vmatpush1.msra.mxu0 %v2512
      %2546 = vmatprep.subr.mxu0 0.0
      %2547 = vmatpush2.msra.mxu0 0.0
      %2548 = vmatprep.subr.mxu0 0.0
      %2549 = vmatpush2.msra.mxu0 0.0
      %2550 = vmatprep.subr.mxu0 0.0
      %2551 = vmatpush2.msra.mxu0 0.0
      %2552 = vmatprep.subr.mxu0 0.0
      %2553 = vmatpush2.msra.mxu0 0.0
      %2554 = vmatprep.subr.mxu0 0.0
      %2555 = vmatpush2.msra.mxu0 0.0
      %2556 = vmatprep.subr.mxu0 0.0
      %2557 = vmatpush2.msra.mxu0 0.0
      %2558 = vmatprep.subr.mxu0 0.0
      %2559 = vmatpush2.msra.mxu0 0.0
      %2560 = vmatprep.subr.mxu0 0.0
      %2561 = vmatpush2.msra.mxu0 0.0
      %2562 = vmatprep.subr.mxu0 0.0
      %2563 = vmatpush2.msra.mxu0 0.0
      %2564 = vmatprep.subr.mxu0 0.0
      %2565 = vmatpush2.msra.mxu0 0.0
      %2566 = vmatprep.subr.mxu0 0.0
      %2567 = vmatpush2.msra.mxu0 0.0
      %2568 = vmatprep.subr.mxu0 0.0
      %2569 = vmatpush2.msra.mxu0 0.0
      %2570 = vmatprep.subr.mxu0 0.0
      %2571 = vmatpush2.msra.mxu0 0.0
      %2572 = vmatprep.subr.mxu0 0.0
      %2573 = vmatpush2.msra.mxu0 0.0
      %2574 = vmatprep.subr.mxu0 0.0
      %2575 = vmatpush2.msra.mxu0 0.0
      %2576 = vmatprep.subr.mxu0 0.0
      %2577 = vmatpush2.msra.mxu0 0.0
      %2578 = vmatprep.mubr.f32.mxu0 0.0
      %2579 = vmatmul.mubr.f32.gmra.mxu0 %v2416
      %v2580 = vpop.f32.mrf.mxu0
      %v2581 = vadd.f32 0.0, %v2580
      %v2582 = vpop.f32.mrf.mxu0
      %2583 = vmatprep.mubr.f32.mxu0 0.0
      %2584 = vmatmul.mubr.f32.gmra.mxu0 %v2419
      %v2585 = vpop.f32.mrf.mxu0
      %v2586 = vadd.f32 0.0, %v2585
      %v2587 = vpop.f32.mrf.mxu0
      %2588 = vmatprep.mubr.f32.mxu0 0.0
      %2589 = vmatmul.mubr.f32.gmra.mxu0 %v2422
      %v2590 = vpop.f32.mrf.mxu0
      %v2591 = vadd.f32 0.0, %v2590
      %v2592 = vpop.f32.mrf.mxu0
      %2593 = vmatprep.mubr.f32.mxu0 0.0
      %2594 = vmatmul.mubr.f32.gmra.mxu0 %v2425
      %v2595 = vpop.f32.mrf.mxu0
      %v2596 = vadd.f32 0.0, %v2595
      %v2597 = vpop.f32.mrf.mxu0
      %2598 = vmatprep.mubr.f32.mxu0 0.0
      %2599 = vmatmul.mubr.f32.gmra.mxu0 %v2428
      %v2600 = vpop.f32.mrf.mxu0
      %v2601 = vadd.f32 0.0, %v2600
      %v2602 = vpop.f32.mrf.mxu0
      %2603 = vmatprep.mubr.f32.mxu0 0.0
      %2604 = vmatmul.mubr.f32.gmra.mxu0 %v2431
      %v2605 = vpop.f32.mrf.mxu0
      %v2606 = vadd.f32 0.0, %v2605
      %v2607 = vpop.f32.mrf.mxu0
      %2608 = vmatprep.mubr.f32.mxu0 0.0
      %2609 = vmatmul.mubr.f32.gmra.mxu0 %v2434
      %v2610 = vpop.f32.mrf.mxu0
      %v2611 = vadd.f32 0.0, %v2610
      %v2612 = vpop.f32.mrf.mxu0
      %2613 = vmatprep.mubr.f32.mxu0 0.0
      %2614 = vmatmul.mubr.f32.gmra.mxu0 %v2437
      %v2615 = vpop.f32.mrf.mxu0
      %v2616 = vadd.f32 0.0, %v2615
      %v2617 = vpop.f32.mrf.mxu0
      %2618 = vmatprep.mubr.f32.mxu0 0.0
      %2619 = vmatmul.mubr.f32.gmra.mxu0 %v2440
      %v2620 = vpop.f32.mrf.mxu0
      %v2621 = vadd.f32 0.0, %v2620
      %v2622 = vpop.f32.mrf.mxu0
      %2623 = vmatprep.mubr.f32.mxu0 0.0
      %2624 = vmatmul.mubr.f32.gmra.mxu0 %v2443
      %v2625 = vpop.f32.mrf.mxu0
      %v2626 = vadd.f32 0.0, %v2625
      %v2627 = vpop.f32.mrf.mxu0
      %2628 = vmatprep.mubr.f32.mxu0 0.0
      %2629 = vmatmul.mubr.f32.gmra.mxu0 %v2446
      %v2630 = vpop.f32.mrf.mxu0
      %v2631 = vadd.f32 0.0, %v2630
      %v2632 = vpop.f32.mrf.mxu0
      %2633 = vmatprep.mubr.f32.mxu0 0.0
      %2634 = vmatmul.mubr.f32.gmra.mxu0 %v2449
      %v2635 = vpop.f32.mrf.mxu0
      %v2636 = vadd.f32 0.0, %v2635
      %v2637 = vpop.f32.mrf.mxu0
      %2638 = vmatprep.mubr.f32.mxu0 0.0
      %2639 = vmatmul.mubr.f32.gmra.mxu0 %v2452
      %v2640 = vpop.f32.mrf.mxu0
      %v2641 = vadd.f32 0.0, %v2640
      %v2642 = vpop.f32.mrf.mxu0
      %2643 = vmatprep.mubr.f32.mxu0 0.0
      %2644 = vmatmul.mubr.f32.gmra.mxu0 %v2455
      %v2645 = vpop.f32.mrf.mxu0
      %v2646 = vadd.f32 0.0, %v2645
      %v2647 = vpop.f32.mrf.mxu0
      %2648 = vmatprep.mubr.f32.mxu0 0.0
      %2649 = vmatmul.mubr.f32.gmra.mxu0 %v2458
      %v2650 = vpop.f32.mrf.mxu0
      %v2651 = vadd.f32 0.0, %v2650
      %v2652 = vpop.f32.mrf.mxu0
      %2653 = vmatprep.mubr.f32.mxu0 0.0
      %2654 = vmatmul.mubr.f32.gmra.mxu0 %v2461
      %v2655 = vpop.f32.mrf.mxu0
      %v2656 = vadd.f32 0.0, %v2655
      %v2657 = vpop.f32.mrf.mxu0
      %2658 = vmatprep.mubr.f32.mxu0 0.0
      %2659 = vmatmul.mubr.f32.gmra.mxu0 %v2464
      %v2660 = vpop.f32.mrf.mxu0
      %v2661 = vadd.f32 0.0, %v2660
      %v2662 = vpop.f32.mrf.mxu0
      %2663 = vmatprep.mubr.f32.mxu0 0.0
      %2664 = vmatmul.mubr.f32.gmra.mxu0 %v2467
      %v2665 = vpop.f32.mrf.mxu0
      %v2666 = vadd.f32 0.0, %v2665
      %v2667 = vpop.f32.mrf.mxu0
      %2668 = vmatprep.mubr.f32.mxu0 0.0
      %2669 = vmatmul.mubr.f32.gmra.mxu0 %v2470
      %v2670 = vpop.f32.mrf.mxu0
      %v2671 = vadd.f32 0.0, %v2670
      %v2672 = vpop.f32.mrf.mxu0
      %2673 = vmatprep.mubr.f32.mxu0 0.0
      %2674 = vmatmul.mubr.f32.gmra.mxu0 %v2473
      %v2675 = vpop.f32.mrf.mxu0
      %v2676 = vadd.f32 0.0, %v2675
      %v2677 = vpop.f32.mrf.mxu0
      %2678 = vmatprep.mubr.f32.mxu0 0.0
      %2679 = vmatmul.mubr.f32.gmra.mxu0 %v2476
      %v2680 = vpop.f32.mrf.mxu0
      %v2681 = vadd.f32 0.0, %v2680
      %v2682 = vpop.f32.mrf.mxu0
      %2683 = vmatprep.mubr.f32.mxu0 0.0
      %2684 = vmatmul.mubr.f32.gmra.mxu0 %v2479
      %v2685 = vpop.f32.mrf.mxu0
      %v2686 = vadd.f32 0.0, %v2685
      %v2687 = vpop.f32.mrf.mxu0
      %2688 = vmatprep.mubr.f32.mxu0 0.0
      %2689 = vmatmul.mubr.f32.gmra.mxu0 %v2482
      %v2690 = vpop.f32.mrf.mxu0
      %v2691 = vadd.f32 0.0, %v2690
      %v2692 = vpop.f32.mrf.mxu0
      %2693 = vmatprep.mubr.f32.mxu0 0.0
      %2694 = vmatmul.mubr.f32.gmra.mxu0 %v2485
      %v2695 = vpop.f32.mrf.mxu0
      %v2696 = vadd.f32 0.0, %v2695
      %v2697 = vpop.f32.mrf.mxu0
      %2698 = vmatprep.mubr.f32.mxu0 0.0
      %2699 = vmatmul.mubr.f32.gmra.mxu0 %v2488
      %v2700 = vpop.f32.mrf.mxu0
      %v2701 = vadd.f32 0.0, %v2700
      %v2702 = vpop.f32.mrf.mxu0
      %2703 = vmatprep.mubr.f32.mxu0 0.0
      %2704 = vmatmul.mubr.f32.gmra.mxu0 %v2491
      %v2705 = vpop.f32.mrf.mxu0
      %v2706 = vadd.f32 0.0, %v2705
      %v2707 = vpop.f32.mrf.mxu0
      %2708 = vmatprep.mubr.f32.mxu0 0.0
      %2709 = vmatmul.mubr.f32.gmra.mxu0 %v2494
      %v2710 = vpop.f32.mrf.mxu0
      %v2711 = vadd.f32 0.0, %v2710
      %v2712 = vpop.f32.mrf.mxu0
      %2713 = vmatprep.mubr.f32.mxu0 0.0
      %2714 = vmatmul.mubr.f32.gmra.mxu0 %v2497
      %v2715 = vpop.f32.mrf.mxu0
      %v2716 = vadd.f32 0.0, %v2715
      %v2717 = vpop.f32.mrf.mxu0
      %2718 = vmatprep.mubr.f32.mxu0 0.0
      %2719 = vmatmul.mubr.f32.gmra.mxu0 %v2500
      %v2720 = vpop.f32.mrf.mxu0
      %v2721 = vadd.f32 0.0, %v2720
      %v2722 = vpop.f32.mrf.mxu0
      %2723 = vmatprep.mubr.f32.mxu0 0.0
      %2724 = vmatmul.mubr.f32.gmra.mxu0 %v2503
      %v2725 = vpop.f32.mrf.mxu0
      %v2726 = vadd.f32 0.0, %v2725
      %v2727 = vpop.f32.mrf.mxu0
      %2728 = vmatprep.mubr.f32.mxu0 0.0
      %2729 = vmatmul.mubr.f32.gmra.mxu0 %v2506
      %v2730 = vpop.f32.mrf.mxu0
      %v2731 = vadd.f32 0.0, %v2730
      %v2732 = vpop.f32.mrf.mxu0
      %2733 = vmatprep.mubr.f32.mxu0 0.0
      %2734 = vmatmul.mubr.f32.gmra.mxu0 %v2509
      %v2735 = vpop.f32.mrf.mxu0
      %v2736 = vadd.f32 0.0, %v2735
      %v2737 = vpop.f32.mrf.mxu0
      %2738 = vdwg.mxu0
      %v2739 = vadd.f32 %v2317, %v2581
      %v2740 = vadd.f32 %v2318, %v2586
      %v2741 = vadd.f32 %v2319, %v2591
      %v2742 = vadd.f32 %v2320, %v2596
      %v2743 = vadd.f32 %v2321, %v2601
      %v2744 = vadd.f32 %v2322, %v2606
      %v2745 = vadd.f32 %v2323, %v2611
      %v2746 = vadd.f32 %v2324, %v2616
      %v2747 = vadd.f32 %v2325, %v2621
      %v2748 = vadd.f32 %v2326, %v2626
      %v2749 = vadd.f32 %v2327, %v2631
      %v2750 = vadd.f32 %v2328, %v2636
      %v2751 = vadd.f32 %v2329, %v2641
      %v2752 = vadd.f32 %v2330, %v2646
      %v2753 = vadd.f32 %v2331, %v2651
      %v2754 = vadd.f32 %v2332, %v2656
      %v2755 = vadd.f32 %v2333, %v2661
      %v2756 = vadd.f32 %v2334, %v2666
      %v2757 = vadd.f32 %v2335, %v2671
      %v2758 = vadd.f32 %v2336, %v2676
      %v2759 = vadd.f32 %v2337, %v2681
      %v2760 = vadd.f32 %v2338, %v2686
      %v2761 = vadd.f32 %v2339, %v2691
      %v2762 = vadd.f32 %v2340, %v2696
      %v2763 = vadd.f32 %v2341, %v2701
      %v2764 = vadd.f32 %v2342, %v2706
      %v2765 = vadd.f32 %v2343, %v2711
      %v2766 = vadd.f32 %v2344, %v2716
      %v2767 = vadd.f32 %v2345, %v2721
      %v2768 = vadd.f32 %v2346, %v2726
      %v2769 = vadd.f32 %v2347, %v2731
      %v2770 = vadd.f32 %v2348, %v2736
      %v2771 = vld [vmem:[#allocation2 + $0x18] sm:$0xff]
      %v2772 = vld [vmem:[#allocation2 + $0x20] sm:$0xff]
      %v2773 = vld [vmem:[#allocation2 + $0x28] sm:$0xff]
      %v2774 = vld [vmem:[#allocation2 + $0x30] sm:$0xff]
      %v2775 = vld [vmem:[#allocation2 + $0x38] sm:$0xff]
      %v2776 = vld [vmem:[#allocation2 + $0x40] sm:$0xff]
      %v2777 = vld [vmem:[#allocation2 + $0x48] sm:$0xff]
      %v2778 = vld [vmem:[#allocation2 + $0x50] sm:$0xff]
      %v2779 = vld [vmem:[#allocation2 + $0x58] sm:$0xff]
      %v2780 = vld [vmem:[#allocation2 + $0x60] sm:$0xff]
      %v2781 = vld [vmem:[#allocation2 + $0x68] sm:$0xff]
      %v2782 = vld [vmem:[#allocation2 + $0x70] sm:$0xff]
      %v2783 = vld [vmem:[#allocation2 + $0x78] sm:$0xff]
      %v2784 = vld [vmem:[#allocation2 + $0x80] sm:$0xff]
      %v2785 = vld [vmem:[#allocation2 + $0x88] sm:$0xff]
      %v2786 = vld [vmem:[#allocation2 + $0x90] sm:$0xff]
      %v2787 = vld [vmem:[#allocation2 + $0x98] sm:$0xff]
      %v2788 = vld [vmem:[#allocation2 + $0xa0] sm:$0xff]
      %v2789 = vld [vmem:[#allocation2 + $0xa8] sm:$0xff]
      %v2790 = vld [vmem:[#allocation2 + $0xb0] sm:$0xff]
      %v2791 = vld [vmem:[#allocation2 + $0xb8] sm:$0xff]
      %v2792 = vld [vmem:[#allocation2 + $0xc0] sm:$0xff]
      %v2793 = vld [vmem:[#allocation2 + $0xc8] sm:$0xff]
      %v2794 = vld [vmem:[#allocation2 + $0xd0] sm:$0xff]
      %v2795 = vld [vmem:[#allocation2 + $0xd8] sm:$0xff]
      %v2796 = vld [vmem:[#allocation2 + $0xe0] sm:$0xff]
      %v2797 = vld [vmem:[#allocation2 + $0xe8] sm:$0xff]
      %v2798 = vld [vmem:[#allocation2 + $0xf0] sm:$0xff]
      %v2799 = vld [vmem:[#allocation2 + $0xf8] sm:$0xff]
      %v2800 = vld [vmem:[#allocation2 + $0x100] sm:$0xff]
      %v2801 = vld [vmem:[#allocation2 + $0x108] sm:$0xff]
      %v2802 = vld [vmem:[#allocation2 + $0x110] sm:$0xff]
      %s2803 = scalar_lea.vmem %s5, 16
      %v2804 = vld [vmem:[%s2803] sm:$0xf]
      %v2806 = vsel %vm400, %v2771, 0
      %v2809 = vsel %vm400, %v2772, 0
      %v2812 = vsel %vm400, %v2773, 0
      %v2815 = vsel %vm400, %v2774, 0
      %v2818 = vsel %vm400, %v2775, 0
      %v2821 = vsel %vm400, %v2776, 0
      %v2824 = vsel %vm400, %v2777, 0
      %v2827 = vsel %vm400, %v2778, 0
      %v2830 = vsel %vm400, %v2779, 0
      %v2833 = vsel %vm400, %v2780, 0
      %v2836 = vsel %vm400, %v2781, 0
      %v2839 = vsel %vm400, %v2782, 0
      %v2842 = vsel %vm400, %v2783, 0
      %v2845 = vsel %vm400, %v2784, 0
      %v2848 = vsel %vm400, %v2785, 0
      %v2851 = vsel %vm400, %v2786, 0
      %v2854 = vsel %vm400, %v2787, 0
      %v2857 = vsel %vm400, %v2788, 0
      %v2860 = vsel %vm400, %v2789, 0
      %v2863 = vsel %vm400, %v2790, 0
      %v2866 = vsel %vm400, %v2791, 0
      %v2869 = vsel %vm400, %v2792, 0
      %v2872 = vsel %vm400, %v2793, 0
      %v2875 = vsel %vm400, %v2794, 0
      %v2878 = vsel %vm400, %v2795, 0
      %v2881 = vsel %vm400, %v2796, 0
      %v2884 = vsel %vm400, %v2797, 0
      %v2887 = vsel %vm400, %v2798, 0
      %v2890 = vsel %vm400, %v2799, 0
      %v2893 = vsel %vm400, %v2800, 0
      %v2896 = vsel %vm400, %v2801, 0
      %v2899 = vsel %vm400, %v2802, 0
      %v2902 = vsel %vm497, %v2804, 0
      %2904 = vmatprep.subr.mxu0 0.0
      %2905 = vmatpush1.msra.mxu0 0.0
      %2906 = vmatprep.subr.mxu0 0.0
      %2907 = vmatpush1.msra.mxu0 0.0
      %2908 = vmatprep.subr.mxu0 0.0
      %2909 = vmatpush1.msra.mxu0 0.0
      %2910 = vmatprep.subr.mxu0 0.0
      %2911 = vmatpush1.msra.mxu0 0.0
      %2912 = vmatprep.subr.mxu0 0.0
      %2913 = vmatpush1.msra.mxu0 0.0
      %2914 = vmatprep.subr.mxu0 0.0
      %2915 = vmatpush1.msra.mxu0 0.0
      %2916 = vmatprep.subr.mxu0 0.0
      %2917 = vmatpush1.msra.mxu0 0.0
      %2918 = vmatprep.subr.mxu0 0.0
      %2919 = vmatpush1.msra.mxu0 0.0
      %2920 = vmatprep.subr.mxu0 0.0
      %2921 = vmatpush1.msra.mxu0 0.0
      %2922 = vmatprep.subr.mxu0 0.0
      %2923 = vmatpush1.msra.mxu0 0.0
      %2924 = vmatprep.subr.mxu0 0.0
      %2925 = vmatpush1.msra.mxu0 0.0
      %2926 = vmatprep.subr.mxu0 0.0
      %2927 = vmatpush1.msra.mxu0 0.0
      %2928 = vmatprep.subr.mxu0 0.0
      %2929 = vmatpush1.msra.mxu0 0.0
      %2930 = vmatprep.subr.mxu0 0.0
      %2931 = vmatpush1.msra.mxu0 0.0
      %2932 = vmatprep.subr.mxu0 0.0
      %2933 = vmatpush1.msra.mxu0 0.0
      %2934 = vmatprep.subr.mxu0 0.0
      %2935 = vmatpush1.msra.mxu0 %v2902
      %2936 = vmatprep.subr.mxu0 0.0
      %2937 = vmatpush2.msra.mxu0 0.0
      %2938 = vmatprep.subr.mxu0 0.0
      %2939 = vmatpush2.msra.mxu0 0.0
      %2940 = vmatprep.subr.mxu0 0.0
      %2941 = vmatpush2.msra.mxu0 0.0
      %2942 = vmatprep.subr.mxu0 0.0
      %2943 = vmatpush2.msra.mxu0 0.0
      %2944 = vmatprep.subr.mxu0 0.0
      %2945 = vmatpush2.msra.mxu0 0.0
      %2946 = vmatprep.subr.mxu0 0.0
      %2947 = vmatpush2.msra.mxu0 0.0
      %2948 = vmatprep.subr.mxu0 0.0
      %2949 = vmatpush2.msra.mxu0 0.0
      %2950 = vmatprep.subr.mxu0 0.0
      %2951 = vmatpush2.msra.mxu0 0.0
      %2952 = vmatprep.subr.mxu0 0.0
      %2953 = vmatpush2.msra.mxu0 0.0
      %2954 = vmatprep.subr.mxu0 0.0
      %2955 = vmatpush2.msra.mxu0 0.0
      %2956 = vmatprep.subr.mxu0 0.0
      %2957 = vmatpush2.msra.mxu0 0.0
      %2958 = vmatprep.subr.mxu0 0.0
      %2959 = vmatpush2.msra.mxu0 0.0
      %2960 = vmatprep.subr.mxu0 0.0
      %2961 = vmatpush2.msra.mxu0 0.0
      %2962 = vmatprep.subr.mxu0 0.0
      %2963 = vmatpush2.msra.mxu0 0.0
      %2964 = vmatprep.subr.mxu0 0.0
      %2965 = vmatpush2.msra.mxu0 0.0
      %2966 = vmatprep.subr.mxu0 0.0
      %2967 = vmatpush2.msra.mxu0 0.0
      %2968 = vmatprep.mubr.f32.mxu0 0.0
      %2969 = vmatmul.mubr.f32.gmra.mxu0 %v2806
      %v2970 = vpop.f32.mrf.mxu0
      %v2971 = vadd.f32 0.0, %v2970
      %v2972 = vpop.f32.mrf.mxu0
      %2973 = vmatprep.mubr.f32.mxu0 0.0
      %2974 = vmatmul.mubr.f32.gmra.mxu0 %v2809
      %v2975 = vpop.f32.mrf.mxu0
      %v2976 = vadd.f32 0.0, %v2975
      %v2977 = vpop.f32.mrf.mxu0
      %2978 = vmatprep.mubr.f32.mxu0 0.0
      %2979 = vmatmul.mubr.f32.gmra.mxu0 %v2812
      %v2980 = vpop.f32.mrf.mxu0
      %v2981 = vadd.f32 0.0, %v2980
      %v2982 = vpop.f32.mrf.mxu0
      %2983 = vmatprep.mubr.f32.mxu0 0.0
      %2984 = vmatmul.mubr.f32.gmra.mxu0 %v2815
      %v2985 = vpop.f32.mrf.mxu0
      %v2986 = vadd.f32 0.0, %v2985
      %v2987 = vpop.f32.mrf.mxu0
      %2988 = vmatprep.mubr.f32.mxu0 0.0
      %2989 = vmatmul.mubr.f32.gmra.mxu0 %v2818
      %v2990 = vpop.f32.mrf.mxu0
      %v2991 = vadd.f32 0.0, %v2990
      %v2992 = vpop.f32.mrf.mxu0
      %2993 = vmatprep.mubr.f32.mxu0 0.0
      %2994 = vmatmul.mubr.f32.gmra.mxu0 %v2821
      %v2995 = vpop.f32.mrf.mxu0
      %v2996 = vadd.f32 0.0, %v2995
      %v2997 = vpop.f32.mrf.mxu0
      %2998 = vmatprep.mubr.f32.mxu0 0.0
      %2999 = vmatmul.mubr.f32.gmra.mxu0 %v2824
      %v3000 = vpop.f32.mrf.mxu0
      %v3001 = vadd.f32 0.0, %v3000
      %v3002 = vpop.f32.mrf.mxu0
      %3003 = vmatprep.mubr.f32.mxu0 0.0
      %3004 = vmatmul.mubr.f32.gmra.mxu0 %v2827
      %v3005 = vpop.f32.mrf.mxu0
      %v3006 = vadd.f32 0.0, %v3005
      %v3007 = vpop.f32.mrf.mxu0
      %3008 = vmatprep.mubr.f32.mxu0 0.0
      %3009 = vmatmul.mubr.f32.gmra.mxu0 %v2830
      %v3010 = vpop.f32.mrf.mxu0
      %v3011 = vadd.f32 0.0, %v3010
      %v3012 = vpop.f32.mrf.mxu0
      %3013 = vmatprep.mubr.f32.mxu0 0.0
      %3014 = vmatmul.mubr.f32.gmra.mxu0 %v2833
      %v3015 = vpop.f32.mrf.mxu0
      %v3016 = vadd.f32 0.0, %v3015
      %v3017 = vpop.f32.mrf.mxu0
      %3018 = vmatprep.mubr.f32.mxu0 0.0
      %3019 = vmatmul.mubr.f32.gmra.mxu0 %v2836
      %v3020 = vpop.f32.mrf.mxu0
      %v3021 = vadd.f32 0.0, %v3020
      %v3022 = vpop.f32.mrf.mxu0
      %3023 = vmatprep.mubr.f32.mxu0 0.0
      %3024 = vmatmul.mubr.f32.gmra.mxu0 %v2839
      %v3025 = vpop.f32.mrf.mxu0
      %v3026 = vadd.f32 0.0, %v3025
      %v3027 = vpop.f32.mrf.mxu0
      %3028 = vmatprep.mubr.f32.mxu0 0.0
      %3029 = vmatmul.mubr.f32.gmra.mxu0 %v2842
      %v3030 = vpop.f32.mrf.mxu0
      %v3031 = vadd.f32 0.0, %v3030
      %v3032 = vpop.f32.mrf.mxu0
      %3033 = vmatprep.mubr.f32.mxu0 0.0
      %3034 = vmatmul.mubr.f32.gmra.mxu0 %v2845
      %v3035 = vpop.f32.mrf.mxu0
      %v3036 = vadd.f32 0.0, %v3035
      %v3037 = vpop.f32.mrf.mxu0
      %3038 = vmatprep.mubr.f32.mxu0 0.0
      %3039 = vmatmul.mubr.f32.gmra.mxu0 %v2848
      %v3040 = vpop.f32.mrf.mxu0
      %v3041 = vadd.f32 0.0, %v3040
      %v3042 = vpop.f32.mrf.mxu0
      %3043 = vmatprep.mubr.f32.mxu0 0.0
      %3044 = vmatmul.mubr.f32.gmra.mxu0 %v2851
      %v3045 = vpop.f32.mrf.mxu0
      %v3046 = vadd.f32 0.0, %v3045
      %v3047 = vpop.f32.mrf.mxu0
      %3048 = vmatprep.mubr.f32.mxu0 0.0
      %3049 = vmatmul.mubr.f32.gmra.mxu0 %v2854
      %v3050 = vpop.f32.mrf.mxu0
      %v3051 = vadd.f32 0.0, %v3050
      %v3052 = vpop.f32.mrf.mxu0
      %3053 = vmatprep.mubr.f32.mxu0 0.0
      %3054 = vmatmul.mubr.f32.gmra.mxu0 %v2857
      %v3055 = vpop.f32.mrf.mxu0
      %v3056 = vadd.f32 0.0, %v3055
      %v3057 = vpop.f32.mrf.mxu0
      %3058 = vmatprep.mubr.f32.mxu0 0.0
      %3059 = vmatmul.mubr.f32.gmra.mxu0 %v2860
      %v3060 = vpop.f32.mrf.mxu0
      %v3061 = vadd.f32 0.0, %v3060
      %v3062 = vpop.f32.mrf.mxu0
      %3063 = vmatprep.mubr.f32.mxu0 0.0
      %3064 = vmatmul.mubr.f32.gmra.mxu0 %v2863
      %v3065 = vpop.f32.mrf.mxu0
      %v3066 = vadd.f32 0.0, %v3065
      %v3067 = vpop.f32.mrf.mxu0
      %3068 = vmatprep.mubr.f32.mxu0 0.0
      %3069 = vmatmul.mubr.f32.gmra.mxu0 %v2866
      %v3070 = vpop.f32.mrf.mxu0
      %v3071 = vadd.f32 0.0, %v3070
      %v3072 = vpop.f32.mrf.mxu0
      %3073 = vmatprep.mubr.f32.mxu0 0.0
      %3074 = vmatmul.mubr.f32.gmra.mxu0 %v2869
      %v3075 = vpop.f32.mrf.mxu0
      %v3076 = vadd.f32 0.0, %v3075
      %v3077 = vpop.f32.mrf.mxu0
      %3078 = vmatprep.mubr.f32.mxu0 0.0
      %3079 = vmatmul.mubr.f32.gmra.mxu0 %v2872
      %v3080 = vpop.f32.mrf.mxu0
      %v3081 = vadd.f32 0.0, %v3080
      %v3082 = vpop.f32.mrf.mxu0
      %3083 = vmatprep.mubr.f32.mxu0 0.0
      %3084 = vmatmul.mubr.f32.gmra.mxu0 %v2875
      %v3085 = vpop.f32.mrf.mxu0
      %v3086 = vadd.f32 0.0, %v3085
      %v3087 = vpop.f32.mrf.mxu0
      %3088 = vmatprep.mubr.f32.mxu0 0.0
      %3089 = vmatmul.mubr.f32.gmra.mxu0 %v2878
      %v3090 = vpop.f32.mrf.mxu0
      %v3091 = vadd.f32 0.0, %v3090
      %v3092 = vpop.f32.mrf.mxu0
      %3093 = vmatprep.mubr.f32.mxu0 0.0
      %3094 = vmatmul.mubr.f32.gmra.mxu0 %v2881
      %v3095 = vpop.f32.mrf.mxu0
      %v3096 = vadd.f32 0.0, %v3095
      %v3097 = vpop.f32.mrf.mxu0
      %3098 = vmatprep.mubr.f32.mxu0 0.0
      %3099 = vmatmul.mubr.f32.gmra.mxu0 %v2884
      %v3100 = vpop.f32.mrf.mxu0
      %v3101 = vadd.f32 0.0, %v3100
      %v3102 = vpop.f32.mrf.mxu0
      %3103 = vmatprep.mubr.f32.mxu0 0.0
      %3104 = vmatmul.mubr.f32.gmra.mxu0 %v2887
      %v3105 = vpop.f32.mrf.mxu0
      %v3106 = vadd.f32 0.0, %v3105
      %v3107 = vpop.f32.mrf.mxu0
      %3108 = vmatprep.mubr.f32.mxu0 0.0
      %3109 = vmatmul.mubr.f32.gmra.mxu0 %v2890
      %v3110 = vpop.f32.mrf.mxu0
      %v3111 = vadd.f32 0.0, %v3110
      %v3112 = vpop.f32.mrf.mxu0
      %3113 = vmatprep.mubr.f32.mxu0 0.0
      %3114 = vmatmul.mubr.f32.gmra.mxu0 %v2893
      %v3115 = vpop.f32.mrf.mxu0
      %v3116 = vadd.f32 0.0, %v3115
      %v3117 = vpop.f32.mrf.mxu0
      %3118 = vmatprep.mubr.f32.mxu0 0.0
      %3119 = vmatmul.mubr.f32.gmra.mxu0 %v2896
      %v3120 = vpop.f32.mrf.mxu0
      %v3121 = vadd.f32 0.0, %v3120
      %v3122 = vpop.f32.mrf.mxu0
      %3123 = vmatprep.mubr.f32.mxu0 0.0
      %3124 = vmatmul.mubr.f32.gmra.mxu0 %v2899
      %v3125 = vpop.f32.mrf.mxu0
      %v3126 = vadd.f32 0.0, %v3125
      %v3127 = vpop.f32.mrf.mxu0
      %3128 = vdwg.mxu0
      %v3129 = vadd.f32 %v2739, %v2971
      %v3130 = vadd.f32 %v2740, %v2976
      %v3131 = vadd.f32 %v2741, %v2981
      %v3132 = vadd.f32 %v2742, %v2986
      %v3133 = vadd.f32 %v2743, %v2991
      %v3134 = vadd.f32 %v2744, %v2996
      %v3135 = vadd.f32 %v2745, %v3001
      %v3136 = vadd.f32 %v2746, %v3006
      %v3137 = vadd.f32 %v2747, %v3011
      %v3138 = vadd.f32 %v2748, %v3016
      %v3139 = vadd.f32 %v2749, %v3021
      %v3140 = vadd.f32 %v2750, %v3026
      %v3141 = vadd.f32 %v2751, %v3031
      %v3142 = vadd.f32 %v2752, %v3036
      %v3143 = vadd.f32 %v2753, %v3041
      %v3144 = vadd.f32 %v2754, %v3046
      %v3145 = vadd.f32 %v2755, %v3051
      %v3146 = vadd.f32 %v2756, %v3056
      %v3147 = vadd.f32 %v2757, %v3061
      %v3148 = vadd.f32 %v2758, %v3066
      %v3149 = vadd.f32 %v2759, %v3071
      %v3150 = vadd.f32 %v2760, %v3076
      %v3151 = vadd.f32 %v2761, %v3081
      %v3152 = vadd.f32 %v2762, %v3086
      %v3153 = vadd.f32 %v2763, %v3091
      %v3154 = vadd.f32 %v2764, %v3096
      %v3155 = vadd.f32 %v2765, %v3101
      %v3156 = vadd.f32 %v2766, %v3106
      %v3157 = vadd.f32 %v2767, %v3111
      %v3158 = vadd.f32 %v2768, %v3116
      %v3159 = vadd.f32 %v2769, %v3121
      %v3160 = vadd.f32 %v2770, %v3126
      %v3161 = vld [vmem:[#allocation2 + $0x19] sm:$0xff]
      %v3162 = vld [vmem:[#allocation2 + $0x21] sm:$0xff]
      %v3163 = vld [vmem:[#allocation2 + $0x29] sm:$0xff]
      %v3164 = vld [vmem:[#allocation2 + $0x31] sm:$0xff]
      %v3165 = vld [vmem:[#allocation2 + $0x39] sm:$0xff]
      %v3166 = vld [vmem:[#allocation2 + $0x41] sm:$0xff]
      %v3167 = vld [vmem:[#allocation2 + $0x49] sm:$0xff]
      %v3168 = vld [vmem:[#allocation2 + $0x51] sm:$0xff]
      %v3169 = vld [vmem:[#allocation2 + $0x59] sm:$0xff]
      %v3170 = vld [vmem:[#allocation2 + $0x61] sm:$0xff]
      %v3171 = vld [vmem:[#allocation2 + $0x69] sm:$0xff]
      %v3172 = vld [vmem:[#allocation2 + $0x71] sm:$0xff]
      %v3173 = vld [vmem:[#allocation2 + $0x79] sm:$0xff]
      %v3174 = vld [vmem:[#allocation2 + $0x81] sm:$0xff]
      %v3175 = vld [vmem:[#allocation2 + $0x89] sm:$0xff]
      %v3176 = vld [vmem:[#allocation2 + $0x91] sm:$0xff]
      %v3177 = vld [vmem:[#allocation2 + $0x99] sm:$0xff]
      %v3178 = vld [vmem:[#allocation2 + $0xa1] sm:$0xff]
      %v3179 = vld [vmem:[#allocation2 + $0xa9] sm:$0xff]
      %v3180 = vld [vmem:[#allocation2 + $0xb1] sm:$0xff]
      %v3181 = vld [vmem:[#allocation2 + $0xb9] sm:$0xff]
      %v3182 = vld [vmem:[#allocation2 + $0xc1] sm:$0xff]
      %v3183 = vld [vmem:[#allocation2 + $0xc9] sm:$0xff]
      %v3184 = vld [vmem:[#allocation2 + $0xd1] sm:$0xff]
      %v3185 = vld [vmem:[#allocation2 + $0xd9] sm:$0xff]
      %v3186 = vld [vmem:[#allocation2 + $0xe1] sm:$0xff]
      %v3187 = vld [vmem:[#allocation2 + $0xe9] sm:$0xff]
      %v3188 = vld [vmem:[#allocation2 + $0xf1] sm:$0xff]
      %v3189 = vld [vmem:[#allocation2 + $0xf9] sm:$0xff]
      %v3190 = vld [vmem:[#allocation2 + $0x101] sm:$0xff]
      %v3191 = vld [vmem:[#allocation2 + $0x109] sm:$0xff]
      %v3192 = vld [vmem:[#allocation2 + $0x111] sm:$0xff]
      %v3193 = vmul.f32 %v3161, %v1802
      %v3194 = vmul.f32 %v3162, %v1807
      %v3195 = vmul.f32 %v3163, %v1812
      %v3196 = vmul.f32 %v3164, %v1817
      %v3197 = vmul.f32 %v3165, %v1822
      %v3198 = vmul.f32 %v3166, %v1827
      %v3199 = vmul.f32 %v3167, %v1832
      %v3200 = vmul.f32 %v3168, %v1837
      %v3201 = vmul.f32 %v3169, %v1842
      %v3202 = vmul.f32 %v3170, %v1847
      %v3203 = vmul.f32 %v3171, %v1852
      %v3204 = vmul.f32 %v3172, %v1857
      %v3205 = vmul.f32 %v3173, %v1862
      %v3206 = vmul.f32 %v3174, %v1867
      %v3207 = vmul.f32 %v3175, %v1872
      %v3208 = vmul.f32 %v3176, %v1877
      %v3209 = vmul.f32 %v3177, %v1882
      %v3210 = vmul.f32 %v3178, %v1887
      %v3211 = vmul.f32 %v3179, %v1892
      %v3212 = vmul.f32 %v3180, %v1897
      %v3213 = vmul.f32 %v3181, %v1902
      %v3214 = vmul.f32 %v3182, %v1907
      %v3215 = vmul.f32 %v3183, %v1912
      %v3216 = vmul.f32 %v3184, %v1917
      %v3217 = vmul.f32 %v3185, %v1922
      %v3218 = vmul.f32 %v3186, %v1927
      %v3219 = vmul.f32 %v3187, %v1932
      %v3220 = vmul.f32 %v3188, %v1937
      %v3221 = vmul.f32 %v3189, %v1942
      %v3222 = vmul.f32 %v3190, %v1947
      %v3223 = vmul.f32 %v3191, %v1952
      %v3224 = vmul.f32 %v3192, %v1957
      %s3225 = scalar_lea.vmem %s5, 20
      %v3226 = vld [vmem:[%s3225] sm:$0xf]
      %v3228 = vsel %vm400, %v3193, 0
      %v3231 = vsel %vm400, %v3194, 0
      %v3234 = vsel %vm400, %v3195, 0
      %v3237 = vsel %vm400, %v3196, 0
      %v3240 = vsel %vm400, %v3197, 0
      %v3243 = vsel %vm400, %v3198, 0
      %v3246 = vsel %vm400, %v3199, 0
      %v3249 = vsel %vm400, %v3200, 0
      %v3252 = vsel %vm400, %v3201, 0
      %v3255 = vsel %vm400, %v3202, 0
      %v3258 = vsel %vm400, %v3203, 0
      %v3261 = vsel %vm400, %v3204, 0
      %v3264 = vsel %vm400, %v3205, 0
      %v3267 = vsel %vm400, %v3206, 0
      %v3270 = vsel %vm400, %v3207, 0
      %v3273 = vsel %vm400, %v3208, 0
      %v3276 = vsel %vm400, %v3209, 0
      %v3279 = vsel %vm400, %v3210, 0
      %v3282 = vsel %vm400, %v3211, 0
      %v3285 = vsel %vm400, %v3212, 0
      %v3288 = vsel %vm400, %v3213, 0
      %v3291 = vsel %vm400, %v3214, 0
      %v3294 = vsel %vm400, %v3215, 0
      %v3297 = vsel %vm400, %v3216, 0
      %v3300 = vsel %vm400, %v3217, 0
      %v3303 = vsel %vm400, %v3218, 0
      %v3306 = vsel %vm400, %v3219, 0
      %v3309 = vsel %vm400, %v3220, 0
      %v3312 = vsel %vm400, %v3221, 0
      %v3315 = vsel %vm400, %v3222, 0
      %v3318 = vsel %vm400, %v3223, 0
      %v3321 = vsel %vm400, %v3224, 0
      %v3324 = vsel %vm497, %v3226, 0
      %3326 = vmatprep.subr.mxu0 0.0
      %3327 = vmatpush1.msra.mxu0 0.0
      %3328 = vmatprep.subr.mxu0 0.0
      %3329 = vmatpush1.msra.mxu0 0.0
      %3330 = vmatprep.subr.mxu0 0.0
      %3331 = vmatpush1.msra.mxu0 0.0
      %3332 = vmatprep.subr.mxu0 0.0
      %3333 = vmatpush1.msra.mxu0 0.0
      %3334 = vmatprep.subr.mxu0 0.0
      %3335 = vmatpush1.msra.mxu0 0.0
      %3336 = vmatprep.subr.mxu0 0.0
      %3337 = vmatpush1.msra.mxu0 0.0
      %3338 = vmatprep.subr.mxu0 0.0
      %3339 = vmatpush1.msra.mxu0 0.0
      %3340 = vmatprep.subr.mxu0 0.0
      %3341 = vmatpush1.msra.mxu0 0.0
      %3342 = vmatprep.subr.mxu0 0.0
      %3343 = vmatpush1.msra.mxu0 0.0
      %3344 = vmatprep.subr.mxu0 0.0
      %3345 = vmatpush1.msra.mxu0 0.0
      %3346 = vmatprep.subr.mxu0 0.0
      %3347 = vmatpush1.msra.mxu0 0.0
      %3348 = vmatprep.subr.mxu0 0.0
      %3349 = vmatpush1.msra.mxu0 0.0
      %3350 = vmatprep.subr.mxu0 0.0
      %3351 = vmatpush1.msra.mxu0 0.0
      %3352 = vmatprep.subr.mxu0 0.0
      %3353 = vmatpush1.msra.mxu0 0.0
      %3354 = vmatprep.subr.mxu0 0.0
      %3355 = vmatpush1.msra.mxu0 0.0
      %3356 = vmatprep.subr.mxu0 0.0
      %3357 = vmatpush1.msra.mxu0 %v3324
      %3358 = vmatprep.subr.mxu0 0.0
      %3359 = vmatpush2.msra.mxu0 0.0
      %3360 = vmatprep.subr.mxu0 0.0
      %3361 = vmatpush2.msra.mxu0 0.0
      %3362 = vmatprep.subr.mxu0 0.0
      %3363 = vmatpush2.msra.mxu0 0.0
      %3364 = vmatprep.subr.mxu0 0.0
      %3365 = vmatpush2.msra.mxu0 0.0
      %3366 = vmatprep.subr.mxu0 0.0
      %3367 = vmatpush2.msra.mxu0 0.0
      %3368 = vmatprep.subr.mxu0 0.0
      %3369 = vmatpush2.msra.mxu0 0.0
      %3370 = vmatprep.subr.mxu0 0.0
      %3371 = vmatpush2.msra.mxu0 0.0
      %3372 = vmatprep.subr.mxu0 0.0
      %3373 = vmatpush2.msra.mxu0 0.0
      %3374 = vmatprep.subr.mxu0 0.0
      %3375 = vmatpush2.msra.mxu0 0.0
      %3376 = vmatprep.subr.mxu0 0.0
      %3377 = vmatpush2.msra.mxu0 0.0
      %3378 = vmatprep.subr.mxu0 0.0
      %3379 = vmatpush2.msra.mxu0 0.0
      %3380 = vmatprep.subr.mxu0 0.0
      %3381 = vmatpush2.msra.mxu0 0.0
      %3382 = vmatprep.subr.mxu0 0.0
      %3383 = vmatpush2.msra.mxu0 0.0
      %3384 = vmatprep.subr.mxu0 0.0
      %3385 = vmatpush2.msra.mxu0 0.0
      %3386 = vmatprep.subr.mxu0 0.0
      %3387 = vmatpush2.msra.mxu0 0.0
      %3388 = vmatprep.subr.mxu0 0.0
      %3389 = vmatpush2.msra.mxu0 0.0
      %3390 = vmatprep.mubr.f32.mxu0 0.0
      %3391 = vmatmul.mubr.f32.gmra.mxu0 %v3228
      %v3392 = vpop.f32.mrf.mxu0
      %v3393 = vadd.f32 0.0, %v3392
      %v3394 = vpop.f32.mrf.mxu0
      %3395 = vmatprep.mubr.f32.mxu0 0.0
      %3396 = vmatmul.mubr.f32.gmra.mxu0 %v3231
      %v3397 = vpop.f32.mrf.mxu0
      %v3398 = vadd.f32 0.0, %v3397
      %v3399 = vpop.f32.mrf.mxu0
      %3400 = vmatprep.mubr.f32.mxu0 0.0
      %3401 = vmatmul.mubr.f32.gmra.mxu0 %v3234
      %v3402 = vpop.f32.mrf.mxu0
      %v3403 = vadd.f32 0.0, %v3402
      %v3404 = vpop.f32.mrf.mxu0
      %3405 = vmatprep.mubr.f32.mxu0 0.0
      %3406 = vmatmul.mubr.f32.gmra.mxu0 %v3237
      %v3407 = vpop.f32.mrf.mxu0
      %v3408 = vadd.f32 0.0, %v3407
      %v3409 = vpop.f32.mrf.mxu0
      %3410 = vmatprep.mubr.f32.mxu0 0.0
      %3411 = vmatmul.mubr.f32.gmra.mxu0 %v3240
      %v3412 = vpop.f32.mrf.mxu0
      %v3413 = vadd.f32 0.0, %v3412
      %v3414 = vpop.f32.mrf.mxu0
      %3415 = vmatprep.mubr.f32.mxu0 0.0
      %3416 = vmatmul.mubr.f32.gmra.mxu0 %v3243
      %v3417 = vpop.f32.mrf.mxu0
      %v3418 = vadd.f32 0.0, %v3417
      %v3419 = vpop.f32.mrf.mxu0
      %3420 = vmatprep.mubr.f32.mxu0 0.0
      %3421 = vmatmul.mubr.f32.gmra.mxu0 %v3246
      %v3422 = vpop.f32.mrf.mxu0
      %v3423 = vadd.f32 0.0, %v3422
      %v3424 = vpop.f32.mrf.mxu0
      %3425 = vmatprep.mubr.f32.mxu0 0.0
      %3426 = vmatmul.mubr.f32.gmra.mxu0 %v3249
      %v3427 = vpop.f32.mrf.mxu0
      %v3428 = vadd.f32 0.0, %v3427
      %v3429 = vpop.f32.mrf.mxu0
      %3430 = vmatprep.mubr.f32.mxu0 0.0
      %3431 = vmatmul.mubr.f32.gmra.mxu0 %v3252
      %v3432 = vpop.f32.mrf.mxu0
      %v3433 = vadd.f32 0.0, %v3432
      %v3434 = vpop.f32.mrf.mxu0
      %3435 = vmatprep.mubr.f32.mxu0 0.0
      %3436 = vmatmul.mubr.f32.gmra.mxu0 %v3255
      %v3437 = vpop.f32.mrf.mxu0
      %v3438 = vadd.f32 0.0, %v3437
      %v3439 = vpop.f32.mrf.mxu0
      %3440 = vmatprep.mubr.f32.mxu0 0.0
      %3441 = vmatmul.mubr.f32.gmra.mxu0 %v3258
      %v3442 = vpop.f32.mrf.mxu0
      %v3443 = vadd.f32 0.0, %v3442
      %v3444 = vpop.f32.mrf.mxu0
      %3445 = vmatprep.mubr.f32.mxu0 0.0
      %3446 = vmatmul.mubr.f32.gmra.mxu0 %v3261
      %v3447 = vpop.f32.mrf.mxu0
      %v3448 = vadd.f32 0.0, %v3447
      %v3449 = vpop.f32.mrf.mxu0
      %3450 = vmatprep.mubr.f32.mxu0 0.0
      %3451 = vmatmul.mubr.f32.gmra.mxu0 %v3264
      %v3452 = vpop.f32.mrf.mxu0
      %v3453 = vadd.f32 0.0, %v3452
      %v3454 = vpop.f32.mrf.mxu0
      %3455 = vmatprep.mubr.f32.mxu0 0.0
      %3456 = vmatmul.mubr.f32.gmra.mxu0 %v3267
      %v3457 = vpop.f32.mrf.mxu0
      %v3458 = vadd.f32 0.0, %v3457
      %v3459 = vpop.f32.mrf.mxu0
      %3460 = vmatprep.mubr.f32.mxu0 0.0
      %3461 = vmatmul.mubr.f32.gmra.mxu0 %v3270
      %v3462 = vpop.f32.mrf.mxu0
      %v3463 = vadd.f32 0.0, %v3462
      %v3464 = vpop.f32.mrf.mxu0
      %3465 = vmatprep.mubr.f32.mxu0 0.0
      %3466 = vmatmul.mubr.f32.gmra.mxu0 %v3273
      %v3467 = vpop.f32.mrf.mxu0
      %v3468 = vadd.f32 0.0, %v3467
      %v3469 = vpop.f32.mrf.mxu0
      %3470 = vmatprep.mubr.f32.mxu0 0.0
      %3471 = vmatmul.mubr.f32.gmra.mxu0 %v3276
      %v3472 = vpop.f32.mrf.mxu0
      %v3473 = vadd.f32 0.0, %v3472
      %v3474 = vpop.f32.mrf.mxu0
      %3475 = vmatprep.mubr.f32.mxu0 0.0
      %3476 = vmatmul.mubr.f32.gmra.mxu0 %v3279
      %v3477 = vpop.f32.mrf.mxu0
      %v3478 = vadd.f32 0.0, %v3477
      %v3479 = vpop.f32.mrf.mxu0
      %3480 = vmatprep.mubr.f32.mxu0 0.0
      %3481 = vmatmul.mubr.f32.gmra.mxu0 %v3282
      %v3482 = vpop.f32.mrf.mxu0
      %v3483 = vadd.f32 0.0, %v3482
      %v3484 = vpop.f32.mrf.mxu0
      %3485 = vmatprep.mubr.f32.mxu0 0.0
      %3486 = vmatmul.mubr.f32.gmra.mxu0 %v3285
      %v3487 = vpop.f32.mrf.mxu0
      %v3488 = vadd.f32 0.0, %v3487
      %v3489 = vpop.f32.mrf.mxu0
      %3490 = vmatprep.mubr.f32.mxu0 0.0
      %3491 = vmatmul.mubr.f32.gmra.mxu0 %v3288
      %v3492 = vpop.f32.mrf.mxu0
      %v3493 = vadd.f32 0.0, %v3492
      %v3494 = vpop.f32.mrf.mxu0
      %3495 = vmatprep.mubr.f32.mxu0 0.0
      %3496 = vmatmul.mubr.f32.gmra.mxu0 %v3291
      %v3497 = vpop.f32.mrf.mxu0
      %v3498 = vadd.f32 0.0, %v3497
      %v3499 = vpop.f32.mrf.mxu0
      %3500 = vmatprep.mubr.f32.mxu0 0.0
      %3501 = vmatmul.mubr.f32.gmra.mxu0 %v3294
      %v3502 = vpop.f32.mrf.mxu0
      %v3503 = vadd.f32 0.0, %v3502
      %v3504 = vpop.f32.mrf.mxu0
      %3505 = vmatprep.mubr.f32.mxu0 0.0
      %3506 = vmatmul.mubr.f32.gmra.mxu0 %v3297
      %v3507 = vpop.f32.mrf.mxu0
      %v3508 = vadd.f32 0.0, %v3507
      %v3509 = vpop.f32.mrf.mxu0
      %3510 = vmatprep.mubr.f32.mxu0 0.0
      %3511 = vmatmul.mubr.f32.gmra.mxu0 %v3300
      %v3512 = vpop.f32.mrf.mxu0
      %v3513 = vadd.f32 0.0, %v3512
      %v3514 = vpop.f32.mrf.mxu0
      %3515 = vmatprep.mubr.f32.mxu0 0.0
      %3516 = vmatmul.mubr.f32.gmra.mxu0 %v3303
      %v3517 = vpop.f32.mrf.mxu0
      %v3518 = vadd.f32 0.0, %v3517
      %v3519 = vpop.f32.mrf.mxu0
      %3520 = vmatprep.mubr.f32.mxu0 0.0
      %3521 = vmatmul.mubr.f32.gmra.mxu0 %v3306
      %v3522 = vpop.f32.mrf.mxu0
      %v3523 = vadd.f32 0.0, %v3522
      %v3524 = vpop.f32.mrf.mxu0
      %3525 = vmatprep.mubr.f32.mxu0 0.0
      %3526 = vmatmul.mubr.f32.gmra.mxu0 %v3309
      %v3527 = vpop.f32.mrf.mxu0
      %v3528 = vadd.f32 0.0, %v3527
      %v3529 = vpop.f32.mrf.mxu0
      %3530 = vmatprep.mubr.f32.mxu0 0.0
      %3531 = vmatmul.mubr.f32.gmra.mxu0 %v3312
      %v3532 = vpop.f32.mrf.mxu0
      %v3533 = vadd.f32 0.0, %v3532
      %v3534 = vpop.f32.mrf.mxu0
      %3535 = vmatprep.mubr.f32.mxu0 0.0
      %3536 = vmatmul.mubr.f32.gmra.mxu0 %v3315
      %v3537 = vpop.f32.mrf.mxu0
      %v3538 = vadd.f32 0.0, %v3537
      %v3539 = vpop.f32.mrf.mxu0
      %3540 = vmatprep.mubr.f32.mxu0 0.0
      %3541 = vmatmul.mubr.f32.gmra.mxu0 %v3318
      %v3542 = vpop.f32.mrf.mxu0
      %v3543 = vadd.f32 0.0, %v3542
      %v3544 = vpop.f32.mrf.mxu0
      %3545 = vmatprep.mubr.f32.mxu0 0.0
      %3546 = vmatmul.mubr.f32.gmra.mxu0 %v3321
      %v3547 = vpop.f32.mrf.mxu0
      %v3548 = vadd.f32 0.0, %v3547
      %v3549 = vpop.f32.mrf.mxu0
      %3550 = vdwg.mxu0
      %v3551 = vadd.f32 %v3129, %v3393
      %v3552 = vadd.f32 %v3130, %v3398
      %v3553 = vadd.f32 %v3131, %v3403
      %v3554 = vadd.f32 %v3132, %v3408
      %v3555 = vadd.f32 %v3133, %v3413
      %v3556 = vadd.f32 %v3134, %v3418
      %v3557 = vadd.f32 %v3135, %v3423
      %v3558 = vadd.f32 %v3136, %v3428
      %v3559 = vadd.f32 %v3137, %v3433
      %v3560 = vadd.f32 %v3138, %v3438
      %v3561 = vadd.f32 %v3139, %v3443
      %v3562 = vadd.f32 %v3140, %v3448
      %v3563 = vadd.f32 %v3141, %v3453
      %v3564 = vadd.f32 %v3142, %v3458
      %v3565 = vadd.f32 %v3143, %v3463
      %v3566 = vadd.f32 %v3144, %v3468
      %v3567 = vadd.f32 %v3145, %v3473
      %v3568 = vadd.f32 %v3146, %v3478
      %v3569 = vadd.f32 %v3147, %v3483
      %v3570 = vadd.f32 %v3148, %v3488
      %v3571 = vadd.f32 %v3149, %v3493
      %v3572 = vadd.f32 %v3150, %v3498
      %v3573 = vadd.f32 %v3151, %v3503
      %v3574 = vadd.f32 %v3152, %v3508
      %v3575 = vadd.f32 %v3153, %v3513
      %v3576 = vadd.f32 %v3154, %v3518
      %v3577 = vadd.f32 %v3155, %v3523
      %v3578 = vadd.f32 %v3156, %v3528
      %v3579 = vadd.f32 %v3157, %v3533
      %v3580 = vadd.f32 %v3158, %v3538
      %v3581 = vadd.f32 %v3159, %v3543
      %v3582 = vadd.f32 %v3160, %v3548
      %v3583 = vld [vmem:[#allocation2 + $0x27] sm:$0xff]
      %v3584 = vld [vmem:[#allocation2 + $0x2f] sm:$0xff]
      %v3585 = vld [vmem:[#allocation2 + $0x37] sm:$0xff]
      %v3586 = vld [vmem:[#allocation2 + $0x3f] sm:$0xff]
      %v3587 = vld [vmem:[#allocation2 + $0x47] sm:$0xff]
      %v3588 = vld [vmem:[#allocation2 + $0x4f] sm:$0xff]
      %v3589 = vld [vmem:[#allocation2 + $0x57] sm:$0xff]
      %v3590 = vld [vmem:[#allocation2 + $0x5f] sm:$0xff]
      %v3591 = vld [vmem:[#allocation2 + $0x67] sm:$0xff]
      %v3592 = vld [vmem:[#allocation2 + $0x6f] sm:$0xff]
      %v3593 = vld [vmem:[#allocation2 + $0x77] sm:$0xff]
      %v3594 = vld [vmem:[#allocation2 + $0x7f] sm:$0xff]
      %v3595 = vld [vmem:[#allocation2 + $0x87] sm:$0xff]
      %v3596 = vld [vmem:[#allocation2 + $0x8f] sm:$0xff]
      %v3597 = vld [vmem:[#allocation2 + $0x97] sm:$0xff]
      %v3598 = vld [vmem:[#allocation2 + $0x9f] sm:$0xff]
      %v3599 = vld [vmem:[#allocation2 + $0xa7] sm:$0xff]
      %v3600 = vld [vmem:[#allocation2 + $0xaf] sm:$0xff]
      %v3601 = vld [vmem:[#allocation2 + $0xb7] sm:$0xff]
      %v3602 = vld [vmem:[#allocation2 + $0xbf] sm:$0xff]
      %v3603 = vld [vmem:[#allocation2 + $0xc7] sm:$0xff]
      %v3604 = vld [vmem:[#allocation2 + $0xcf] sm:$0xff]
      %v3605 = vld [vmem:[#allocation2 + $0xd7] sm:$0xff]
      %v3606 = vld [vmem:[#allocation2 + $0xdf] sm:$0xff]
      %v3607 = vld [vmem:[#allocation2 + $0xe7] sm:$0xff]
      %v3608 = vld [vmem:[#allocation2 + $0xef] sm:$0xff]
      %v3609 = vld [vmem:[#allocation2 + $0xf7] sm:$0xff]
      %v3610 = vld [vmem:[#allocation2 + $0xff] sm:$0xff]
      %v3611 = vld [vmem:[#allocation2 + $0x107] sm:$0xff]
      %v3612 = vld [vmem:[#allocation2 + $0x10f] sm:$0xff]
      %v3613 = vld [vmem:[#allocation2 + $0x117] sm:$0xff]
      %v3614 = vld [vmem:[#allocation2 + $0x11f] sm:$0xff]
      %v3615 = vmul.f32 %v3583, %v895
      %v3616 = vmul.f32 %v3584, %v900
      %v3617 = vmul.f32 %v3585, %v905
      %v3618 = vmul.f32 %v3586, %v910
      %v3619 = vmul.f32 %v3587, %v915
      %v3620 = vmul.f32 %v3588, %v920
      %v3621 = vmul.f32 %v3589, %v925
      %v3622 = vmul.f32 %v3590, %v930
      %v3623 = vmul.f32 %v3591, %v935
      %v3624 = vmul.f32 %v3592, %v940
      %v3625 = vmul.f32 %v3593, %v945
      %v3626 = vmul.f32 %v3594, %v950
      %v3627 = vmul.f32 %v3595, %v955
      %v3628 = vmul.f32 %v3596, %v960
      %v3629 = vmul.f32 %v3597, %v965
      %v3630 = vmul.f32 %v3598, %v970
      %v3631 = vmul.f32 %v3599, %v975
      %v3632 = vmul.f32 %v3600, %v980
      %v3633 = vmul.f32 %v3601, %v985
      %v3634 = vmul.f32 %v3602, %v990
      %v3635 = vmul.f32 %v3603, %v995
      %v3636 = vmul.f32 %v3604, %v1000
      %v3637 = vmul.f32 %v3605, %v1005
      %v3638 = vmul.f32 %v3606, %v1010
      %v3639 = vmul.f32 %v3607, %v1015
      %v3640 = vmul.f32 %v3608, %v1020
      %v3641 = vmul.f32 %v3609, %v1025
      %v3642 = vmul.f32 %v3610, %v1030
      %v3643 = vmul.f32 %v3611, %v1035
      %v3644 = vmul.f32 %v3612, %v1040
      %v3645 = vmul.f32 %v3613, %v1045
      %v3646 = vmul.f32 %v3614, %v1050
      %s3647 = scalar_lea.vmem %s5, 24
      %v3648 = vld [vmem:[%s3647] sm:$0xf]
      %v3650 = vsel %vm400, %v3615, 0
      %v3653 = vsel %vm400, %v3616, 0
      %v3656 = vsel %vm400, %v3617, 0
      %v3659 = vsel %vm400, %v3618, 0
      %v3662 = vsel %vm400, %v3619, 0
      %v3665 = vsel %vm400, %v3620, 0
      %v3668 = vsel %vm400, %v3621, 0
      %v3671 = vsel %vm400, %v3622, 0
      %v3674 = vsel %vm400, %v3623, 0
      %v3677 = vsel %vm400, %v3624, 0
      %v3680 = vsel %vm400, %v3625, 0
      %v3683 = vsel %vm400, %v3626, 0
      %v3686 = vsel %vm400, %v3627, 0
      %v3689 = vsel %vm400, %v3628, 0
      %v3692 = vsel %vm400, %v3629, 0
      %v3695 = vsel %vm400, %v3630, 0
      %v3698 = vsel %vm400, %v3631, 0
      %v3701 = vsel %vm400, %v3632, 0
      %v3704 = vsel %vm400, %v3633, 0
      %v3707 = vsel %vm400, %v3634, 0
      %v3710 = vsel %vm400, %v3635, 0
      %v3713 = vsel %vm400, %v3636, 0
      %v3716 = vsel %vm400, %v3637, 0
      %v3719 = vsel %vm400, %v3638, 0
      %v3722 = vsel %vm400, %v3639, 0
      %v3725 = vsel %vm400, %v3640, 0
      %v3728 = vsel %vm400, %v3641, 0
      %v3731 = vsel %vm400, %v3642, 0
      %v3734 = vsel %vm400, %v3643, 0
      %v3737 = vsel %vm400, %v3644, 0
      %v3740 = vsel %vm400, %v3645, 0
      %v3743 = vsel %vm400, %v3646, 0
      %v3746 = vsel %vm497, %v3648, 0
      %3748 = vmatprep.subr.mxu0 0.0
      %3749 = vmatpush1.msra.mxu0 0.0
      %3750 = vmatprep.subr.mxu0 0.0
      %3751 = vmatpush1.msra.mxu0 0.0
      %3752 = vmatprep.subr.mxu0 0.0
      %3753 = vmatpush1.msra.mxu0 0.0
      %3754 = vmatprep.subr.mxu0 0.0
      %3755 = vmatpush1.msra.mxu0 0.0
      %3756 = vmatprep.subr.mxu0 0.0
      %3757 = vmatpush1.msra.mxu0 0.0
      %3758 = vmatprep.subr.mxu0 0.0
      %3759 = vmatpush1.msra.mxu0 0.0
      %3760 = vmatprep.subr.mxu0 0.0
      %3761 = vmatpush1.msra.mxu0 0.0
      %3762 = vmatprep.subr.mxu0 0.0
      %3763 = vmatpush1.msra.mxu0 0.0
      %3764 = vmatprep.subr.mxu0 0.0
      %3765 = vmatpush1.msra.mxu0 0.0
      %3766 = vmatprep.subr.mxu0 0.0
      %3767 = vmatpush1.msra.mxu0 0.0
      %3768 = vmatprep.subr.mxu0 0.0
      %3769 = vmatpush1.msra.mxu0 0.0
      %3770 = vmatprep.subr.mxu0 0.0
      %3771 = vmatpush1.msra.mxu0 0.0
      %3772 = vmatprep.subr.mxu0 0.0
      %3773 = vmatpush1.msra.mxu0 0.0
      %3774 = vmatprep.subr.mxu0 0.0
      %3775 = vmatpush1.msra.mxu0 0.0
      %3776 = vmatprep.subr.mxu0 0.0
      %3777 = vmatpush1.msra.mxu0 0.0
      %3778 = vmatprep.subr.mxu0 0.0
      %3779 = vmatpush1.msra.mxu0 %v3746
      %3780 = vmatprep.subr.mxu0 0.0
      %3781 = vmatpush2.msra.mxu0 0.0
      %3782 = vmatprep.subr.mxu0 0.0
      %3783 = vmatpush2.msra.mxu0 0.0
      %3784 = vmatprep.subr.mxu0 0.0
      %3785 = vmatpush2.msra.mxu0 0.0
      %3786 = vmatprep.subr.mxu0 0.0
      %3787 = vmatpush2.msra.mxu0 0.0
      %3788 = vmatprep.subr.mxu0 0.0
      %3789 = vmatpush2.msra.mxu0 0.0
      %3790 = vmatprep.subr.mxu0 0.0
      %3791 = vmatpush2.msra.mxu0 0.0
      %3792 = vmatprep.subr.mxu0 0.0
      %3793 = vmatpush2.msra.mxu0 0.0
      %3794 = vmatprep.subr.mxu0 0.0
      %3795 = vmatpush2.msra.mxu0 0.0
      %3796 = vmatprep.subr.mxu0 0.0
      %3797 = vmatpush2.msra.mxu0 0.0
      %3798 = vmatprep.subr.mxu0 0.0
      %3799 = vmatpush2.msra.mxu0 0.0
      %3800 = vmatprep.subr.mxu0 0.0
      %3801 = vmatpush2.msra.mxu0 0.0
      %3802 = vmatprep.subr.mxu0 0.0
      %3803 = vmatpush2.msra.mxu0 0.0
      %3804 = vmatprep.subr.mxu0 0.0
      %3805 = vmatpush2.msra.mxu0 0.0
      %3806 = vmatprep.subr.mxu0 0.0
      %3807 = vmatpush2.msra.mxu0 0.0
      %3808 = vmatprep.subr.mxu0 0.0
      %3809 = vmatpush2.msra.mxu0 0.0
      %3810 = vmatprep.subr.mxu0 0.0
      %3811 = vmatpush2.msra.mxu0 0.0
      %3812 = vmatprep.mubr.f32.mxu0 0.0
      %3813 = vmatmul.mubr.f32.gmra.mxu0 %v3650
      %v3814 = vpop.f32.mrf.mxu0
      %v3815 = vadd.f32 0.0, %v3814
      %v3816 = vpop.f32.mrf.mxu0
      %3817 = vmatprep.mubr.f32.mxu0 0.0
      %3818 = vmatmul.mubr.f32.gmra.mxu0 %v3653
      %v3819 = vpop.f32.mrf.mxu0
      %v3820 = vadd.f32 0.0, %v3819
      %v3821 = vpop.f32.mrf.mxu0
      %3822 = vmatprep.mubr.f32.mxu0 0.0
      %3823 = vmatmul.mubr.f32.gmra.mxu0 %v3656
      %v3824 = vpop.f32.mrf.mxu0
      %v3825 = vadd.f32 0.0, %v3824
      %v3826 = vpop.f32.mrf.mxu0
      %3827 = vmatprep.mubr.f32.mxu0 0.0
      %3828 = vmatmul.mubr.f32.gmra.mxu0 %v3659
      %v3829 = vpop.f32.mrf.mxu0
      %v3830 = vadd.f32 0.0, %v3829
      %v3831 = vpop.f32.mrf.mxu0
      %3832 = vmatprep.mubr.f32.mxu0 0.0
      %3833 = vmatmul.mubr.f32.gmra.mxu0 %v3662
      %v3834 = vpop.f32.mrf.mxu0
      %v3835 = vadd.f32 0.0, %v3834
      %v3836 = vpop.f32.mrf.mxu0
      %3837 = vmatprep.mubr.f32.mxu0 0.0
      %3838 = vmatmul.mubr.f32.gmra.mxu0 %v3665
      %v3839 = vpop.f32.mrf.mxu0
      %v3840 = vadd.f32 0.0, %v3839
      %v3841 = vpop.f32.mrf.mxu0
      %3842 = vmatprep.mubr.f32.mxu0 0.0
      %3843 = vmatmul.mubr.f32.gmra.mxu0 %v3668
      %v3844 = vpop.f32.mrf.mxu0
      %v3845 = vadd.f32 0.0, %v3844
      %v3846 = vpop.f32.mrf.mxu0
      %3847 = vmatprep.mubr.f32.mxu0 0.0
      %3848 = vmatmul.mubr.f32.gmra.mxu0 %v3671
      %v3849 = vpop.f32.mrf.mxu0
      %v3850 = vadd.f32 0.0, %v3849
      %v3851 = vpop.f32.mrf.mxu0
      %3852 = vmatprep.mubr.f32.mxu0 0.0
      %3853 = vmatmul.mubr.f32.gmra.mxu0 %v3674
      %v3854 = vpop.f32.mrf.mxu0
      %v3855 = vadd.f32 0.0, %v3854
      %v3856 = vpop.f32.mrf.mxu0
      %3857 = vmatprep.mubr.f32.mxu0 0.0
      %3858 = vmatmul.mubr.f32.gmra.mxu0 %v3677
      %v3859 = vpop.f32.mrf.mxu0
      %v3860 = vadd.f32 0.0, %v3859
      %v3861 = vpop.f32.mrf.mxu0
      %3862 = vmatprep.mubr.f32.mxu0 0.0
      %3863 = vmatmul.mubr.f32.gmra.mxu0 %v3680
      %v3864 = vpop.f32.mrf.mxu0
      %v3865 = vadd.f32 0.0, %v3864
      %v3866 = vpop.f32.mrf.mxu0
      %3867 = vmatprep.mubr.f32.mxu0 0.0
      %3868 = vmatmul.mubr.f32.gmra.mxu0 %v3683
      %v3869 = vpop.f32.mrf.mxu0
      %v3870 = vadd.f32 0.0, %v3869
      %v3871 = vpop.f32.mrf.mxu0
      %3872 = vmatprep.mubr.f32.mxu0 0.0
      %3873 = vmatmul.mubr.f32.gmra.mxu0 %v3686
      %v3874 = vpop.f32.mrf.mxu0
      %v3875 = vadd.f32 0.0, %v3874
      %v3876 = vpop.f32.mrf.mxu0
      %3877 = vmatprep.mubr.f32.mxu0 0.0
      %3878 = vmatmul.mubr.f32.gmra.mxu0 %v3689
      %v3879 = vpop.f32.mrf.mxu0
      %v3880 = vadd.f32 0.0, %v3879
      %v3881 = vpop.f32.mrf.mxu0
      %3882 = vmatprep.mubr.f32.mxu0 0.0
      %3883 = vmatmul.mubr.f32.gmra.mxu0 %v3692
      %v3884 = vpop.f32.mrf.mxu0
      %v3885 = vadd.f32 0.0, %v3884
      %v3886 = vpop.f32.mrf.mxu0
      %3887 = vmatprep.mubr.f32.mxu0 0.0
      %3888 = vmatmul.mubr.f32.gmra.mxu0 %v3695
      %v3889 = vpop.f32.mrf.mxu0
      %v3890 = vadd.f32 0.0, %v3889
      %v3891 = vpop.f32.mrf.mxu0
      %3892 = vmatprep.mubr.f32.mxu0 0.0
      %3893 = vmatmul.mubr.f32.gmra.mxu0 %v3698
      %v3894 = vpop.f32.mrf.mxu0
      %v3895 = vadd.f32 0.0, %v3894
      %v3896 = vpop.f32.mrf.mxu0
      %3897 = vmatprep.mubr.f32.mxu0 0.0
      %3898 = vmatmul.mubr.f32.gmra.mxu0 %v3701
      %v3899 = vpop.f32.mrf.mxu0
      %v3900 = vadd.f32 0.0, %v3899
      %v3901 = vpop.f32.mrf.mxu0
      %3902 = vmatprep.mubr.f32.mxu0 0.0
      %3903 = vmatmul.mubr.f32.gmra.mxu0 %v3704
      %v3904 = vpop.f32.mrf.mxu0
      %v3905 = vadd.f32 0.0, %v3904
      %v3906 = vpop.f32.mrf.mxu0
      %3907 = vmatprep.mubr.f32.mxu0 0.0
      %3908 = vmatmul.mubr.f32.gmra.mxu0 %v3707
      %v3909 = vpop.f32.mrf.mxu0
      %v3910 = vadd.f32 0.0, %v3909
      %v3911 = vpop.f32.mrf.mxu0
      %3912 = vmatprep.mubr.f32.mxu0 0.0
      %3913 = vmatmul.mubr.f32.gmra.mxu0 %v3710
      %v3914 = vpop.f32.mrf.mxu0
      %v3915 = vadd.f32 0.0, %v3914
      %v3916 = vpop.f32.mrf.mxu0
      %3917 = vmatprep.mubr.f32.mxu0 0.0
      %3918 = vmatmul.mubr.f32.gmra.mxu0 %v3713
      %v3919 = vpop.f32.mrf.mxu0
      %v3920 = vadd.f32 0.0, %v3919
      %v3921 = vpop.f32.mrf.mxu0
      %3922 = vmatprep.mubr.f32.mxu0 0.0
      %3923 = vmatmul.mubr.f32.gmra.mxu0 %v3716
      %v3924 = vpop.f32.mrf.mxu0
      %v3925 = vadd.f32 0.0, %v3924
      %v3926 = vpop.f32.mrf.mxu0
      %3927 = vmatprep.mubr.f32.mxu0 0.0
      %3928 = vmatmul.mubr.f32.gmra.mxu0 %v3719
      %v3929 = vpop.f32.mrf.mxu0
      %v3930 = vadd.f32 0.0, %v3929
      %v3931 = vpop.f32.mrf.mxu0
      %3932 = vmatprep.mubr.f32.mxu0 0.0
      %3933 = vmatmul.mubr.f32.gmra.mxu0 %v3722
      %v3934 = vpop.f32.mrf.mxu0
      %v3935 = vadd.f32 0.0, %v3934
      %v3936 = vpop.f32.mrf.mxu0
      %3937 = vmatprep.mubr.f32.mxu0 0.0
      %3938 = vmatmul.mubr.f32.gmra.mxu0 %v3725
      %v3939 = vpop.f32.mrf.mxu0
      %v3940 = vadd.f32 0.0, %v3939
      %v3941 = vpop.f32.mrf.mxu0
      %3942 = vmatprep.mubr.f32.mxu0 0.0
      %3943 = vmatmul.mubr.f32.gmra.mxu0 %v3728
      %v3944 = vpop.f32.mrf.mxu0
      %v3945 = vadd.f32 0.0, %v3944
      %v3946 = vpop.f32.mrf.mxu0
      %3947 = vmatprep.mubr.f32.mxu0 0.0
      %3948 = vmatmul.mubr.f32.gmra.mxu0 %v3731
      %v3949 = vpop.f32.mrf.mxu0
      %v3950 = vadd.f32 0.0, %v3949
      %v3951 = vpop.f32.mrf.mxu0
      %3952 = vmatprep.mubr.f32.mxu0 0.0
      %3953 = vmatmul.mubr.f32.gmra.mxu0 %v3734
      %v3954 = vpop.f32.mrf.mxu0
      %v3955 = vadd.f32 0.0, %v3954
      %v3956 = vpop.f32.mrf.mxu0
      %3957 = vmatprep.mubr.f32.mxu0 0.0
      %3958 = vmatmul.mubr.f32.gmra.mxu0 %v3737
      %v3959 = vpop.f32.mrf.mxu0
      %v3960 = vadd.f32 0.0, %v3959
      %v3961 = vpop.f32.mrf.mxu0
      %3962 = vmatprep.mubr.f32.mxu0 0.0
      %3963 = vmatmul.mubr.f32.gmra.mxu0 %v3740
      %v3964 = vpop.f32.mrf.mxu0
      %v3965 = vadd.f32 0.0, %v3964
      %v3966 = vpop.f32.mrf.mxu0
      %3967 = vmatprep.mubr.f32.mxu0 0.0
      %3968 = vmatmul.mubr.f32.gmra.mxu0 %v3743
      %v3969 = vpop.f32.mrf.mxu0
      %v3970 = vadd.f32 0.0, %v3969
      %v3971 = vpop.f32.mrf.mxu0
      %3972 = vdwg.mxu0
      %v3973 = vadd.f32 %v3551, %v3815
      %v3974 = vadd.f32 %v3552, %v3820
      %v3975 = vadd.f32 %v3553, %v3825
      %v3976 = vadd.f32 %v3554, %v3830
      %v3977 = vadd.f32 %v3555, %v3835
      %v3978 = vadd.f32 %v3556, %v3840
      %v3979 = vadd.f32 %v3557, %v3845
      %v3980 = vadd.f32 %v3558, %v3850
      %v3981 = vadd.f32 %v3559, %v3855
      %v3982 = vadd.f32 %v3560, %v3860
      %v3983 = vadd.f32 %v3561, %v3865
      %v3984 = vadd.f32 %v3562, %v3870
      %v3985 = vadd.f32 %v3563, %v3875
      %v3986 = vadd.f32 %v3564, %v3880
      %v3987 = vadd.f32 %v3565, %v3885
      %v3988 = vadd.f32 %v3566, %v3890
      %v3989 = vadd.f32 %v3567, %v3895
      %v3990 = vadd.f32 %v3568, %v3900
      %v3991 = vadd.f32 %v3569, %v3905
      %v3992 = vadd.f32 %v3570, %v3910
      %v3993 = vadd.f32 %v3571, %v3915
      %v3994 = vadd.f32 %v3572, %v3920
      %v3995 = vadd.f32 %v3573, %v3925
      %v3996 = vadd.f32 %v3574, %v3930
      %v3997 = vadd.f32 %v3575, %v3935
      %v3998 = vadd.f32 %v3576, %v3940
      %v3999 = vadd.f32 %v3577, %v3945
      %v4000 = vadd.f32 %v3578, %v3950
      %v4001 = vadd.f32 %v3579, %v3955
      %v4002 = vadd.f32 %v3580, %v3960
      %v4003 = vadd.f32 %v3581, %v3965
      %v4004 = vadd.f32 %v3582, %v3970
      %v4005 = vld [vmem:[#allocation2 + $0x28] sm:$0xff]
      %v4006 = vld [vmem:[#allocation2 + $0x30] sm:$0xff]
      %v4007 = vld [vmem:[#allocation2 + $0x38] sm:$0xff]
      %v4008 = vld [vmem:[#allocation2 + $0x40] sm:$0xff]
      %v4009 = vld [vmem:[#allocation2 + $0x48] sm:$0xff]
      %v4010 = vld [vmem:[#allocation2 + $0x50] sm:$0xff]
      %v4011 = vld [vmem:[#allocation2 + $0x58] sm:$0xff]
      %v4012 = vld [vmem:[#allocation2 + $0x60] sm:$0xff]
      %v4013 = vld [vmem:[#allocation2 + $0x68] sm:$0xff]
      %v4014 = vld [vmem:[#allocation2 + $0x70] sm:$0xff]
      %v4015 = vld [vmem:[#allocation2 + $0x78] sm:$0xff]
      %v4016 = vld [vmem:[#allocation2 + $0x80] sm:$0xff]
      %v4017 = vld [vmem:[#allocation2 + $0x88] sm:$0xff]
      %v4018 = vld [vmem:[#allocation2 + $0x90] sm:$0xff]
      %v4019 = vld [vmem:[#allocation2 + $0x98] sm:$0xff]
      %v4020 = vld [vmem:[#allocation2 + $0xa0] sm:$0xff]
      %v4021 = vld [vmem:[#allocation2 + $0xa8] sm:$0xff]
      %v4022 = vld [vmem:[#allocation2 + $0xb0] sm:$0xff]
      %v4023 = vld [vmem:[#allocation2 + $0xb8] sm:$0xff]
      %v4024 = vld [vmem:[#allocation2 + $0xc0] sm:$0xff]
      %v4025 = vld [vmem:[#allocation2 + $0xc8] sm:$0xff]
      %v4026 = vld [vmem:[#allocation2 + $0xd0] sm:$0xff]
      %v4027 = vld [vmem:[#allocation2 + $0xd8] sm:$0xff]
      %v4028 = vld [vmem:[#allocation2 + $0xe0] sm:$0xff]
      %v4029 = vld [vmem:[#allocation2 + $0xe8] sm:$0xff]
      %v4030 = vld [vmem:[#allocation2 + $0xf0] sm:$0xff]
      %v4031 = vld [vmem:[#allocation2 + $0xf8] sm:$0xff]
      %v4032 = vld [vmem:[#allocation2 + $0x100] sm:$0xff]
      %v4033 = vld [vmem:[#allocation2 + $0x108] sm:$0xff]
      %v4034 = vld [vmem:[#allocation2 + $0x110] sm:$0xff]
      %v4035 = vld [vmem:[#allocation2 + $0x118] sm:$0xff]
      %v4036 = vld [vmem:[#allocation2 + $0x120] sm:$0xff]
      %s4037 = scalar_lea.vmem %s5, 28
      %v4038 = vld [vmem:[%s4037] sm:$0xf]
      %v4040 = vsel %vm400, %v4005, 0
      %v4043 = vsel %vm400, %v4006, 0
      %v4046 = vsel %vm400, %v4007, 0
      %v4049 = vsel %vm400, %v4008, 0
      %v4052 = vsel %vm400, %v4009, 0
      %v4055 = vsel %vm400, %v4010, 0
      %v4058 = vsel %vm400, %v4011, 0
      %v4061 = vsel %vm400, %v4012, 0
      %v4064 = vsel %vm400, %v4013, 0
      %v4067 = vsel %vm400, %v4014, 0
      %v4070 = vsel %vm400, %v4015, 0
      %v4073 = vsel %vm400, %v4016, 0
      %v4076 = vsel %vm400, %v4017, 0
      %v4079 = vsel %vm400, %v4018, 0
      %v4082 = vsel %vm400, %v4019, 0
      %v4085 = vsel %vm400, %v4020, 0
      %v4088 = vsel %vm400, %v4021, 0
      %v4091 = vsel %vm400, %v4022, 0
      %v4094 = vsel %vm400, %v4023, 0
      %v4097 = vsel %vm400, %v4024, 0
      %v4100 = vsel %vm400, %v4025, 0
      %v4103 = vsel %vm400, %v4026, 0
      %v4106 = vsel %vm400, %v4027, 0
      %v4109 = vsel %vm400, %v4028, 0
      %v4112 = vsel %vm400, %v4029, 0
      %v4115 = vsel %vm400, %v4030, 0
      %v4118 = vsel %vm400, %v4031, 0
      %v4121 = vsel %vm400, %v4032, 0
      %v4124 = vsel %vm400, %v4033, 0
      %v4127 = vsel %vm400, %v4034, 0
      %v4130 = vsel %vm400, %v4035, 0
      %v4133 = vsel %vm400, %v4036, 0
      %v4136 = vsel %vm497, %v4038, 0
      %4138 = vmatprep.subr.mxu0 0.0
      %4139 = vmatpush1.msra.mxu0 0.0
      %4140 = vmatprep.subr.mxu0 0.0
      %4141 = vmatpush1.msra.mxu0 0.0
      %4142 = vmatprep.subr.mxu0 0.0
      %4143 = vmatpush1.msra.mxu0 0.0
      %4144 = vmatprep.subr.mxu0 0.0
      %4145 = vmatpush1.msra.mxu0 0.0
      %4146 = vmatprep.subr.mxu0 0.0
      %4147 = vmatpush1.msra.mxu0 0.0
      %4148 = vmatprep.subr.mxu0 0.0
      %4149 = vmatpush1.msra.mxu0 0.0
      %4150 = vmatprep.subr.mxu0 0.0
      %4151 = vmatpush1.msra.mxu0 0.0
      %4152 = vmatprep.subr.mxu0 0.0
      %4153 = vmatpush1.msra.mxu0 0.0
      %4154 = vmatprep.subr.mxu0 0.0
      %4155 = vmatpush1.msra.mxu0 0.0
      %4156 = vmatprep.subr.mxu0 0.0
      %4157 = vmatpush1.msra.mxu0 0.0
      %4158 = vmatprep.subr.mxu0 0.0
      %4159 = vmatpush1.msra.mxu0 0.0
      %4160 = vmatprep.subr.mxu0 0.0
      %4161 = vmatpush1.msra.mxu0 0.0
      %4162 = vmatprep.subr.mxu0 0.0
      %4163 = vmatpush1.msra.mxu0 0.0
      %4164 = vmatprep.subr.mxu0 0.0
      %4165 = vmatpush1.msra.mxu0 0.0
      %4166 = vmatprep.subr.mxu0 0.0
      %4167 = vmatpush1.msra.mxu0 0.0
      %4168 = vmatprep.subr.mxu0 0.0
      %4169 = vmatpush1.msra.mxu0 %v4136
      %4170 = vmatprep.subr.mxu0 0.0
      %4171 = vmatpush2.msra.mxu0 0.0
      %4172 = vmatprep.subr.mxu0 0.0
      %4173 = vmatpush2.msra.mxu0 0.0
      %4174 = vmatprep.subr.mxu0 0.0
      %4175 = vmatpush2.msra.mxu0 0.0
      %4176 = vmatprep.subr.mxu0 0.0
      %4177 = vmatpush2.msra.mxu0 0.0
      %4178 = vmatprep.subr.mxu0 0.0
      %4179 = vmatpush2.msra.mxu0 0.0
      %4180 = vmatprep.subr.mxu0 0.0
      %4181 = vmatpush2.msra.mxu0 0.0
      %4182 = vmatprep.subr.mxu0 0.0
      %4183 = vmatpush2.msra.mxu0 0.0
      %4184 = vmatprep.subr.mxu0 0.0
      %4185 = vmatpush2.msra.mxu0 0.0
      %4186 = vmatprep.subr.mxu0 0.0
      %4187 = vmatpush2.msra.mxu0 0.0
      %4188 = vmatprep.subr.mxu0 0.0
      %4189 = vmatpush2.msra.mxu0 0.0
      %4190 = vmatprep.subr.mxu0 0.0
      %4191 = vmatpush2.msra.mxu0 0.0
      %4192 = vmatprep.subr.mxu0 0.0
      %4193 = vmatpush2.msra.mxu0 0.0
      %4194 = vmatprep.subr.mxu0 0.0
      %4195 = vmatpush2.msra.mxu0 0.0
      %4196 = vmatprep.subr.mxu0 0.0
      %4197 = vmatpush2.msra.mxu0 0.0
      %4198 = vmatprep.subr.mxu0 0.0
      %4199 = vmatpush2.msra.mxu0 0.0
      %4200 = vmatprep.subr.mxu0 0.0
      %4201 = vmatpush2.msra.mxu0 0.0
      %4202 = vmatprep.mubr.f32.mxu0 0.0
      %4203 = vmatmul.mubr.f32.gmra.mxu0 %v4040
      %v4204 = vpop.f32.mrf.mxu0
      %v4205 = vadd.f32 0.0, %v4204
      %v4206 = vpop.f32.mrf.mxu0
      %4207 = vmatprep.mubr.f32.mxu0 0.0
      %4208 = vmatmul.mubr.f32.gmra.mxu0 %v4043
      %v4209 = vpop.f32.mrf.mxu0
      %v4210 = vadd.f32 0.0, %v4209
      %v4211 = vpop.f32.mrf.mxu0
      %4212 = vmatprep.mubr.f32.mxu0 0.0
      %4213 = vmatmul.mubr.f32.gmra.mxu0 %v4046
      %v4214 = vpop.f32.mrf.mxu0
      %v4215 = vadd.f32 0.0, %v4214
      %v4216 = vpop.f32.mrf.mxu0
      %4217 = vmatprep.mubr.f32.mxu0 0.0
      %4218 = vmatmul.mubr.f32.gmra.mxu0 %v4049
      %v4219 = vpop.f32.mrf.mxu0
      %v4220 = vadd.f32 0.0, %v4219
      %v4221 = vpop.f32.mrf.mxu0
      %4222 = vmatprep.mubr.f32.mxu0 0.0
      %4223 = vmatmul.mubr.f32.gmra.mxu0 %v4052
      %v4224 = vpop.f32.mrf.mxu0
      %v4225 = vadd.f32 0.0, %v4224
      %v4226 = vpop.f32.mrf.mxu0
      %4227 = vmatprep.mubr.f32.mxu0 0.0
      %4228 = vmatmul.mubr.f32.gmra.mxu0 %v4055
      %v4229 = vpop.f32.mrf.mxu0
      %v4230 = vadd.f32 0.0, %v4229
      %v4231 = vpop.f32.mrf.mxu0
      %4232 = vmatprep.mubr.f32.mxu0 0.0
      %4233 = vmatmul.mubr.f32.gmra.mxu0 %v4058
      %v4234 = vpop.f32.mrf.mxu0
      %v4235 = vadd.f32 0.0, %v4234
      %v4236 = vpop.f32.mrf.mxu0
      %4237 = vmatprep.mubr.f32.mxu0 0.0
      %4238 = vmatmul.mubr.f32.gmra.mxu0 %v4061
      %v4239 = vpop.f32.mrf.mxu0
      %v4240 = vadd.f32 0.0, %v4239
      %v4241 = vpop.f32.mrf.mxu0
      %4242 = vmatprep.mubr.f32.mxu0 0.0
      %4243 = vmatmul.mubr.f32.gmra.mxu0 %v4064
      %v4244 = vpop.f32.mrf.mxu0
      %v4245 = vadd.f32 0.0, %v4244
      %v4246 = vpop.f32.mrf.mxu0
      %4247 = vmatprep.mubr.f32.mxu0 0.0
      %4248 = vmatmul.mubr.f32.gmra.mxu0 %v4067
      %v4249 = vpop.f32.mrf.mxu0
      %v4250 = vadd.f32 0.0, %v4249
      %v4251 = vpop.f32.mrf.mxu0
      %4252 = vmatprep.mubr.f32.mxu0 0.0
      %4253 = vmatmul.mubr.f32.gmra.mxu0 %v4070
      %v4254 = vpop.f32.mrf.mxu0
      %v4255 = vadd.f32 0.0, %v4254
      %v4256 = vpop.f32.mrf.mxu0
      %4257 = vmatprep.mubr.f32.mxu0 0.0
      %4258 = vmatmul.mubr.f32.gmra.mxu0 %v4073
      %v4259 = vpop.f32.mrf.mxu0
      %v4260 = vadd.f32 0.0, %v4259
      %v4261 = vpop.f32.mrf.mxu0
      %4262 = vmatprep.mubr.f32.mxu0 0.0
      %4263 = vmatmul.mubr.f32.gmra.mxu0 %v4076
      %v4264 = vpop.f32.mrf.mxu0
      %v4265 = vadd.f32 0.0, %v4264
      %v4266 = vpop.f32.mrf.mxu0
      %4267 = vmatprep.mubr.f32.mxu0 0.0
      %4268 = vmatmul.mubr.f32.gmra.mxu0 %v4079
      %v4269 = vpop.f32.mrf.mxu0
      %v4270 = vadd.f32 0.0, %v4269
      %v4271 = vpop.f32.mrf.mxu0
      %4272 = vmatprep.mubr.f32.mxu0 0.0
      %4273 = vmatmul.mubr.f32.gmra.mxu0 %v4082
      %v4274 = vpop.f32.mrf.mxu0
      %v4275 = vadd.f32 0.0, %v4274
      %v4276 = vpop.f32.mrf.mxu0
      %4277 = vmatprep.mubr.f32.mxu0 0.0
      %4278 = vmatmul.mubr.f32.gmra.mxu0 %v4085
      %v4279 = vpop.f32.mrf.mxu0
      %v4280 = vadd.f32 0.0, %v4279
      %v4281 = vpop.f32.mrf.mxu0
      %4282 = vmatprep.mubr.f32.mxu0 0.0
      %4283 = vmatmul.mubr.f32.gmra.mxu0 %v4088
      %v4284 = vpop.f32.mrf.mxu0
      %v4285 = vadd.f32 0.0, %v4284
      %v4286 = vpop.f32.mrf.mxu0
      %4287 = vmatprep.mubr.f32.mxu0 0.0
      %4288 = vmatmul.mubr.f32.gmra.mxu0 %v4091
      %v4289 = vpop.f32.mrf.mxu0
      %v4290 = vadd.f32 0.0, %v4289
      %v4291 = vpop.f32.mrf.mxu0
      %4292 = vmatprep.mubr.f32.mxu0 0.0
      %4293 = vmatmul.mubr.f32.gmra.mxu0 %v4094
      %v4294 = vpop.f32.mrf.mxu0
      %v4295 = vadd.f32 0.0, %v4294
      %v4296 = vpop.f32.mrf.mxu0
      %4297 = vmatprep.mubr.f32.mxu0 0.0
      %4298 = vmatmul.mubr.f32.gmra.mxu0 %v4097
      %v4299 = vpop.f32.mrf.mxu0
      %v4300 = vadd.f32 0.0, %v4299
      %v4301 = vpop.f32.mrf.mxu0
      %4302 = vmatprep.mubr.f32.mxu0 0.0
      %4303 = vmatmul.mubr.f32.gmra.mxu0 %v4100
      %v4304 = vpop.f32.mrf.mxu0
      %v4305 = vadd.f32 0.0, %v4304
      %v4306 = vpop.f32.mrf.mxu0
      %4307 = vmatprep.mubr.f32.mxu0 0.0
      %4308 = vmatmul.mubr.f32.gmra.mxu0 %v4103
      %v4309 = vpop.f32.mrf.mxu0
      %v4310 = vadd.f32 0.0, %v4309
      %v4311 = vpop.f32.mrf.mxu0
      %4312 = vmatprep.mubr.f32.mxu0 0.0
      %4313 = vmatmul.mubr.f32.gmra.mxu0 %v4106
      %v4314 = vpop.f32.mrf.mxu0
      %v4315 = vadd.f32 0.0, %v4314
      %v4316 = vpop.f32.mrf.mxu0
      %4317 = vmatprep.mubr.f32.mxu0 0.0
      %4318 = vmatmul.mubr.f32.gmra.mxu0 %v4109
      %v4319 = vpop.f32.mrf.mxu0
      %v4320 = vadd.f32 0.0, %v4319
      %v4321 = vpop.f32.mrf.mxu0
      %4322 = vmatprep.mubr.f32.mxu0 0.0
      %4323 = vmatmul.mubr.f32.gmra.mxu0 %v4112
      %v4324 = vpop.f32.mrf.mxu0
      %v4325 = vadd.f32 0.0, %v4324
      %v4326 = vpop.f32.mrf.mxu0
      %4327 = vmatprep.mubr.f32.mxu0 0.0
      %4328 = vmatmul.mubr.f32.gmra.mxu0 %v4115
      %v4329 = vpop.f32.mrf.mxu0
      %v4330 = vadd.f32 0.0, %v4329
      %v4331 = vpop.f32.mrf.mxu0
      %4332 = vmatprep.mubr.f32.mxu0 0.0
      %4333 = vmatmul.mubr.f32.gmra.mxu0 %v4118
      %v4334 = vpop.f32.mrf.mxu0
      %v4335 = vadd.f32 0.0, %v4334
      %v4336 = vpop.f32.mrf.mxu0
      %4337 = vmatprep.mubr.f32.mxu0 0.0
      %4338 = vmatmul.mubr.f32.gmra.mxu0 %v4121
      %v4339 = vpop.f32.mrf.mxu0
      %v4340 = vadd.f32 0.0, %v4339
      %v4341 = vpop.f32.mrf.mxu0
      %4342 = vmatprep.mubr.f32.mxu0 0.0
      %4343 = vmatmul.mubr.f32.gmra.mxu0 %v4124
      %v4344 = vpop.f32.mrf.mxu0
      %v4345 = vadd.f32 0.0, %v4344
      %v4346 = vpop.f32.mrf.mxu0
      %4347 = vmatprep.mubr.f32.mxu0 0.0
      %4348 = vmatmul.mubr.f32.gmra.mxu0 %v4127
      %v4349 = vpop.f32.mrf.mxu0
      %v4350 = vadd.f32 0.0, %v4349
      %v4351 = vpop.f32.mrf.mxu0
      %4352 = vmatprep.mubr.f32.mxu0 0.0
      %4353 = vmatmul.mubr.f32.gmra.mxu0 %v4130
      %v4354 = vpop.f32.mrf.mxu0
      %v4355 = vadd.f32 0.0, %v4354
      %v4356 = vpop.f32.mrf.mxu0
      %4357 = vmatprep.mubr.f32.mxu0 0.0
      %4358 = vmatmul.mubr.f32.gmra.mxu0 %v4133
      %v4359 = vpop.f32.mrf.mxu0
      %v4360 = vadd.f32 0.0, %v4359
      %v4361 = vpop.f32.mrf.mxu0
      %4362 = vdwg.mxu0
      %v4363 = vadd.f32 %v3973, %v4205
      %v4364 = vadd.f32 %v3974, %v4210
      %v4365 = vadd.f32 %v3975, %v4215
      %v4366 = vadd.f32 %v3976, %v4220
      %v4367 = vadd.f32 %v3977, %v4225
      %v4368 = vadd.f32 %v3978, %v4230
      %v4369 = vadd.f32 %v3979, %v4235
      %v4370 = vadd.f32 %v3980, %v4240
      %v4371 = vadd.f32 %v3981, %v4245
      %v4372 = vadd.f32 %v3982, %v4250
      %v4373 = vadd.f32 %v3983, %v4255
      %v4374 = vadd.f32 %v3984, %v4260
      %v4375 = vadd.f32 %v3985, %v4265
      %v4376 = vadd.f32 %v3986, %v4270
      %v4377 = vadd.f32 %v3987, %v4275
      %v4378 = vadd.f32 %v3988, %v4280
      %v4379 = vadd.f32 %v3989, %v4285
      %v4380 = vadd.f32 %v3990, %v4290
      %v4381 = vadd.f32 %v3991, %v4295
      %v4382 = vadd.f32 %v3992, %v4300
      %v4383 = vadd.f32 %v3993, %v4305
      %v4384 = vadd.f32 %v3994, %v4310
      %v4385 = vadd.f32 %v3995, %v4315
      %v4386 = vadd.f32 %v3996, %v4320
      %v4387 = vadd.f32 %v3997, %v4325
      %v4388 = vadd.f32 %v3998, %v4330
      %v4389 = vadd.f32 %v3999, %v4335
      %v4390 = vadd.f32 %v4000, %v4340
      %v4391 = vadd.f32 %v4001, %v4345
      %v4392 = vadd.f32 %v4002, %v4350
      %v4393 = vadd.f32 %v4003, %v4355
      %v4394 = vadd.f32 %v4004, %v4360
      %v4395 = vld [vmem:[#allocation2 + $0x29] sm:$0xff]
      %v4396 = vld [vmem:[#allocation2 + $0x31] sm:$0xff]
      %v4397 = vld [vmem:[#allocation2 + $0x39] sm:$0xff]
      %v4398 = vld [vmem:[#allocation2 + $0x41] sm:$0xff]
      %v4399 = vld [vmem:[#allocation2 + $0x49] sm:$0xff]
      %v4400 = vld [vmem:[#allocation2 + $0x51] sm:$0xff]
      %v4401 = vld [vmem:[#allocation2 + $0x59] sm:$0xff]
      %v4402 = vld [vmem:[#allocation2 + $0x61] sm:$0xff]
      %v4403 = vld [vmem:[#allocation2 + $0x69] sm:$0xff]
      %v4404 = vld [vmem:[#allocation2 + $0x71] sm:$0xff]
      %v4405 = vld [vmem:[#allocation2 + $0x79] sm:$0xff]
      %v4406 = vld [vmem:[#allocation2 + $0x81] sm:$0xff]
      %v4407 = vld [vmem:[#allocation2 + $0x89] sm:$0xff]
      %v4408 = vld [vmem:[#allocation2 + $0x91] sm:$0xff]
      %v4409 = vld [vmem:[#allocation2 + $0x99] sm:$0xff]
      %v4410 = vld [vmem:[#allocation2 + $0xa1] sm:$0xff]
      %v4411 = vld [vmem:[#allocation2 + $0xa9] sm:$0xff]
      %v4412 = vld [vmem:[#allocation2 + $0xb1] sm:$0xff]
      %v4413 = vld [vmem:[#allocation2 + $0xb9] sm:$0xff]
      %v4414 = vld [vmem:[#allocation2 + $0xc1] sm:$0xff]
      %v4415 = vld [vmem:[#allocation2 + $0xc9] sm:$0xff]
      %v4416 = vld [vmem:[#allocation2 + $0xd1] sm:$0xff]
      %v4417 = vld [vmem:[#allocation2 + $0xd9] sm:$0xff]
      %v4418 = vld [vmem:[#allocation2 + $0xe1] sm:$0xff]
      %v4419 = vld [vmem:[#allocation2 + $0xe9] sm:$0xff]
      %v4420 = vld [vmem:[#allocation2 + $0xf1] sm:$0xff]
      %v4421 = vld [vmem:[#allocation2 + $0xf9] sm:$0xff]
      %v4422 = vld [vmem:[#allocation2 + $0x101] sm:$0xff]
      %v4423 = vld [vmem:[#allocation2 + $0x109] sm:$0xff]
      %v4424 = vld [vmem:[#allocation2 + $0x111] sm:$0xff]
      %v4425 = vld [vmem:[#allocation2 + $0x119] sm:$0xff]
      %v4426 = vld [vmem:[#allocation2 + $0x121] sm:$0xff]
      %v4427 = vmul.f32 %v4395, %v1802
      %v4428 = vmul.f32 %v4396, %v1807
      %v4429 = vmul.f32 %v4397, %v1812
      %v4430 = vmul.f32 %v4398, %v1817
      %v4431 = vmul.f32 %v4399, %v1822
      %v4432 = vmul.f32 %v4400, %v1827
      %v4433 = vmul.f32 %v4401, %v1832
      %v4434 = vmul.f32 %v4402, %v1837
      %v4435 = vmul.f32 %v4403, %v1842
      %v4436 = vmul.f32 %v4404, %v1847
      %v4437 = vmul.f32 %v4405, %v1852
      %v4438 = vmul.f32 %v4406, %v1857
      %v4439 = vmul.f32 %v4407, %v1862
      %v4440 = vmul.f32 %v4408, %v1867
      %v4441 = vmul.f32 %v4409, %v1872
      %v4442 = vmul.f32 %v4410, %v1877
      %v4443 = vmul.f32 %v4411, %v1882
      %v4444 = vmul.f32 %v4412, %v1887
      %v4445 = vmul.f32 %v4413, %v1892
      %v4446 = vmul.f32 %v4414, %v1897
      %v4447 = vmul.f32 %v4415, %v1902
      %v4448 = vmul.f32 %v4416, %v1907
      %v4449 = vmul.f32 %v4417, %v1912
      %v4450 = vmul.f32 %v4418, %v1917
      %v4451 = vmul.f32 %v4419, %v1922
      %v4452 = vmul.f32 %v4420, %v1927
      %v4453 = vmul.f32 %v4421, %v1932
      %v4454 = vmul.f32 %v4422, %v1937
      %v4455 = vmul.f32 %v4423, %v1942
      %v4456 = vmul.f32 %v4424, %v1947
      %v4457 = vmul.f32 %v4425, %v1952
      %v4458 = vmul.f32 %v4426, %v1957
      %s4459 = scalar_lea.vmem %s5, 32
      %v4460 = vld [vmem:[%s4459] sm:$0xf]
      %v4462 = vsel %vm400, %v4427, 0
      %v4465 = vsel %vm400, %v4428, 0
      %v4468 = vsel %vm400, %v4429, 0
      %v4471 = vsel %vm400, %v4430, 0
      %v4474 = vsel %vm400, %v4431, 0
      %v4477 = vsel %vm400, %v4432, 0
      %v4480 = vsel %vm400, %v4433, 0
      %v4483 = vsel %vm400, %v4434, 0
      %v4486 = vsel %vm400, %v4435, 0
      %v4489 = vsel %vm400, %v4436, 0
      %v4492 = vsel %vm400, %v4437, 0
      %v4495 = vsel %vm400, %v4438, 0
      %v4498 = vsel %vm400, %v4439, 0
      %v4501 = vsel %vm400, %v4440, 0
      %v4504 = vsel %vm400, %v4441, 0
      %v4507 = vsel %vm400, %v4442, 0
      %v4510 = vsel %vm400, %v4443, 0
      %v4513 = vsel %vm400, %v4444, 0
      %v4516 = vsel %vm400, %v4445, 0
      %v4519 = vsel %vm400, %v4446, 0
      %v4522 = vsel %vm400, %v4447, 0
      %v4525 = vsel %vm400, %v4448, 0
      %v4528 = vsel %vm400, %v4449, 0
      %v4531 = vsel %vm400, %v4450, 0
      %v4534 = vsel %vm400, %v4451, 0
      %v4537 = vsel %vm400, %v4452, 0
      %v4540 = vsel %vm400, %v4453, 0
      %v4543 = vsel %vm400, %v4454, 0
      %v4546 = vsel %vm400, %v4455, 0
      %v4549 = vsel %vm400, %v4456, 0
      %v4552 = vsel %vm400, %v4457, 0
      %v4555 = vsel %vm400, %v4458, 0
      %v4558 = vsel %vm497, %v4460, 0
      %4560 = vmatprep.subr.mxu0 0.0
      %4561 = vmatpush1.msra.mxu0 0.0
      %4562 = vmatprep.subr.mxu0 0.0
      %4563 = vmatpush1.msra.mxu0 0.0
      %4564 = vmatprep.subr.mxu0 0.0
      %4565 = vmatpush1.msra.mxu0 0.0
      %4566 = vmatprep.subr.mxu0 0.0
      %4567 = vmatpush1.msra.mxu0 0.0
      %4568 = vmatprep.subr.mxu0 0.0
      %4569 = vmatpush1.msra.mxu0 0.0
      %4570 = vmatprep.subr.mxu0 0.0
      %4571 = vmatpush1.msra.mxu0 0.0
      %4572 = vmatprep.subr.mxu0 0.0
      %4573 = vmatpush1.msra.mxu0 0.0
      %4574 = vmatprep.subr.mxu0 0.0
      %4575 = vmatpush1.msra.mxu0 0.0
      %4576 = vmatprep.subr.mxu0 0.0
      %4577 = vmatpush1.msra.mxu0 0.0
      %4578 = vmatprep.subr.mxu0 0.0
      %4579 = vmatpush1.msra.mxu0 0.0
      %4580 = vmatprep.subr.mxu0 0.0
      %4581 = vmatpush1.msra.mxu0 0.0
      %4582 = vmatprep.subr.mxu0 0.0
      %4583 = vmatpush1.msra.mxu0 0.0
      %4584 = vmatprep.subr.mxu0 0.0
      %4585 = vmatpush1.msra.mxu0 0.0
      %4586 = vmatprep.subr.mxu0 0.0
      %4587 = vmatpush1.msra.mxu0 0.0
      %4588 = vmatprep.subr.mxu0 0.0
      %4589 = vmatpush1.msra.mxu0 0.0
      %4590 = vmatprep.subr.mxu0 0.0
      %4591 = vmatpush1.msra.mxu0 %v4558
      %4592 = vmatprep.subr.mxu0 0.0
      %4593 = vmatpush2.msra.mxu0 0.0
      %4594 = vmatprep.subr.mxu0 0.0
      %4595 = vmatpush2.msra.mxu0 0.0
      %4596 = vmatprep.subr.mxu0 0.0
      %4597 = vmatpush2.msra.mxu0 0.0
      %4598 = vmatprep.subr.mxu0 0.0
      %4599 = vmatpush2.msra.mxu0 0.0
      %4600 = vmatprep.subr.mxu0 0.0
      %4601 = vmatpush2.msra.mxu0 0.0
      %4602 = vmatprep.subr.mxu0 0.0
      %4603 = vmatpush2.msra.mxu0 0.0
      %4604 = vmatprep.subr.mxu0 0.0
      %4605 = vmatpush2.msra.mxu0 0.0
      %4606 = vmatprep.subr.mxu0 0.0
      %4607 = vmatpush2.msra.mxu0 0.0
      %4608 = vmatprep.subr.mxu0 0.0
      %4609 = vmatpush2.msra.mxu0 0.0
      %4610 = vmatprep.subr.mxu0 0.0
      %4611 = vmatpush2.msra.mxu0 0.0
      %4612 = vmatprep.subr.mxu0 0.0
      %4613 = vmatpush2.msra.mxu0 0.0
      %4614 = vmatprep.subr.mxu0 0.0
      %4615 = vmatpush2.msra.mxu0 0.0
      %4616 = vmatprep.subr.mxu0 0.0
      %4617 = vmatpush2.msra.mxu0 0.0
      %4618 = vmatprep.subr.mxu0 0.0
      %4619 = vmatpush2.msra.mxu0 0.0
      %4620 = vmatprep.subr.mxu0 0.0
      %4621 = vmatpush2.msra.mxu0 0.0
      %4622 = vmatprep.subr.mxu0 0.0
      %4623 = vmatpush2.msra.mxu0 0.0
      %4624 = vmatprep.mubr.f32.mxu0 0.0
      %4625 = vmatmul.mubr.f32.gmra.mxu0 %v4462
      %v4626 = vpop.f32.mrf.mxu0
      %v4627 = vadd.f32 0.0, %v4626
      %v4628 = vpop.f32.mrf.mxu0
      %4629 = vmatprep.mubr.f32.mxu0 0.0
      %4630 = vmatmul.mubr.f32.gmra.mxu0 %v4465
      %v4631 = vpop.f32.mrf.mxu0
      %v4632 = vadd.f32 0.0, %v4631
      %v4633 = vpop.f32.mrf.mxu0
      %4634 = vmatprep.mubr.f32.mxu0 0.0
      %4635 = vmatmul.mubr.f32.gmra.mxu0 %v4468
      %v4636 = vpop.f32.mrf.mxu0
      %v4637 = vadd.f32 0.0, %v4636
      %v4638 = vpop.f32.mrf.mxu0
      %4639 = vmatprep.mubr.f32.mxu0 0.0
      %4640 = vmatmul.mubr.f32.gmra.mxu0 %v4471
      %v4641 = vpop.f32.mrf.mxu0
      %v4642 = vadd.f32 0.0, %v4641
      %v4643 = vpop.f32.mrf.mxu0
      %4644 = vmatprep.mubr.f32.mxu0 0.0
      %4645 = vmatmul.mubr.f32.gmra.mxu0 %v4474
      %v4646 = vpop.f32.mrf.mxu0
      %v4647 = vadd.f32 0.0, %v4646
      %v4648 = vpop.f32.mrf.mxu0
      %4649 = vmatprep.mubr.f32.mxu0 0.0
      %4650 = vmatmul.mubr.f32.gmra.mxu0 %v4477
      %v4651 = vpop.f32.mrf.mxu0
      %v4652 = vadd.f32 0.0, %v4651
      %v4653 = vpop.f32.mrf.mxu0
      %4654 = vmatprep.mubr.f32.mxu0 0.0
      %4655 = vmatmul.mubr.f32.gmra.mxu0 %v4480
      %v4656 = vpop.f32.mrf.mxu0
      %v4657 = vadd.f32 0.0, %v4656
      %v4658 = vpop.f32.mrf.mxu0
      %4659 = vmatprep.mubr.f32.mxu0 0.0
      %4660 = vmatmul.mubr.f32.gmra.mxu0 %v4483
      %v4661 = vpop.f32.mrf.mxu0
      %v4662 = vadd.f32 0.0, %v4661
      %v4663 = vpop.f32.mrf.mxu0
      %4664 = vmatprep.mubr.f32.mxu0 0.0
      %4665 = vmatmul.mubr.f32.gmra.mxu0 %v4486
      %v4666 = vpop.f32.mrf.mxu0
      %v4667 = vadd.f32 0.0, %v4666
      %v4668 = vpop.f32.mrf.mxu0
      %4669 = vmatprep.mubr.f32.mxu0 0.0
      %4670 = vmatmul.mubr.f32.gmra.mxu0 %v4489
      %v4671 = vpop.f32.mrf.mxu0
      %v4672 = vadd.f32 0.0, %v4671
      %v4673 = vpop.f32.mrf.mxu0
      %4674 = vmatprep.mubr.f32.mxu0 0.0
      %4675 = vmatmul.mubr.f32.gmra.mxu0 %v4492
      %v4676 = vpop.f32.mrf.mxu0
      %v4677 = vadd.f32 0.0, %v4676
      %v4678 = vpop.f32.mrf.mxu0
      %4679 = vmatprep.mubr.f32.mxu0 0.0
      %4680 = vmatmul.mubr.f32.gmra.mxu0 %v4495
      %v4681 = vpop.f32.mrf.mxu0
      %v4682 = vadd.f32 0.0, %v4681
      %v4683 = vpop.f32.mrf.mxu0
      %4684 = vmatprep.mubr.f32.mxu0 0.0
      %4685 = vmatmul.mubr.f32.gmra.mxu0 %v4498
      %v4686 = vpop.f32.mrf.mxu0
      %v4687 = vadd.f32 0.0, %v4686
      %v4688 = vpop.f32.mrf.mxu0
      %4689 = vmatprep.mubr.f32.mxu0 0.0
      %4690 = vmatmul.mubr.f32.gmra.mxu0 %v4501
      %v4691 = vpop.f32.mrf.mxu0
      %v4692 = vadd.f32 0.0, %v4691
      %v4693 = vpop.f32.mrf.mxu0
      %4694 = vmatprep.mubr.f32.mxu0 0.0
      %4695 = vmatmul.mubr.f32.gmra.mxu0 %v4504
      %v4696 = vpop.f32.mrf.mxu0
      %v4697 = vadd.f32 0.0, %v4696
      %v4698 = vpop.f32.mrf.mxu0
      %4699 = vmatprep.mubr.f32.mxu0 0.0
      %4700 = vmatmul.mubr.f32.gmra.mxu0 %v4507
      %v4701 = vpop.f32.mrf.mxu0
      %v4702 = vadd.f32 0.0, %v4701
      %v4703 = vpop.f32.mrf.mxu0
      %4704 = vmatprep.mubr.f32.mxu0 0.0
      %4705 = vmatmul.mubr.f32.gmra.mxu0 %v4510
      %v4706 = vpop.f32.mrf.mxu0
      %v4707 = vadd.f32 0.0, %v4706
      %v4708 = vpop.f32.mrf.mxu0
      %4709 = vmatprep.mubr.f32.mxu0 0.0
      %4710 = vmatmul.mubr.f32.gmra.mxu0 %v4513
      %v4711 = vpop.f32.mrf.mxu0
      %v4712 = vadd.f32 0.0, %v4711
      %v4713 = vpop.f32.mrf.mxu0
      %4714 = vmatprep.mubr.f32.mxu0 0.0
      %4715 = vmatmul.mubr.f32.gmra.mxu0 %v4516
      %v4716 = vpop.f32.mrf.mxu0
      %v4717 = vadd.f32 0.0, %v4716
      %v4718 = vpop.f32.mrf.mxu0
      %4719 = vmatprep.mubr.f32.mxu0 0.0
      %4720 = vmatmul.mubr.f32.gmra.mxu0 %v4519
      %v4721 = vpop.f32.mrf.mxu0
      %v4722 = vadd.f32 0.0, %v4721
      %v4723 = vpop.f32.mrf.mxu0
      %4724 = vmatprep.mubr.f32.mxu0 0.0
      %4725 = vmatmul.mubr.f32.gmra.mxu0 %v4522
      %v4726 = vpop.f32.mrf.mxu0
      %v4727 = vadd.f32 0.0, %v4726
      %v4728 = vpop.f32.mrf.mxu0
      %4729 = vmatprep.mubr.f32.mxu0 0.0
      %4730 = vmatmul.mubr.f32.gmra.mxu0 %v4525
      %v4731 = vpop.f32.mrf.mxu0
      %v4732 = vadd.f32 0.0, %v4731
      %v4733 = vpop.f32.mrf.mxu0
      %4734 = vmatprep.mubr.f32.mxu0 0.0
      %4735 = vmatmul.mubr.f32.gmra.mxu0 %v4528
      %v4736 = vpop.f32.mrf.mxu0
      %v4737 = vadd.f32 0.0, %v4736
      %v4738 = vpop.f32.mrf.mxu0
      %4739 = vmatprep.mubr.f32.mxu0 0.0
      %4740 = vmatmul.mubr.f32.gmra.mxu0 %v4531
      %v4741 = vpop.f32.mrf.mxu0
      %v4742 = vadd.f32 0.0, %v4741
      %v4743 = vpop.f32.mrf.mxu0
      %4744 = vmatprep.mubr.f32.mxu0 0.0
      %4745 = vmatmul.mubr.f32.gmra.mxu0 %v4534
      %v4746 = vpop.f32.mrf.mxu0
      %v4747 = vadd.f32 0.0, %v4746
      %v4748 = vpop.f32.mrf.mxu0
      %4749 = vmatprep.mubr.f32.mxu0 0.0
      %4750 = vmatmul.mubr.f32.gmra.mxu0 %v4537
      %v4751 = vpop.f32.mrf.mxu0
      %v4752 = vadd.f32 0.0, %v4751
      %v4753 = vpop.f32.mrf.mxu0
      %4754 = vmatprep.mubr.f32.mxu0 0.0
      %4755 = vmatmul.mubr.f32.gmra.mxu0 %v4540
      %v4756 = vpop.f32.mrf.mxu0
      %v4757 = vadd.f32 0.0, %v4756
      %v4758 = vpop.f32.mrf.mxu0
      %4759 = vmatprep.mubr.f32.mxu0 0.0
      %4760 = vmatmul.mubr.f32.gmra.mxu0 %v4543
      %v4761 = vpop.f32.mrf.mxu0
      %v4762 = vadd.f32 0.0, %v4761
      %v4763 = vpop.f32.mrf.mxu0
      %4764 = vmatprep.mubr.f32.mxu0 0.0
      %4765 = vmatmul.mubr.f32.gmra.mxu0 %v4546
      %v4766 = vpop.f32.mrf.mxu0
      %v4767 = vadd.f32 0.0, %v4766
      %v4768 = vpop.f32.mrf.mxu0
      %4769 = vmatprep.mubr.f32.mxu0 0.0
      %4770 = vmatmul.mubr.f32.gmra.mxu0 %v4549
      %v4771 = vpop.f32.mrf.mxu0
      %v4772 = vadd.f32 0.0, %v4771
      %v4773 = vpop.f32.mrf.mxu0
      %4774 = vmatprep.mubr.f32.mxu0 0.0
      %4775 = vmatmul.mubr.f32.gmra.mxu0 %v4552
      %v4776 = vpop.f32.mrf.mxu0
      %v4777 = vadd.f32 0.0, %v4776
      %v4778 = vpop.f32.mrf.mxu0
      %4779 = vmatprep.mubr.f32.mxu0 0.0
      %4780 = vmatmul.mubr.f32.gmra.mxu0 %v4555
      %v4781 = vpop.f32.mrf.mxu0
      %v4782 = vadd.f32 0.0, %v4781
      %v4783 = vpop.f32.mrf.mxu0
      %4784 = vdwg.mxu0
      %v4785 = vadd.f32 %v4363, %v4627
      %v4786 = vadd.f32 %v4364, %v4632
      %v4787 = vadd.f32 %v4365, %v4637
      %v4788 = vadd.f32 %v4366, %v4642
      %v4789 = vadd.f32 %v4367, %v4647
      %v4790 = vadd.f32 %v4368, %v4652
      %v4791 = vadd.f32 %v4369, %v4657
      %v4792 = vadd.f32 %v4370, %v4662
      %v4793 = vadd.f32 %v4371, %v4667
      %v4794 = vadd.f32 %v4372, %v4672
      %v4795 = vadd.f32 %v4373, %v4677
      %v4796 = vadd.f32 %v4374, %v4682
      %v4797 = vadd.f32 %v4375, %v4687
      %v4798 = vadd.f32 %v4376, %v4692
      %v4799 = vadd.f32 %v4377, %v4697
      %v4800 = vadd.f32 %v4378, %v4702
      %v4801 = vadd.f32 %v4379, %v4707
      %v4802 = vadd.f32 %v4380, %v4712
      %v4803 = vadd.f32 %v4381, %v4717
      %v4804 = vadd.f32 %v4382, %v4722
      %v4805 = vadd.f32 %v4383, %v4727
      %v4806 = vadd.f32 %v4384, %v4732
      %v4807 = vadd.f32 %v4385, %v4737
      %v4808 = vadd.f32 %v4386, %v4742
      %v4809 = vadd.f32 %v4387, %v4747
      %v4810 = vadd.f32 %v4388, %v4752
      %v4811 = vadd.f32 %v4389, %v4757
      %v4812 = vadd.f32 %v4390, %v4762
      %v4813 = vadd.f32 %v4391, %v4767
      %v4814 = vadd.f32 %v4392, %v4772
      %v4815 = vadd.f32 %v4393, %v4777
      %v4816 = vadd.f32 %v4394, %v4782
      %v4817 = vld [vmem:[%s6] sm:$0x1]
      %v4819 = vlaneseq
      %v4820 = vshrl.u32 %v4819, 7
      %v4821 = vsub.s32 0, %v4820
      %v4822 = vrot.slane %v4817, %v4821
      %v4824 = vadd.f32 %v4785, %v4822
      %v4825 = vadd.f32 %v4786, %v4822
      %v4826 = vadd.f32 %v4787, %v4822
      %v4827 = vadd.f32 %v4788, %v4822
      %v4828 = vadd.f32 %v4789, %v4822
      %v4829 = vadd.f32 %v4790, %v4822
      %v4830 = vadd.f32 %v4791, %v4822
      %v4831 = vadd.f32 %v4792, %v4822
      %v4832 = vadd.f32 %v4793, %v4822
      %v4833 = vadd.f32 %v4794, %v4822
      %v4834 = vadd.f32 %v4795, %v4822
      %v4835 = vadd.f32 %v4796, %v4822
      %v4836 = vadd.f32 %v4797, %v4822
      %v4837 = vadd.f32 %v4798, %v4822
      %v4838 = vadd.f32 %v4799, %v4822
      %v4839 = vadd.f32 %v4800, %v4822
      %v4840 = vadd.f32 %v4801, %v4822
      %v4841 = vadd.f32 %v4802, %v4822
      %v4842 = vadd.f32 %v4803, %v4822
      %v4843 = vadd.f32 %v4804, %v4822
      %v4844 = vadd.f32 %v4805, %v4822
      %v4845 = vadd.f32 %v4806, %v4822
      %v4846 = vadd.f32 %v4807, %v4822
      %v4847 = vadd.f32 %v4808, %v4822
      %v4848 = vadd.f32 %v4809, %v4822
      %v4849 = vadd.f32 %v4810, %v4822
      %v4850 = vadd.f32 %v4811, %v4822
      %v4851 = vadd.f32 %v4812, %v4822
      %v4852 = vadd.f32 %v4813, %v4822
      %v4853 = vadd.f32 %v4814, %v4822
      %v4854 = vadd.f32 %v4815, %v4822
      %v4855 = vadd.f32 %v4816, %v4822
      %v4856 = vmax.f32 %v4824, 0.0
      %v4857 = vmax.f32 %v4825, 0.0
      %v4858 = vmax.f32 %v4826, 0.0
      %v4859 = vmax.f32 %v4827, 0.0
      %v4860 = vmax.f32 %v4828, 0.0
      %v4861 = vmax.f32 %v4829, 0.0
      %v4862 = vmax.f32 %v4830, 0.0
      %v4863 = vmax.f32 %v4831, 0.0
      %v4864 = vmax.f32 %v4832, 0.0
      %v4865 = vmax.f32 %v4833, 0.0
      %v4866 = vmax.f32 %v4834, 0.0
      %v4867 = vmax.f32 %v4835, 0.0
      %v4868 = vmax.f32 %v4836, 0.0
      %v4869 = vmax.f32 %v4837, 0.0
      %v4870 = vmax.f32 %v4838, 0.0
      %v4871 = vmax.f32 %v4839, 0.0
      %v4872 = vmax.f32 %v4840, 0.0
      %v4873 = vmax.f32 %v4841, 0.0
      %v4874 = vmax.f32 %v4842, 0.0
      %v4875 = vmax.f32 %v4843, 0.0
      %v4876 = vmax.f32 %v4844, 0.0
      %v4877 = vmax.f32 %v4845, 0.0
      %v4878 = vmax.f32 %v4846, 0.0
      %v4879 = vmax.f32 %v4847, 0.0
      %v4880 = vmax.f32 %v4848, 0.0
      %v4881 = vmax.f32 %v4849, 0.0
      %v4882 = vmax.f32 %v4850, 0.0
      %v4883 = vmax.f32 %v4851, 0.0
      %v4884 = vmax.f32 %v4852, 0.0
      %v4885 = vmax.f32 %v4853, 0.0
      %v4886 = vmax.f32 %v4854, 0.0
      %v4887 = vmax.f32 %v4855, 0.0
      %v4888 = vld [vmem:[%s7] sm:$0xf]
      %v4889 = vld [vmem:[%s8] sm:$0x1]
      %v4891 = vlaneseq
      %v4892 = vshrl.u32 %v4891, 7
      %v4893 = vsub.s32 0, %v4892
      %v4894 = vrot.slane %v4889, %v4893
      %v4897 = vsel %vm400, %v4856, 0
      %v4900 = vsel %vm400, %v4857, 0
      %v4903 = vsel %vm400, %v4858, 0
      %v4906 = vsel %vm400, %v4859, 0
      %v4909 = vsel %vm400, %v4860, 0
      %v4912 = vsel %vm400, %v4861, 0
      %v4915 = vsel %vm400, %v4862, 0
      %v4918 = vsel %vm400, %v4863, 0
      %v4921 = vsel %vm400, %v4864, 0
      %v4924 = vsel %vm400, %v4865, 0
      %v4927 = vsel %vm400, %v4866, 0
      %v4930 = vsel %vm400, %v4867, 0
      %v4933 = vsel %vm400, %v4868, 0
      %v4936 = vsel %vm400, %v4869, 0
      %v4939 = vsel %vm400, %v4870, 0
      %v4942 = vsel %vm400, %v4871, 0
      %v4945 = vsel %vm400, %v4872, 0
      %v4948 = vsel %vm400, %v4873, 0
      %v4951 = vsel %vm400, %v4874, 0
      %v4954 = vsel %vm400, %v4875, 0
      %v4957 = vsel %vm400, %v4876, 0
      %v4960 = vsel %vm400, %v4877, 0
      %v4963 = vsel %vm400, %v4878, 0
      %v4966 = vsel %vm400, %v4879, 0
      %v4969 = vsel %vm400, %v4880, 0
      %v4972 = vsel %vm400, %v4881, 0
      %v4975 = vsel %vm400, %v4882, 0
      %v4978 = vsel %vm400, %v4883, 0
      %v4981 = vsel %vm400, %v4884, 0
      %v4984 = vsel %vm400, %v4885, 0
      %v4987 = vsel %vm400, %v4886, 0
      %v4990 = vsel %vm400, %v4887, 0
      %v4993 = vsel %vm497, %v4888, 0
      %4995 = vmatprep.subr.mxu0 0.0
      %4996 = vmatpush1.msra.mxu0 0.0
      %4997 = vmatprep.subr.mxu0 0.0
      %4998 = vmatpush1.msra.mxu0 0.0
      %4999 = vmatprep.subr.mxu0 0.0
      %5000 = vmatpush1.msra.mxu0 0.0
      %5001 = vmatprep.subr.mxu0 0.0
      %5002 = vmatpush1.msra.mxu0 0.0
      %5003 = vmatprep.subr.mxu0 0.0
      %5004 = vmatpush1.msra.mxu0 0.0
      %5005 = vmatprep.subr.mxu0 0.0
      %5006 = vmatpush1.msra.mxu0 0.0
      %5007 = vmatprep.subr.mxu0 0.0
      %5008 = vmatpush1.msra.mxu0 0.0
      %5009 = vmatprep.subr.mxu0 0.0
      %5010 = vmatpush1.msra.mxu0 0.0
      %5011 = vmatprep.subr.mxu0 0.0
      %5012 = vmatpush1.msra.mxu0 0.0
      %5013 = vmatprep.subr.mxu0 0.0
      %5014 = vmatpush1.msra.mxu0 0.0
      %5015 = vmatprep.subr.mxu0 0.0
      %5016 = vmatpush1.msra.mxu0 0.0
      %5017 = vmatprep.subr.mxu0 0.0
      %5018 = vmatpush1.msra.mxu0 0.0
      %5019 = vmatprep.subr.mxu0 0.0
      %5020 = vmatpush1.msra.mxu0 0.0
      %5021 = vmatprep.subr.mxu0 0.0
      %5022 = vmatpush1.msra.mxu0 0.0
      %5023 = vmatprep.subr.mxu0 0.0
      %5024 = vmatpush1.msra.mxu0 0.0
      %5025 = vmatprep.subr.mxu0 0.0
      %5026 = vmatpush1.msra.mxu0 %v4993
      %5027 = vmatprep.subr.mxu0 0.0
      %5028 = vmatpush2.msra.mxu0 0.0
      %5029 = vmatprep.subr.mxu0 0.0
      %5030 = vmatpush2.msra.mxu0 0.0
      %5031 = vmatprep.subr.mxu0 0.0
      %5032 = vmatpush2.msra.mxu0 0.0
      %5033 = vmatprep.subr.mxu0 0.0
      %5034 = vmatpush2.msra.mxu0 0.0
      %5035 = vmatprep.subr.mxu0 0.0
      %5036 = vmatpush2.msra.mxu0 0.0
      %5037 = vmatprep.subr.mxu0 0.0
      %5038 = vmatpush2.msra.mxu0 0.0
      %5039 = vmatprep.subr.mxu0 0.0
      %5040 = vmatpush2.msra.mxu0 0.0
      %5041 = vmatprep.subr.mxu0 0.0
      %5042 = vmatpush2.msra.mxu0 0.0
      %5043 = vmatprep.subr.mxu0 0.0
      %5044 = vmatpush2.msra.mxu0 0.0
      %5045 = vmatprep.subr.mxu0 0.0
      %5046 = vmatpush2.msra.mxu0 0.0
      %5047 = vmatprep.subr.mxu0 0.0
      %5048 = vmatpush2.msra.mxu0 0.0
      %5049 = vmatprep.subr.mxu0 0.0
      %5050 = vmatpush2.msra.mxu0 0.0
      %5051 = vmatprep.subr.mxu0 0.0
      %5052 = vmatpush2.msra.mxu0 0.0
      %5053 = vmatprep.subr.mxu0 0.0
      %5054 = vmatpush2.msra.mxu0 0.0
      %5055 = vmatprep.subr.mxu0 0.0
      %5056 = vmatpush2.msra.mxu0 0.0
      %5057 = vmatprep.subr.mxu0 0.0
      %5058 = vmatpush2.msra.mxu0 0.0
      %5059 = vmatprep.mubr.f32.mxu0 0.0
      %5060 = vmatmul.mubr.f32.gmra.mxu0 %v4897
      %v5061 = vpop.f32.mrf.mxu0
      %v5062 = vadd.f32 %v4894, %v5061
      %v5063 = vpop.f32.mrf.mxu0
      %5064 = vmatprep.mubr.f32.mxu0 0.0
      %5065 = vmatmul.mubr.f32.gmra.mxu0 %v4900
      %v5066 = vpop.f32.mrf.mxu0
      %v5067 = vadd.f32 %v4894, %v5066
      %v5068 = vpop.f32.mrf.mxu0
      %5069 = vmatprep.mubr.f32.mxu0 0.0
      %5070 = vmatmul.mubr.f32.gmra.mxu0 %v4903
      %v5071 = vpop.f32.mrf.mxu0
      %v5072 = vadd.f32 %v4894, %v5071
      %v5073 = vpop.f32.mrf.mxu0
      %5074 = vmatprep.mubr.f32.mxu0 0.0
      %5075 = vmatmul.mubr.f32.gmra.mxu0 %v4906
      %v5076 = vpop.f32.mrf.mxu0
      %v5077 = vadd.f32 %v4894, %v5076
      %v5078 = vpop.f32.mrf.mxu0
      %5079 = vmatprep.mubr.f32.mxu0 0.0
      %5080 = vmatmul.mubr.f32.gmra.mxu0 %v4909
      %v5081 = vpop.f32.mrf.mxu0
      %v5082 = vadd.f32 %v4894, %v5081
      %v5083 = vpop.f32.mrf.mxu0
      %5084 = vmatprep.mubr.f32.mxu0 0.0
      %5085 = vmatmul.mubr.f32.gmra.mxu0 %v4912
      %v5086 = vpop.f32.mrf.mxu0
      %v5087 = vadd.f32 %v4894, %v5086
      %v5088 = vpop.f32.mrf.mxu0
      %5089 = vmatprep.mubr.f32.mxu0 0.0
      %5090 = vmatmul.mubr.f32.gmra.mxu0 %v4915
      %v5091 = vpop.f32.mrf.mxu0
      %v5092 = vadd.f32 %v4894, %v5091
      %v5093 = vpop.f32.mrf.mxu0
      %5094 = vmatprep.mubr.f32.mxu0 0.0
      %5095 = vmatmul.mubr.f32.gmra.mxu0 %v4918
      %v5096 = vpop.f32.mrf.mxu0
      %v5097 = vadd.f32 %v4894, %v5096
      %v5098 = vpop.f32.mrf.mxu0
      %5099 = vmatprep.mubr.f32.mxu0 0.0
      %5100 = vmatmul.mubr.f32.gmra.mxu0 %v4921
      %v5101 = vpop.f32.mrf.mxu0
      %v5102 = vadd.f32 %v4894, %v5101
      %v5103 = vpop.f32.mrf.mxu0
      %5104 = vmatprep.mubr.f32.mxu0 0.0
      %5105 = vmatmul.mubr.f32.gmra.mxu0 %v4924
      %v5106 = vpop.f32.mrf.mxu0
      %v5107 = vadd.f32 %v4894, %v5106
      %v5108 = vpop.f32.mrf.mxu0
      %5109 = vmatprep.mubr.f32.mxu0 0.0
      %5110 = vmatmul.mubr.f32.gmra.mxu0 %v4927
      %v5111 = vpop.f32.mrf.mxu0
      %v5112 = vadd.f32 %v4894, %v5111
      %v5113 = vpop.f32.mrf.mxu0
      %5114 = vmatprep.mubr.f32.mxu0 0.0
      %5115 = vmatmul.mubr.f32.gmra.mxu0 %v4930
      %v5116 = vpop.f32.mrf.mxu0
      %v5117 = vadd.f32 %v4894, %v5116
      %v5118 = vpop.f32.mrf.mxu0
      %5119 = vmatprep.mubr.f32.mxu0 0.0
      %5120 = vmatmul.mubr.f32.gmra.mxu0 %v4933
      %v5121 = vpop.f32.mrf.mxu0
      %v5122 = vadd.f32 %v4894, %v5121
      %v5123 = vpop.f32.mrf.mxu0
      %5124 = vmatprep.mubr.f32.mxu0 0.0
      %5125 = vmatmul.mubr.f32.gmra.mxu0 %v4936
      %v5126 = vpop.f32.mrf.mxu0
      %v5127 = vadd.f32 %v4894, %v5126
      %v5128 = vpop.f32.mrf.mxu0
      %5129 = vmatprep.mubr.f32.mxu0 0.0
      %5130 = vmatmul.mubr.f32.gmra.mxu0 %v4939
      %v5131 = vpop.f32.mrf.mxu0
      %v5132 = vadd.f32 %v4894, %v5131
      %v5133 = vpop.f32.mrf.mxu0
      %5134 = vmatprep.mubr.f32.mxu0 0.0
      %5135 = vmatmul.mubr.f32.gmra.mxu0 %v4942
      %v5136 = vpop.f32.mrf.mxu0
      %v5137 = vadd.f32 %v4894, %v5136
      %v5138 = vpop.f32.mrf.mxu0
      %5139 = vmatprep.mubr.f32.mxu0 0.0
      %5140 = vmatmul.mubr.f32.gmra.mxu0 %v4945
      %v5141 = vpop.f32.mrf.mxu0
      %v5142 = vadd.f32 %v4894, %v5141
      %v5143 = vpop.f32.mrf.mxu0
      %5144 = vmatprep.mubr.f32.mxu0 0.0
      %5145 = vmatmul.mubr.f32.gmra.mxu0 %v4948
      %v5146 = vpop.f32.mrf.mxu0
      %v5147 = vadd.f32 %v4894, %v5146
      %v5148 = vpop.f32.mrf.mxu0
      %5149 = vmatprep.mubr.f32.mxu0 0.0
      %5150 = vmatmul.mubr.f32.gmra.mxu0 %v4951
      %v5151 = vpop.f32.mrf.mxu0
      %v5152 = vadd.f32 %v4894, %v5151
      %v5153 = vpop.f32.mrf.mxu0
      %5154 = vmatprep.mubr.f32.mxu0 0.0
      %5155 = vmatmul.mubr.f32.gmra.mxu0 %v4954
      %v5156 = vpop.f32.mrf.mxu0
      %v5157 = vadd.f32 %v4894, %v5156
      %v5158 = vpop.f32.mrf.mxu0
      %5159 = vmatprep.mubr.f32.mxu0 0.0
      %5160 = vmatmul.mubr.f32.gmra.mxu0 %v4957
      %v5161 = vpop.f32.mrf.mxu0
      %v5162 = vadd.f32 %v4894, %v5161
      %v5163 = vpop.f32.mrf.mxu0
      %5164 = vmatprep.mubr.f32.mxu0 0.0
      %5165 = vmatmul.mubr.f32.gmra.mxu0 %v4960
      %v5166 = vpop.f32.mrf.mxu0
      %v5167 = vadd.f32 %v4894, %v5166
      %v5168 = vpop.f32.mrf.mxu0
      %5169 = vmatprep.mubr.f32.mxu0 0.0
      %5170 = vmatmul.mubr.f32.gmra.mxu0 %v4963
      %v5171 = vpop.f32.mrf.mxu0
      %v5172 = vadd.f32 %v4894, %v5171
      %v5173 = vpop.f32.mrf.mxu0
      %5174 = vmatprep.mubr.f32.mxu0 0.0
      %5175 = vmatmul.mubr.f32.gmra.mxu0 %v4966
      %v5176 = vpop.f32.mrf.mxu0
      %v5177 = vadd.f32 %v4894, %v5176
      %v5178 = vpop.f32.mrf.mxu0
      %5179 = vmatprep.mubr.f32.mxu0 0.0
      %5180 = vmatmul.mubr.f32.gmra.mxu0 %v4969
      %v5181 = vpop.f32.mrf.mxu0
      %v5182 = vadd.f32 %v4894, %v5181
      %v5183 = vpop.f32.mrf.mxu0
      %5184 = vmatprep.mubr.f32.mxu0 0.0
      %5185 = vmatmul.mubr.f32.gmra.mxu0 %v4972
      %v5186 = vpop.f32.mrf.mxu0
      %v5187 = vadd.f32 %v4894, %v5186
      %v5188 = vpop.f32.mrf.mxu0
      %5189 = vmatprep.mubr.f32.mxu0 0.0
      %5190 = vmatmul.mubr.f32.gmra.mxu0 %v4975
      %v5191 = vpop.f32.mrf.mxu0
      %v5192 = vadd.f32 %v4894, %v5191
      %v5193 = vpop.f32.mrf.mxu0
      %5194 = vmatprep.mubr.f32.mxu0 0.0
      %5195 = vmatmul.mubr.f32.gmra.mxu0 %v4978
      %v5196 = vpop.f32.mrf.mxu0
      %v5197 = vadd.f32 %v4894, %v5196
      %v5198 = vpop.f32.mrf.mxu0
      %5199 = vmatprep.mubr.f32.mxu0 0.0
      %5200 = vmatmul.mubr.f32.gmra.mxu0 %v4981
      %v5201 = vpop.f32.mrf.mxu0
      %v5202 = vadd.f32 %v4894, %v5201
      %v5203 = vpop.f32.mrf.mxu0
      %5204 = vmatprep.mubr.f32.mxu0 0.0
      %5205 = vmatmul.mubr.f32.gmra.mxu0 %v4984
      %v5206 = vpop.f32.mrf.mxu0
      %v5207 = vadd.f32 %v4894, %v5206
      %v5208 = vpop.f32.mrf.mxu0
      %5209 = vmatprep.mubr.f32.mxu0 0.0
      %5210 = vmatmul.mubr.f32.gmra.mxu0 %v4987
      %v5211 = vpop.f32.mrf.mxu0
      %v5212 = vadd.f32 %v4894, %v5211
      %v5213 = vpop.f32.mrf.mxu0
      %5214 = vmatprep.mubr.f32.mxu0 0.0
      %5215 = vmatmul.mubr.f32.gmra.mxu0 %v4990
      %v5216 = vpop.f32.mrf.mxu0
      %v5217 = vadd.f32 %v4894, %v5216
      %v5218 = vpop.f32.mrf.mxu0
      %5219 = vdwg.mxu0
      %v5220 = vld [vmem:[%s9] sm:$0xf]
      %v5222 = vsel %vm497, %v5220, 0
      %5224 = vmatprep.subr.mxu0 0.0
      %5225 = vmatpush1.msra.mxu0 0.0
      %5226 = vmatprep.subr.mxu0 0.0
      %5227 = vmatpush1.msra.mxu0 0.0
      %5228 = vmatprep.subr.mxu0 0.0
      %5229 = vmatpush1.msra.mxu0 0.0
      %5230 = vmatprep.subr.mxu0 0.0
      %5231 = vmatpush1.msra.mxu0 0.0
      %5232 = vmatprep.subr.mxu0 0.0
      %5233 = vmatpush1.msra.mxu0 0.0
      %5234 = vmatprep.subr.mxu0 0.0
      %5235 = vmatpush1.msra.mxu0 0.0
      %5236 = vmatprep.subr.mxu0 0.0
      %5237 = vmatpush1.msra.mxu0 0.0
      %5238 = vmatprep.subr.mxu0 0.0
      %5239 = vmatpush1.msra.mxu0 0.0
      %5240 = vmatprep.subr.mxu0 0.0
      %5241 = vmatpush1.msra.mxu0 0.0
      %5242 = vmatprep.subr.mxu0 0.0
      %5243 = vmatpush1.msra.mxu0 0.0
      %5244 = vmatprep.subr.mxu0 0.0
      %5245 = vmatpush1.msra.mxu0 0.0
      %5246 = vmatprep.subr.mxu0 0.0
      %5247 = vmatpush1.msra.mxu0 0.0
      %5248 = vmatprep.subr.mxu0 0.0
      %5249 = vmatpush1.msra.mxu0 0.0
      %5250 = vmatprep.subr.mxu0 0.0
      %5251 = vmatpush1.msra.mxu0 0.0
      %5252 = vmatprep.subr.mxu0 0.0
      %5253 = vmatpush1.msra.mxu0 0.0
      %5254 = vmatprep.subr.mxu0 0.0
      %5255 = vmatpush1.msra.mxu0 %v5222
      %5256 = vmatprep.subr.mxu0 0.0
      %5257 = vmatpush2.msra.mxu0 0.0
      %5258 = vmatprep.subr.mxu0 0.0
      %5259 = vmatpush2.msra.mxu0 0.0
      %5260 = vmatprep.subr.mxu0 0.0
      %5261 = vmatpush2.msra.mxu0 0.0
      %5262 = vmatprep.subr.mxu0 0.0
      %5263 = vmatpush2.msra.mxu0 0.0
      %5264 = vmatprep.subr.mxu0 0.0
      %5265 = vmatpush2.msra.mxu0 0.0
      %5266 = vmatprep.subr.mxu0 0.0
      %5267 = vmatpush2.msra.mxu0 0.0
      %5268 = vmatprep.subr.mxu0 0.0
      %5269 = vmatpush2.msra.mxu0 0.0
      %5270 = vmatprep.subr.mxu0 0.0
      %5271 = vmatpush2.msra.mxu0 0.0
      %5272 = vmatprep.subr.mxu0 0.0
      %5273 = vmatpush2.msra.mxu0 0.0
      %5274 = vmatprep.subr.mxu0 0.0
      %5275 = vmatpush2.msra.mxu0 0.0
      %5276 = vmatprep.subr.mxu0 0.0
      %5277 = vmatpush2.msra.mxu0 0.0
      %5278 = vmatprep.subr.mxu0 0.0
      %5279 = vmatpush2.msra.mxu0 0.0
      %5280 = vmatprep.subr.mxu0 0.0
      %5281 = vmatpush2.msra.mxu0 0.0
      %5282 = vmatprep.subr.mxu0 0.0
      %5283 = vmatpush2.msra.mxu0 0.0
      %5284 = vmatprep.subr.mxu0 0.0
      %5285 = vmatpush2.msra.mxu0 0.0
      %5286 = vmatprep.subr.mxu0 0.0
      %5287 = vmatpush2.msra.mxu0 0.0
      %5288 = vmatprep.mubr.f32.mxu0 0.0
      %5289 = vmatmul.mubr.f32.gmra.mxu0 %v402
      %v5290 = vpop.f32.mrf.mxu0
      %v5291 = vadd.f32 0.0, %v5290
      %v5292 = vpop.f32.mrf.mxu0
      %5293 = vmatprep.mubr.f32.mxu0 0.0
      %5294 = vmatmul.mubr.f32.gmra.mxu0 %v405
      %v5295 = vpop.f32.mrf.mxu0
      %v5296 = vadd.f32 0.0, %v5295
      %v5297 = vpop.f32.mrf.mxu0
      %5298 = vmatprep.mubr.f32.mxu0 0.0
      %5299 = vmatmul.mubr.f32.gmra.mxu0 %v408
      %v5300 = vpop.f32.mrf.mxu0
      %v5301 = vadd.f32 0.0, %v5300
      %v5302 = vpop.f32.mrf.mxu0
      %5303 = vmatprep.mubr.f32.mxu0 0.0
      %5304 = vmatmul.mubr.f32.gmra.mxu0 %v411
      %v5305 = vpop.f32.mrf.mxu0
      %v5306 = vadd.f32 0.0, %v5305
      %v5307 = vpop.f32.mrf.mxu0
      %5308 = vmatprep.mubr.f32.mxu0 0.0
      %5309 = vmatmul.mubr.f32.gmra.mxu0 %v414
      %v5310 = vpop.f32.mrf.mxu0
      %v5311 = vadd.f32 0.0, %v5310
      %v5312 = vpop.f32.mrf.mxu0
      %5313 = vmatprep.mubr.f32.mxu0 0.0
      %5314 = vmatmul.mubr.f32.gmra.mxu0 %v417
      %v5315 = vpop.f32.mrf.mxu0
      %v5316 = vadd.f32 0.0, %v5315
      %v5317 = vpop.f32.mrf.mxu0
      %5318 = vmatprep.mubr.f32.mxu0 0.0
      %5319 = vmatmul.mubr.f32.gmra.mxu0 %v420
      %v5320 = vpop.f32.mrf.mxu0
      %v5321 = vadd.f32 0.0, %v5320
      %v5322 = vpop.f32.mrf.mxu0
      %5323 = vmatprep.mubr.f32.mxu0 0.0
      %5324 = vmatmul.mubr.f32.gmra.mxu0 %v423
      %v5325 = vpop.f32.mrf.mxu0
      %v5326 = vadd.f32 0.0, %v5325
      %v5327 = vpop.f32.mrf.mxu0
      %5328 = vmatprep.mubr.f32.mxu0 0.0
      %5329 = vmatmul.mubr.f32.gmra.mxu0 %v426
      %v5330 = vpop.f32.mrf.mxu0
      %v5331 = vadd.f32 0.0, %v5330
      %v5332 = vpop.f32.mrf.mxu0
      %5333 = vmatprep.mubr.f32.mxu0 0.0
      %5334 = vmatmul.mubr.f32.gmra.mxu0 %v429
      %v5335 = vpop.f32.mrf.mxu0
      %v5336 = vadd.f32 0.0, %v5335
      %v5337 = vpop.f32.mrf.mxu0
      %5338 = vmatprep.mubr.f32.mxu0 0.0
      %5339 = vmatmul.mubr.f32.gmra.mxu0 %v432
      %v5340 = vpop.f32.mrf.mxu0
      %v5341 = vadd.f32 0.0, %v5340
      %v5342 = vpop.f32.mrf.mxu0
      %5343 = vmatprep.mubr.f32.mxu0 0.0
      %5344 = vmatmul.mubr.f32.gmra.mxu0 %v435
      %v5345 = vpop.f32.mrf.mxu0
      %v5346 = vadd.f32 0.0, %v5345
      %v5347 = vpop.f32.mrf.mxu0
      %5348 = vmatprep.mubr.f32.mxu0 0.0
      %5349 = vmatmul.mubr.f32.gmra.mxu0 %v438
      %v5350 = vpop.f32.mrf.mxu0
      %v5351 = vadd.f32 0.0, %v5350
      %v5352 = vpop.f32.mrf.mxu0
      %5353 = vmatprep.mubr.f32.mxu0 0.0
      %5354 = vmatmul.mubr.f32.gmra.mxu0 %v441
      %v5355 = vpop.f32.mrf.mxu0
      %v5356 = vadd.f32 0.0, %v5355
      %v5357 = vpop.f32.mrf.mxu0
      %5358 = vmatprep.mubr.f32.mxu0 0.0
      %5359 = vmatmul.mubr.f32.gmra.mxu0 %v444
      %v5360 = vpop.f32.mrf.mxu0
      %v5361 = vadd.f32 0.0, %v5360
      %v5362 = vpop.f32.mrf.mxu0
      %5363 = vmatprep.mubr.f32.mxu0 0.0
      %5364 = vmatmul.mubr.f32.gmra.mxu0 %v447
      %v5365 = vpop.f32.mrf.mxu0
      %v5366 = vadd.f32 0.0, %v5365
      %v5367 = vpop.f32.mrf.mxu0
      %5368 = vmatprep.mubr.f32.mxu0 0.0
      %5369 = vmatmul.mubr.f32.gmra.mxu0 %v450
      %v5370 = vpop.f32.mrf.mxu0
      %v5371 = vadd.f32 0.0, %v5370
      %v5372 = vpop.f32.mrf.mxu0
      %5373 = vmatprep.mubr.f32.mxu0 0.0
      %5374 = vmatmul.mubr.f32.gmra.mxu0 %v453
      %v5375 = vpop.f32.mrf.mxu0
      %v5376 = vadd.f32 0.0, %v5375
      %v5377 = vpop.f32.mrf.mxu0
      %5378 = vmatprep.mubr.f32.mxu0 0.0
      %5379 = vmatmul.mubr.f32.gmra.mxu0 %v456
      %v5380 = vpop.f32.mrf.mxu0
      %v5381 = vadd.f32 0.0, %v5380
      %v5382 = vpop.f32.mrf.mxu0
      %5383 = vmatprep.mubr.f32.mxu0 0.0
      %5384 = vmatmul.mubr.f32.gmra.mxu0 %v459
      %v5385 = vpop.f32.mrf.mxu0
      %v5386 = vadd.f32 0.0, %v5385
      %v5387 = vpop.f32.mrf.mxu0
      %5388 = vmatprep.mubr.f32.mxu0 0.0
      %5389 = vmatmul.mubr.f32.gmra.mxu0 %v462
      %v5390 = vpop.f32.mrf.mxu0
      %v5391 = vadd.f32 0.0, %v5390
      %v5392 = vpop.f32.mrf.mxu0
      %5393 = vmatprep.mubr.f32.mxu0 0.0
      %5394 = vmatmul.mubr.f32.gmra.mxu0 %v465
      %v5395 = vpop.f32.mrf.mxu0
      %v5396 = vadd.f32 0.0, %v5395
      %v5397 = vpop.f32.mrf.mxu0
      %5398 = vmatprep.mubr.f32.mxu0 0.0
      %5399 = vmatmul.mubr.f32.gmra.mxu0 %v468
      %v5400 = vpop.f32.mrf.mxu0
      %v5401 = vadd.f32 0.0, %v5400
      %v5402 = vpop.f32.mrf.mxu0
      %5403 = vmatprep.mubr.f32.mxu0 0.0
      %5404 = vmatmul.mubr.f32.gmra.mxu0 %v471
      %v5405 = vpop.f32.mrf.mxu0
      %v5406 = vadd.f32 0.0, %v5405
      %v5407 = vpop.f32.mrf.mxu0
      %5408 = vmatprep.mubr.f32.mxu0 0.0
      %5409 = vmatmul.mubr.f32.gmra.mxu0 %v474
      %v5410 = vpop.f32.mrf.mxu0
      %v5411 = vadd.f32 0.0, %v5410
      %v5412 = vpop.f32.mrf.mxu0
      %5413 = vmatprep.mubr.f32.mxu0 0.0
      %5414 = vmatmul.mubr.f32.gmra.mxu0 %v477
      %v5415 = vpop.f32.mrf.mxu0
      %v5416 = vadd.f32 0.0, %v5415
      %v5417 = vpop.f32.mrf.mxu0
      %5418 = vmatprep.mubr.f32.mxu0 0.0
      %5419 = vmatmul.mubr.f32.gmra.mxu0 %v480
      %v5420 = vpop.f32.mrf.mxu0
      %v5421 = vadd.f32 0.0, %v5420
      %v5422 = vpop.f32.mrf.mxu0
      %5423 = vmatprep.mubr.f32.mxu0 0.0
      %5424 = vmatmul.mubr.f32.gmra.mxu0 %v483
      %v5425 = vpop.f32.mrf.mxu0
      %v5426 = vadd.f32 0.0, %v5425
      %v5427 = vpop.f32.mrf.mxu0
      %5428 = vmatprep.mubr.f32.mxu0 0.0
      %5429 = vmatmul.mubr.f32.gmra.mxu0 %v486
      %v5430 = vpop.f32.mrf.mxu0
      %v5431 = vadd.f32 0.0, %v5430
      %v5432 = vpop.f32.mrf.mxu0
      %5433 = vmatprep.mubr.f32.mxu0 0.0
      %5434 = vmatmul.mubr.f32.gmra.mxu0 %v489
      %v5435 = vpop.f32.mrf.mxu0
      %v5436 = vadd.f32 0.0, %v5435
      %v5437 = vpop.f32.mrf.mxu0
      %5438 = vmatprep.mubr.f32.mxu0 0.0
      %5439 = vmatmul.mubr.f32.gmra.mxu0 %v492
      %v5440 = vpop.f32.mrf.mxu0
      %v5441 = vadd.f32 0.0, %v5440
      %v5442 = vpop.f32.mrf.mxu0
      %5443 = vmatprep.mubr.f32.mxu0 0.0
      %5444 = vmatmul.mubr.f32.gmra.mxu0 %v495
      %v5445 = vpop.f32.mrf.mxu0
      %v5446 = vadd.f32 0.0, %v5445
      %v5447 = vpop.f32.mrf.mxu0
      %5448 = vdwg.mxu0
      %v5449 = vadd.f32 %v5062, %v5291
      %v5450 = vadd.f32 %v5067, %v5296
      %v5451 = vadd.f32 %v5072, %v5301
      %v5452 = vadd.f32 %v5077, %v5306
      %v5453 = vadd.f32 %v5082, %v5311
      %v5454 = vadd.f32 %v5087, %v5316
      %v5455 = vadd.f32 %v5092, %v5321
      %v5456 = vadd.f32 %v5097, %v5326
      %v5457 = vadd.f32 %v5102, %v5331
      %v5458 = vadd.f32 %v5107, %v5336
      %v5459 = vadd.f32 %v5112, %v5341
      %v5460 = vadd.f32 %v5117, %v5346
      %v5461 = vadd.f32 %v5122, %v5351
      %v5462 = vadd.f32 %v5127, %v5356
      %v5463 = vadd.f32 %v5132, %v5361
      %v5464 = vadd.f32 %v5137, %v5366
      %v5465 = vadd.f32 %v5142, %v5371
      %v5466 = vadd.f32 %v5147, %v5376
      %v5467 = vadd.f32 %v5152, %v5381
      %v5468 = vadd.f32 %v5157, %v5386
      %v5469 = vadd.f32 %v5162, %v5391
      %v5470 = vadd.f32 %v5167, %v5396
      %v5471 = vadd.f32 %v5172, %v5401
      %v5472 = vadd.f32 %v5177, %v5406
      %v5473 = vadd.f32 %v5182, %v5411
      %v5474 = vadd.f32 %v5187, %v5416
      %v5475 = vadd.f32 %v5192, %v5421
      %v5476 = vadd.f32 %v5197, %v5426
      %v5477 = vadd.f32 %v5202, %v5431
      %v5478 = vadd.f32 %v5207, %v5436
      %v5479 = vadd.f32 %v5212, %v5441
      %v5480 = vadd.f32 %v5217, %v5446
      %vm5481 = vcmask 64512
      %5482 = vst.msk [vmem:[%s359] sm:$0xff] %vm5481, %v5449
      %5483 = vst.msk [vmem:[%s359 + $0x8] sm:$0xff] %vm5481, %v5450
      %5484 = vst.msk [vmem:[%s359 + $0x10] sm:$0xff] %vm5481, %v5451
      %5485 = vst.msk [vmem:[%s359 + $0x18] sm:$0xff] %vm5481, %v5452
      %5486 = vst.msk [vmem:[%s359 + $0x20] sm:$0xff] %vm5481, %v5453
      %5487 = vst.msk [vmem:[%s359 + $0x28] sm:$0xff] %vm5481, %v5454
      %5488 = vst.msk [vmem:[%s359 + $0x30] sm:$0xff] %vm5481, %v5455
      %5489 = vst.msk [vmem:[%s359 + $0x38] sm:$0xff] %vm5481, %v5456
      %5490 = vst.msk [vmem:[%s359 + $0x40] sm:$0xff] %vm5481, %v5457
      %5491 = vst.msk [vmem:[%s359 + $0x48] sm:$0xff] %vm5481, %v5458
      %5492 = vst.msk [vmem:[%s359 + $0x50] sm:$0xff] %vm5481, %v5459
      %5493 = vst.msk [vmem:[%s359 + $0x58] sm:$0xff] %vm5481, %v5460
      %5494 = vst.msk [vmem:[%s359 + $0x60] sm:$0xff] %vm5481, %v5461
      %5495 = vst.msk [vmem:[%s359 + $0x68] sm:$0xff] %vm5481, %v5462
      %5496 = vst.msk [vmem:[%s359 + $0x70] sm:$0xff] %vm5481, %v5463
      %5497 = vst.msk [vmem:[%s359 + $0x78] sm:$0xff] %vm5481, %v5464
      %5498 = vst.msk [vmem:[%s359 + $0x80] sm:$0xff] %vm5481, %v5465
      %5499 = vst.msk [vmem:[%s359 + $0x88] sm:$0xff] %vm5481, %v5466
      %5500 = vst.msk [vmem:[%s359 + $0x90] sm:$0xff] %vm5481, %v5467
      %5501 = vst.msk [vmem:[%s359 + $0x98] sm:$0xff] %vm5481, %v5468
      %5502 = vst.msk [vmem:[%s359 + $0xa0] sm:$0xff] %vm5481, %v5469
      %5503 = vst.msk [vmem:[%s359 + $0xa8] sm:$0xff] %vm5481, %v5470
      %5504 = vst.msk [vmem:[%s359 + $0xb0] sm:$0xff] %vm5481, %v5471
      %5505 = vst.msk [vmem:[%s359 + $0xb8] sm:$0xff] %vm5481, %v5472
      %5506 = vst.msk [vmem:[%s359 + $0xc0] sm:$0xff] %vm5481, %v5473
      %5507 = vst.msk [vmem:[%s359 + $0xc8] sm:$0xff] %vm5481, %v5474
      %5508 = vst.msk [vmem:[%s359 + $0xd0] sm:$0xff] %vm5481, %v5475
      %5509 = vst.msk [vmem:[%s359 + $0xd8] sm:$0xff] %vm5481, %v5476
      %5510 = vst.msk [vmem:[%s359 + $0xe0] sm:$0xff] %vm5481, %v5477
      %5511 = vst.msk [vmem:[%s359 + $0xe8] sm:$0xff] %vm5481, %v5478
      %5512 = vst.msk [vmem:[%s359 + $0xf0] sm:$0xff] %vm5481, %v5479
      %5513 = vst.msk [vmem:[%s359 + $0xf8] sm:$0xff] %vm5481, %v5480
      %p5514 = scmp.lt.s32.totalorder %s21, 1
      %s5515 = scalar_select %p5514, %s21, 1
      %s5516 = smul.addr %s5515, 32
      %s5517 = smul.addr %s5516, 8
      %s5518 = scalar_lea.vmem %s10, %s5517
      // Predicated region
      $region61: #{tpu_custom_call.1} parent=59 // pred_check
        %p5519 = pneg %p254
      $region62: #{tpu_custom_call.1} parent=59 // pred_check_branch
        %5521 = sbr.rel (%p5519) target = $region64
      $region63: #{tpu_custom_call.1} parent=59 // pred_region
        _
      $region64: #{tpu_custom_call.1} parent=59 // pred_fallthru
        _
    $region60: #{tpu_custom_call.1} parent=5 // pred_fallthru
      _
    %p5522 = scmp.le.s32.totalorder 2, %s16
    // Predicated region
    $region65: #{tpu_custom_call.1} parent=5 // pred_check
      %p5523 = pneg %p5522
    $region66: #{tpu_custom_call.1} parent=5 // pred_check_branch
      %5525 = sbr.rel (%p5523) target = $region68
    $region67: #{tpu_custom_call.1} parent=5 // pred_region
      %s5526 = ssub.s32 %s16, 2
      // Predicated region
      $region69: #{tpu_custom_call.1} parent=67 // pred_check
        %p5527 = pneg %p260
      $region70: #{tpu_custom_call.1} parent=67 // pred_check_branch
        %5529 = sbr.rel (%p5527) target = $region72
      $region71: #{tpu_custom_call.1} parent=67 // pred_region
        %p5530 = scmp.lt.s32.totalorder %s22, 1
        %s5531 = scalar_select %p5530, %s22, 1
        %s5532 = smul.addr %s5531, 32
        %s5533 = smul.addr %s5532, 8
        %s5534 = scalar_lea.vmem %s10, %s5533
      $region72: #{tpu_custom_call.1} parent=67 // pred_fallthru
        _
    $region68: #{tpu_custom_call.1} parent=5 // pred_fallthru
      _
  $region6: #{tpu_custom_call.1} parent=0 // loop_footer
    %s20 = sadd.s32 1, %s16
  $region7: #{tpu_custom_call.1} parent=0 // loop_footer_branch
    %15 = sbr.rel target = $region3
  $region8: #{tpu_custom_call.1} parent=0 // loop_exit
    _

</llo_original>
